<compile_context>
chip_gen: v7x
topology: tpu7x:2x2x1
jax: 0.10.0
libtpu: 0.0.40
codegen_flags: <defaults>
</compile_context>

<pallas_src>
import functools
import math

import jax
import jax.numpy as jnp
import numpy as np
from jax.experimental import pallas as pl
from jax.experimental.pallas import tpu as pltpu


# ----------------------------------------------------------------------------
# Helpers
# ----------------------------------------------------------------------------
def _build_perm_mats(w, fs):
    """One-hot lane-permutation matrices, one per (ih, iw) sub-pixel tap.

    m[ih*fs+iw, w_in, ih*(w*fs) + w_in*fs + iw] = 1, so that
    (plane @ m[tap])[h, ih*(w*fs) + w_in*fs + iw] == plane[h, w_in].
    """
    k = fs * fs
    m = np.zeros((k, w, k * w), np.float32)
    rows = np.arange(w)
    for ih in range(fs):
        for iw in range(fs):
            tap = ih * fs + iw
            cols = ih * (w * fs) + rows * fs + iw
            m[tap, rows, cols] = 1.0
    return jnp.asarray(m, dtype=jnp.bfloat16)


def _exact_bf16_parts(plane, n_parts):
    """Split a plane into n_parts bf16 terms whose f32 sum equals the plane exactly."""
    parts = []
    r = plane.astype(jnp.float32)
    for _ in range(n_parts):
        h = r.astype(jnp.bfloat16)
        parts.append(h)
        r = r - h.astype(jnp.float32)
    return parts


def _pick_groups_per_step(num_groups, g, ft, cg, h, w, itemsize):
    """Largest divisor of num_groups keeping the in-kernel unroll / block bytes modest."""
    best = 1
    for cand in range(2, num_groups + 1):
        if num_groups % cand:
            continue
        if cand * g * ft > 8:                    # unrolled (out-channel, it) iterations
            continue
        if cand * cg * h * w * itemsize > (2 << 20):
            continue
        best = cand
    return best


# ----------------------------------------------------------------------------
# Kernel bodies (closure factories: all loop bounds / indices are static)
# ----------------------------------------------------------------------------
def _make_shuffle_kernel(n_co, ft, fs, factor, repeats, n_parts):
    """factor_s > 1: channel duplication + sub-pixel interleave via permutation matmuls."""

    def kernel(x_ref, m_ref, o_ref):
        # x_ref: (n_ci, H, W)            input channels of this group block
        # m_ref: (fs*fs, W, fs*fs*W)     bf16 one-hot permutation matrices (constant)
        # o_ref: (n_co, ft, H, fs*fs*W)  output rows already in final contiguous order
        split_cache = {}
        for j in range(n_co):
            for it in range(ft):
                acc = None
                for tap_hw in range(fs * fs):
                    cidx = j * factor + it * fs * fs + tap_hw
                    cin = cidx // repeats                      # static python int
                    if cin not in split_cache:
                        split_cache[cin] = _exact_bf16_parts(x_ref[cin], n_parts)
                    m = m_ref[tap_hw]                          # (W, fs*fs*W)
                    for part in split_cache[cin]:
                        d = jnp.dot(part, m, preferred_element_type=jnp.float32)
                        acc = d if acc is None else acc + d
                o_ref[j, it] = acc.astype(o_ref.dtype)

    return kernel


def _make_copy_kernel(n_co, ft, factor, repeats):
    """factor_s == 1: pure temporal duplication (lane-dense copies, no matmul)."""

    def kernel(x_ref, o_ref):
        for j in range(n_co):
            for it in range(ft):
                cin = (j * factor + it) // repeats             # static python int
                o_ref[j, it] = x_ref[cin]

    return kernel


# ----------------------------------------------------------------------------
# Public wrapper (matches DupUp3D.forward, NCTHW in / NCTHW out)
# ----------------------------------------------------------------------------
def dup_up_3d(x, *, in_channels, out_channels, factor_t, factor_s=1, first_chunk=False):
    b, c_in, t, h, w = x.shape
    assert c_in == in_channels
    ft, fs = int(factor_t), int(factor_s)
    factor = ft * fs * fs
    assert (out_channels * factor) % in_channels == 0
    repeats = out_channels * factor // in_channels

    # Group output channels so each group's repeat_interleave sources form a
    # contiguous, block-aligned window of input channels.
    d = math.gcd(factor, repeats)
    g = repeats // d                         # output channels per minimal group
    cg = factor // d                         # input channels per minimal group
    num_groups = out_channels // g           # == in_channels // cg
    gps = _pick_groups_per_step(num_groups, g, ft, cg, h, w, x.dtype.itemsize)
    n_co = gps * g                           # output channels per grid step
    n_ci = gps * cg                          # input channels per grid step
    grid = (b, t, num_groups // gps)

    out_last = fs * fs * w                   # fs * (w*fs): one (h, ih)-row group, contiguous
    out_shape = jax.ShapeDtypeStruct((b, out_channels, t, ft, h, out_last), x.dtype)

    x_spec = pl.BlockSpec((None, n_ci, None, h, w),
                          lambda bi, ti, gi: (bi, gi, ti, 0, 0))
    o_spec = pl.BlockSpec((None, n_co, None, ft, h, out_last),
                          lambda bi, ti, gi: (bi, gi, ti, 0, 0, 0))
    params = pltpu.CompilerParams(
        dimension_semantics=("parallel", "parallel", "parallel"))

    if fs == 1:
        kernel = _make_copy_kernel(n_co, ft, factor, repeats)
        out6 = pl.pallas_call(
            kernel, out_shape=out_shape, grid=grid,
            in_specs=[x_spec], out_specs=o_spec, compiler_params=params,
        )(x)
    else:
        n_parts = 1 if x.dtype == jnp.bfloat16 else 3   # exact bf16 decomposition of f32
        perm = _build_perm_mats(w, fs)
        m_spec = pl.BlockSpec((fs * fs, w, out_last), lambda bi, ti, gi: (0, 0, 0))
        kernel = _make_shuffle_kernel(n_co, ft, fs, factor, repeats, n_parts)
        out6 = pl.pallas_call(
            kernel, out_shape=out_shape, grid=grid,
            in_specs=[x_spec, m_spec], out_specs=o_spec, compiler_params=params,
        )(x, perm)

    # Metadata-only reshape: (T, ft) and (H, fs*W*fs) merges are contiguous.
    out = out6.reshape(b, out_channels, t * ft, h * fs, w * fs)
    if first_chunk:
        out = out[:, :, ft - 1:, :, :]
    return out


# ----------------------------------------------------------------------------
# Pure-JAX reference (mirrors the PyTorch module) for self-checking
# ----------------------------------------------------------------------------
def dup_up_3d_reference(x, *, out_channels, factor_t, factor_s=1, first_chunk=False):
    b, c_in, t, h, w = x.shape
    ft, fs = factor_t, factor_s
    factor = ft * fs * fs
    repeats = out_channels * factor // c_in
    y = jnp.repeat(x, repeats, axis=1)
    y = y.reshape(b, out_channels, ft, fs, fs, t, h, w)
    y = jnp.transpose(y, (0, 1, 5, 2, 6, 3, 7, 4))
    y = y.reshape(b, out_channels, t * ft, h * fs, w * fs)
    if first_chunk:
        y = y[:, :, ft - 1:, :, :]
    return y


if __name__ == "__main__":
    key = jax.random.PRNGKey(0)
    k1, k2 = jax.random.split(key)

    # Config 1: spatial + temporal pixel-shuffle (factor_t=2, factor_s=2).
    B, Cin, Cout, T, H, W = 2, 8, 4, 4, 16, 16
    x1 = jax.random.normal(k1, (B, Cin, T, H, W), dtype=jnp.float32)
    fwd1 = jax.jit(functools.partial(dup_up_3d, in_channels=Cin, out_channels=Cout,
                                     factor_t=2, factor_s=2, first_chunk=False))
    y1 = jax.block_until_ready(fwd1(x1))
    r1 = dup_up_3d_reference(x1, out_channels=Cout, factor_t=2, factor_s=2)
    assert y1.shape == (B, Cout, T * 2, H * 2, W * 2)
    assert y1.dtype == x1.dtype
    assert bool(jnp.all(jnp.isfinite(y1)))
    assert bool(jnp.allclose(y1, r1, atol=1e-6, rtol=1e-6))

    # Config 2: temporal-only duplication with first_chunk trimming (factor_s=1).
    Cin2, Cout2 = 4, 8
    x2 = jax.random.normal(k2, (B, Cin2, T, H, W), dtype=jnp.float32)
    fwd2 = jax.jit(functools.partial(dup_up_3d, in_channels=Cin2, out_channels=Cout2,
                                     factor_t=2, factor_s=1, first_chunk=True))
    y2 = jax.block_until_ready(fwd2(x2))
    r2 = dup_up_3d_reference(x2, out_channels=Cout2, factor_t=2, factor_s=1,
                             first_chunk=True)
    assert y2.shape == (B, Cout2, T * 2 - 1, H, W)
    assert bool(jnp.allclose(y2, r2, atol=0.0, rtol=0.0))

    print("KERNEL_OK")
</pallas_src>

<mosaic_0001>
module attributes {stable_mosaic.version = 11 : i64} {
  func.func @kernel(%arg0: i32, %arg1: i32, %arg2: i32, %arg3: memref<1x8x1x16x16xf32, #tpu.memory_space<vmem>>, %arg4: memref<4x16x64xbf16, #tpu.memory_space<vmem>>, %arg5: memref<1x4x1x2x16x64xf32, #tpu.memory_space<vmem>>) attributes {dimension_semantics = [#tpu.dimension_semantics<parallel>, #tpu.dimension_semantics<parallel>, #tpu.dimension_semantics<parallel>], iteration_bounds = array<i64: 2, 4, 1>, scalar_prefetch = 0 : i64, scratch_operands = 0 : i64, tpu.core_type = #tpu.core_type<tc>, window_params = [{transform_indices = @transform_0, window_bounds = array<i64: 1, 8, 1, 16, 16>}, {pipeline_mode = #tpu.pipeline_mode<synchronous>, transform_indices = @transform_1, window_bounds = array<i64: 4, 16, 64>}, {transform_indices = @transform_2, window_bounds = array<i64: 1, 4, 1, 2, 16, 64>}]} {
    %c0 = arith.constant 0 : index
    %c0_0 = arith.constant 0 : index
    %c0_1 = arith.constant 0 : index
    %c0_2 = arith.constant 0 : index
    %c0_3 = arith.constant 0 : index
    %0 = vector.load %arg3[%c0, %c0_0, %c0_1, %c0_2, %c0_3] : memref<1x8x1x16x16xf32, #tpu.memory_space<vmem>>, vector<1x1x1x16x16xf32>
    %1 = vector.shape_cast %0 : vector<1x1x1x16x16xf32> to vector<16x16xf32>
    %2 = arith.truncf %1 : vector<16x16xf32> to vector<16x16xbf16>
    %3 = arith.extf %2 : vector<16x16xbf16> to vector<16x16xf32>
    %4 = arith.subf %1, %3 : vector<16x16xf32>
    %5 = arith.truncf %4 : vector<16x16xf32> to vector<16x16xbf16>
    %6 = arith.extf %5 : vector<16x16xbf16> to vector<16x16xf32>
    %7 = arith.subf %4, %6 : vector<16x16xf32>
    %8 = arith.truncf %7 : vector<16x16xf32> to vector<16x16xbf16>
    %c0_4 = arith.constant 0 : index
    %c0_5 = arith.constant 0 : index
    %c0_6 = arith.constant 0 : index
    %9 = vector.load %arg4[%c0_4, %c0_5, %c0_6] : memref<4x16x64xbf16, #tpu.memory_space<vmem>>, vector<1x16x64xbf16>
    %10 = vector.shape_cast %9 : vector<1x16x64xbf16> to vector<16x64xbf16>
    %cst = arith.constant dense<0.000000e+00> : vector<16x64xf32>
    %11 = tpu.matmul %2, %10, %cst {dimension_numbers = #tpu.dot_dimension_numbers<[1], [0], [0], [1], [0, 0, 1, 1], [], []>} : vector<16x16xbf16>, vector<16x64xbf16>, vector<16x64xf32> -> vector<16x64xf32>
    %cst_7 = arith.constant dense<0.000000e+00> : vector<16x64xf32>
    %12 = tpu.matmul %5, %10, %cst_7 {dimension_numbers = #tpu.dot_dimension_numbers<[1], [0], [0], [1], [0, 0, 1, 1], [], []>} : vector<16x16xbf16>, vector<16x64xbf16>, vector<16x64xf32> -> vector<16x64xf32>
    %13 = arith.addf %11, %12 : vector<16x64xf32>
    %cst_8 = arith.constant dense<0.000000e+00> : vector<16x64xf32>
    %14 = tpu.matmul %8, %10, %cst_8 {dimension_numbers = #tpu.dot_dimension_numbers<[1], [0], [0], [1], [0, 0, 1, 1], [], []>} : vector<16x16xbf16>, vector<16x64xbf16>, vector<16x64xf32> -> vector<16x64xf32>
    %15 = arith.addf %13, %14 : vector<16x64xf32>
    %c1 = arith.constant 1 : index
    %c0_9 = arith.constant 0 : index
    %c0_10 = arith.constant 0 : index
    %16 = vector.load %arg4[%c1, %c0_9, %c0_10] : memref<4x16x64xbf16, #tpu.memory_space<vmem>>, vector<1x16x64xbf16>
    %17 = vector.shape_cast %16 : vector<1x16x64xbf16> to vector<16x64xbf16>
    %cst_11 = arith.constant dense<0.000000e+00> : vector<16x64xf32>
    %18 = tpu.matmul %2, %17, %cst_11 {dimension_numbers = #tpu.dot_dimension_numbers<[1], [0], [0], [1], [0, 0, 1, 1], [], []>} : vector<16x16xbf16>, vector<16x64xbf16>, vector<16x64xf32> -> vector<16x64xf32>
    %19 = arith.addf %15, %18 : vector<16x64xf32>
    %cst_12 = arith.constant dense<0.000000e+00> : vector<16x64xf32>
    %20 = tpu.matmul %5, %17, %cst_12 {dimension_numbers = #tpu.dot_dimension_numbers<[1], [0], [0], [1], [0, 0, 1, 1], [], []>} : vector<16x16xbf16>, vector<16x64xbf16>, vector<16x64xf32> -> vector<16x64xf32>
    %21 = arith.addf %19, %20 : vector<16x64xf32>
    %cst_13 = arith.constant dense<0.000000e+00> : vector<16x64xf32>
    %22 = tpu.matmul %8, %17, %cst_13 {dimension_numbers = #tpu.dot_dimension_numbers<[1], [0], [0], [1], [0, 0, 1, 1], [], []>} : vector<16x16xbf16>, vector<16x64xbf16>, vector<16x64xf32> -> vector<16x64xf32>
    %23 = arith.addf %21, %22 : vector<16x64xf32>
    %c2 = arith.constant 2 : index
    %c0_14 = arith.constant 0 : index
    %c0_15 = arith.constant 0 : index
    %24 = vector.load %arg4[%c2, %c0_14, %c0_15] : memref<4x16x64xbf16, #tpu.memory_space<vmem>>, vector<1x16x64xbf16>
    %25 = vector.shape_cast %24 : vector<1x16x64xbf16> to vector<16x64xbf16>
    %cst_16 = arith.constant dense<0.000000e+00> : vector<16x64xf32>
    %26 = tpu.matmul %2, %25, %cst_16 {dimension_numbers = #tpu.dot_dimension_numbers<[1], [0], [0], [1], [0, 0, 1, 1], [], []>} : vector<16x16xbf16>, vector<16x64xbf16>, vector<16x64xf32> -> vector<16x64xf32>
    %27 = arith.addf %23, %26 : vector<16x64xf32>
    %cst_17 = arith.constant dense<0.000000e+00> : vector<16x64xf32>
    %28 = tpu.matmul %5, %25, %cst_17 {dimension_numbers = #tpu.dot_dimension_numbers<[1], [0], [0], [1], [0, 0, 1, 1], [], []>} : vector<16x16xbf16>, vector<16x64xbf16>, vector<16x64xf32> -> vector<16x64xf32>
    %29 = arith.addf %27, %28 : vector<16x64xf32>
    %cst_18 = arith.constant dense<0.000000e+00> : vector<16x64xf32>
    %30 = tpu.matmul %8, %25, %cst_18 {dimension_numbers = #tpu.dot_dimension_numbers<[1], [0], [0], [1], [0, 0, 1, 1], [], []>} : vector<16x16xbf16>, vector<16x64xbf16>, vector<16x64xf32> -> vector<16x64xf32>
    %31 = arith.addf %29, %30 : vector<16x64xf32>
    %c3 = arith.constant 3 : index
    %c0_19 = arith.constant 0 : index
    %c0_20 = arith.constant 0 : index
    %32 = vector.load %arg4[%c3, %c0_19, %c0_20] : memref<4x16x64xbf16, #tpu.memory_space<vmem>>, vector<1x16x64xbf16>
    %33 = vector.shape_cast %32 : vector<1x16x64xbf16> to vector<16x64xbf16>
    %cst_21 = arith.constant dense<0.000000e+00> : vector<16x64xf32>
    %34 = tpu.matmul %2, %33, %cst_21 {dimension_numbers = #tpu.dot_dimension_numbers<[1], [0], [0], [1], [0, 0, 1, 1], [], []>} : vector<16x16xbf16>, vector<16x64xbf16>, vector<16x64xf32> -> vector<16x64xf32>
    %35 = arith.addf %31, %34 : vector<16x64xf32>
    %cst_22 = arith.constant dense<0.000000e+00> : vector<16x64xf32>
    %36 = tpu.matmul %5, %33, %cst_22 {dimension_numbers = #tpu.dot_dimension_numbers<[1], [0], [0], [1], [0, 0, 1, 1], [], []>} : vector<16x16xbf16>, vector<16x64xbf16>, vector<16x64xf32> -> vector<16x64xf32>
    %37 = arith.addf %35, %36 : vector<16x64xf32>
    %cst_23 = arith.constant dense<0.000000e+00> : vector<16x64xf32>
    %38 = tpu.matmul %8, %33, %cst_23 {dimension_numbers = #tpu.dot_dimension_numbers<[1], [0], [0], [1], [0, 0, 1, 1], [], []>} : vector<16x16xbf16>, vector<16x64xbf16>, vector<16x64xf32> -> vector<16x64xf32>
    %39 = arith.addf %37, %38 : vector<16x64xf32>
    %c0_24 = arith.constant 0 : index
    %c0_25 = arith.constant 0 : index
    %c0_26 = arith.constant 0 : index
    %c0_27 = arith.constant 0 : index
    %c0_28 = arith.constant 0 : index
    %c0_29 = arith.constant 0 : index
    %40 = vector.load %arg5[%c0_24, %c0_25, %c0_26, %c0_27, %c0_28, %c0_29] : memref<1x4x1x2x16x64xf32, #tpu.memory_space<vmem>>, vector<1x1x1x1x16x64xf32>
    %41 = vector.shape_cast %40 : vector<1x1x1x1x16x64xf32> to vector<16x64xf32>
    %42 = vector.shape_cast %39 : vector<16x64xf32> to vector<1x1x1x1x16x64xf32>
    tpu.vector_store %arg5[%c0_24, %c0_25, %c0_26, %c0_27, %c0_28, %c0_29], %42 {strides = array<i32>} : memref<1x4x1x2x16x64xf32, #tpu.memory_space<vmem>>, vector<1x1x1x1x16x64xf32>,
    %c0_30 = arith.constant 0 : index
    %c1_31 = arith.constant 1 : index
    %c0_32 = arith.constant 0 : index
    %c0_33 = arith.constant 0 : index
    %c0_34 = arith.constant 0 : index
    %43 = vector.load %arg3[%c0_30, %c1_31, %c0_32, %c0_33, %c0_34] : memref<1x8x1x16x16xf32, #tpu.memory_space<vmem>>, vector<1x1x1x16x16xf32>
    %44 = vector.shape_cast %43 : vector<1x1x1x16x16xf32> to vector<16x16xf32>
    %45 = arith.truncf %44 : vector<16x16xf32> to vector<16x16xbf16>
    %46 = arith.extf %45 : vector<16x16xbf16> to vector<16x16xf32>
    %47 = arith.subf %44, %46 : vector<16x16xf32>
    %48 = arith.truncf %47 : vector<16x16xf32> to vector<16x16xbf16>
    %49 = arith.extf %48 : vector<16x16xbf16> to vector<16x16xf32>
    %50 = arith.subf %47, %49 : vector<16x16xf32>
    %51 = arith.truncf %50 : vector<16x16xf32> to vector<16x16xbf16>
    %c0_35 = arith.constant 0 : index
    %c0_36 = arith.constant 0 : index
    %c0_37 = arith.constant 0 : index
    %52 = vector.load %arg4[%c0_35, %c0_36, %c0_37] : memref<4x16x64xbf16, #tpu.memory_space<vmem>>, vector<1x16x64xbf16>
    %53 = vector.shape_cast %52 : vector<1x16x64xbf16> to vector<16x64xbf16>
    %cst_38 = arith.constant dense<0.000000e+00> : vector<16x64xf32>
    %54 = tpu.matmul %45, %53, %cst_38 {dimension_numbers = #tpu.dot_dimension_numbers<[1], [0], [0], [1], [0, 0, 1, 1], [], []>} : vector<16x16xbf16>, vector<16x64xbf16>, vector<16x64xf32> -> vector<16x64xf32>
    %cst_39 = arith.constant dense<0.000000e+00> : vector<16x64xf32>
    %55 = tpu.matmul %48, %53, %cst_39 {dimension_numbers = #tpu.dot_dimension_numbers<[1], [0], [0], [1], [0, 0, 1, 1], [], []>} : vector<16x16xbf16>, vector<16x64xbf16>, vector<16x64xf32> -> vector<16x64xf32>
    %56 = arith.addf %54, %55 : vector<16x64xf32>
    %cst_40 = arith.constant dense<0.000000e+00> : vector<16x64xf32>
    %57 = tpu.matmul %51, %53, %cst_40 {dimension_numbers = #tpu.dot_dimension_numbers<[1], [0], [0], [1], [0, 0, 1, 1], [], []>} : vector<16x16xbf16>, vector<16x64xbf16>, vector<16x64xf32> -> vector<16x64xf32>
    %58 = arith.addf %56, %57 : vector<16x64xf32>
    %c1_41 = arith.constant 1 : index
    %c0_42 = arith.constant 0 : index
    %c0_43 = arith.constant 0 : index
    %59 = vector.load %arg4[%c1_41, %c0_42, %c0_43] : memref<4x16x64xbf16, #tpu.memory_space<vmem>>, vector<1x16x64xbf16>
    %60 = vector.shape_cast %59 : vector<1x16x64xbf16> to vector<16x64xbf16>
    %cst_44 = arith.constant dense<0.000000e+00> : vector<16x64xf32>
    %61 = tpu.matmul %45, %60, %cst_44 {dimension_numbers = #tpu.dot_dimension_numbers<[1], [0], [0], [1], [0, 0, 1, 1], [], []>} : vector<16x16xbf16>, vector<16x64xbf16>, vector<16x64xf32> -> vector<16x64xf32>
    %62 = arith.addf %58, %61 : vector<16x64xf32>
    %cst_45 = arith.constant dense<0.000000e+00> : vector<16x64xf32>
    %63 = tpu.matmul %48, %60, %cst_45 {dimension_numbers = #tpu.dot_dimension_numbers<[1], [0], [0], [1], [0, 0, 1, 1], [], []>} : vector<16x16xbf16>, vector<16x64xbf16>, vector<16x64xf32> -> vector<16x64xf32>
    %64 = arith.addf %62, %63 : vector<16x64xf32>
    %cst_46 = arith.constant dense<0.000000e+00> : vector<16x64xf32>
    %65 = tpu.matmul %51, %60, %cst_46 {dimension_numbers = #tpu.dot_dimension_numbers<[1], [0], [0], [1], [0, 0, 1, 1], [], []>} : vector<16x16xbf16>, vector<16x64xbf16>, vector<16x64xf32> -> vector<16x64xf32>
    %66 = arith.addf %64, %65 : vector<16x64xf32>
    %c2_47 = arith.constant 2 : index
    %c0_48 = arith.constant 0 : index
    %c0_49 = arith.constant 0 : index
    %67 = vector.load %arg4[%c2_47, %c0_48, %c0_49] : memref<4x16x64xbf16, #tpu.memory_space<vmem>>, vector<1x16x64xbf16>
    %68 = vector.shape_cast %67 : vector<1x16x64xbf16> to vector<16x64xbf16>
    %cst_50 = arith.constant dense<0.000000e+00> : vector<16x64xf32>
    %69 = tpu.matmul %45, %68, %cst_50 {dimension_numbers = #tpu.dot_dimension_numbers<[1], [0], [0], [1], [0, 0, 1, 1], [], []>} : vector<16x16xbf16>, vector<16x64xbf16>, vector<16x64xf32> -> vector<16x64xf32>
    %70 = arith.addf %66, %69 : vector<16x64xf32>
    %cst_51 = arith.constant dense<0.000000e+00> : vector<16x64xf32>
    %71 = tpu.matmul %48, %68, %cst_51 {dimension_numbers = #tpu.dot_dimension_numbers<[1], [0], [0], [1], [0, 0, 1, 1], [], []>} : vector<16x16xbf16>, vector<16x64xbf16>, vector<16x64xf32> -> vector<16x64xf32>
    %72 = arith.addf %70, %71 : vector<16x64xf32>
    %cst_52 = arith.constant dense<0.000000e+00> : vector<16x64xf32>
    %73 = tpu.matmul %51, %68, %cst_52 {dimension_numbers = #tpu.dot_dimension_numbers<[1], [0], [0], [1], [0, 0, 1, 1], [], []>} : vector<16x16xbf16>, vector<16x64xbf16>, vector<16x64xf32> -> vector<16x64xf32>
    %74 = arith.addf %72, %73 : vector<16x64xf32>
    %c3_53 = arith.constant 3 : index
    %c0_54 = arith.constant 0 : index
    %c0_55 = arith.constant 0 : index
    %75 = vector.load %arg4[%c3_53, %c0_54, %c0_55] : memref<4x16x64xbf16, #tpu.memory_space<vmem>>, vector<1x16x64xbf16>
    %76 = vector.shape_cast %75 : vector<1x16x64xbf16> to vector<16x64xbf16>
    %cst_56 = arith.constant dense<0.000000e+00> : vector<16x64xf32>
    %77 = tpu.matmul %45, %76, %cst_56 {dimension_numbers = #tpu.dot_dimension_numbers<[1], [0], [0], [1], [0, 0, 1, 1], [], []>} : vector<16x16xbf16>, vector<16x64xbf16>, vector<16x64xf32> -> vector<16x64xf32>
    %78 = arith.addf %74, %77 : vector<16x64xf32>
    %cst_57 = arith.constant dense<0.000000e+00> : vector<16x64xf32>
    %79 = tpu.matmul %48, %76, %cst_57 {dimension_numbers = #tpu.dot_dimension_numbers<[1], [0], [0], [1], [0, 0, 1, 1], [], []>} : vector<16x16xbf16>, vector<16x64xbf16>, vector<16x64xf32> -> vector<16x64xf32>
    %80 = arith.addf %78, %79 : vector<16x64xf32>
    %cst_58 = arith.constant dense<0.000000e+00> : vector<16x64xf32>
    %81 = tpu.matmul %51, %76, %cst_58 {dimension_numbers = #tpu.dot_dimension_numbers<[1], [0], [0], [1], [0, 0, 1, 1], [], []>} : vector<16x16xbf16>, vector<16x64xbf16>, vector<16x64xf32> -> vector<16x64xf32>
    %82 = arith.addf %80, %81 : vector<16x64xf32>
    %c0_59 = arith.constant 0 : index
    %c0_60 = arith.constant 0 : index
    %c0_61 = arith.constant 0 : index
    %c1_62 = arith.constant 1 : index
    %c0_63 = arith.constant 0 : index
    %c0_64 = arith.constant 0 : index
    %83 = vector.load %arg5[%c0_59, %c0_60, %c0_61, %c1_62, %c0_63, %c0_64] : memref<1x4x1x2x16x64xf32, #tpu.memory_space<vmem>>, vector<1x1x1x1x16x64xf32>
    %84 = vector.shape_cast %83 : vector<1x1x1x1x16x64xf32> to vector<16x64xf32>
    %85 = vector.shape_cast %82 : vector<16x64xf32> to vector<1x1x1x1x16x64xf32>
    tpu.vector_store %arg5[%c0_59, %c0_60, %c0_61, %c1_62, %c0_63, %c0_64], %85 {strides = array<i32>} : memref<1x4x1x2x16x64xf32, #tpu.memory_space<vmem>>, vector<1x1x1x1x16x64xf32>,
    %c0_65 = arith.constant 0 : index
    %c2_66 = arith.constant 2 : index
    %c0_67 = arith.constant 0 : index
    %c0_68 = arith.constant 0 : index
    %c0_69 = arith.constant 0 : index
    %86 = vector.load %arg3[%c0_65, %c2_66, %c0_67, %c0_68, %c0_69] : memref<1x8x1x16x16xf32, #tpu.memory_space<vmem>>, vector<1x1x1x16x16xf32>
    %87 = vector.shape_cast %86 : vector<1x1x1x16x16xf32> to vector<16x16xf32>
    %88 = arith.truncf %87 : vector<16x16xf32> to vector<16x16xbf16>
    %89 = arith.extf %88 : vector<16x16xbf16> to vector<16x16xf32>
    %90 = arith.subf %87, %89 : vector<16x16xf32>
    %91 = arith.truncf %90 : vector<16x16xf32> to vector<16x16xbf16>
    %92 = arith.extf %91 : vector<16x16xbf16> to vector<16x16xf32>
    %93 = arith.subf %90, %92 : vector<16x16xf32>
    %94 = arith.truncf %93 : vector<16x16xf32> to vector<16x16xbf16>
    %c0_70 = arith.constant 0 : index
    %c0_71 = arith.constant 0 : index
    %c0_72 = arith.constant 0 : index
    %95 = vector.load %arg4[%c0_70, %c0_71, %c0_72] : memref<4x16x64xbf16, #tpu.memory_space<vmem>>, vector<1x16x64xbf16>
    %96 = vector.shape_cast %95 : vector<1x16x64xbf16> to vector<16x64xbf16>
    %cst_73 = arith.constant dense<0.000000e+00> : vector<16x64xf32>
    %97 = tpu.matmul %88, %96, %cst_73 {dimension_numbers = #tpu.dot_dimension_numbers<[1], [0], [0], [1], [0, 0, 1, 1], [], []>} : vector<16x16xbf16>, vector<16x64xbf16>, vector<16x64xf32> -> vector<16x64xf32>
    %cst_74 = arith.constant dense<0.000000e+00> : vector<16x64xf32>
    %98 = tpu.matmul %91, %96, %cst_74 {dimension_numbers = #tpu.dot_dimension_numbers<[1], [0], [0], [1], [0, 0, 1, 1], [], []>} : vector<16x16xbf16>, vector<16x64xbf16>, vector<16x64xf32> -> vector<16x64xf32>
    %99 = arith.addf %97, %98 : vector<16x64xf32>
    %cst_75 = arith.constant dense<0.000000e+00> : vector<16x64xf32>
    %100 = tpu.matmul %94, %96, %cst_75 {dimension_numbers = #tpu.dot_dimension_numbers<[1], [0], [0], [1], [0, 0, 1, 1], [], []>} : vector<16x16xbf16>, vector<16x64xbf16>, vector<16x64xf32> -> vector<16x64xf32>
    %101 = arith.addf %99, %100 : vector<16x64xf32>
    %c1_76 = arith.constant 1 : index
    %c0_77 = arith.constant 0 : index
    %c0_78 = arith.constant 0 : index
    %102 = vector.load %arg4[%c1_76, %c0_77, %c0_78] : memref<4x16x64xbf16, #tpu.memory_space<vmem>>, vector<1x16x64xbf16>
    %103 = vector.shape_cast %102 : vector<1x16x64xbf16> to vector<16x64xbf16>
    %cst_79 = arith.constant dense<0.000000e+00> : vector<16x64xf32>
    %104 = tpu.matmul %88, %103, %cst_79 {dimension_numbers = #tpu.dot_dimension_numbers<[1], [0], [0], [1], [0, 0, 1, 1], [], []>} : vector<16x16xbf16>, vector<16x64xbf16>, vector<16x64xf32> -> vector<16x64xf32>
    %105 = arith.addf %101, %104 : vector<16x64xf32>
    %cst_80 = arith.constant dense<0.000000e+00> : vector<16x64xf32>
    %106 = tpu.matmul %91, %103, %cst_80 {dimension_numbers = #tpu.dot_dimension_numbers<[1], [0], [0], [1], [0, 0, 1, 1], [], []>} : vector<16x16xbf16>, vector<16x64xbf16>, vector<16x64xf32> -> vector<16x64xf32>
    %107 = arith.addf %105, %106 : vector<16x64xf32>
    %cst_81 = arith.constant dense<0.000000e+00> : vector<16x64xf32>
    %108 = tpu.matmul %94, %103, %cst_81 {dimension_numbers = #tpu.dot_dimension_numbers<[1], [0], [0], [1], [0, 0, 1, 1], [], []>} : vector<16x16xbf16>, vector<16x64xbf16>, vector<16x64xf32> -> vector<16x64xf32>
    %109 = arith.addf %107, %108 : vector<16x64xf32>
    %c2_82 = arith.constant 2 : index
    %c0_83 = arith.constant 0 : index
    %c0_84 = arith.constant 0 : index
    %110 = vector.load %arg4[%c2_82, %c0_83, %c0_84] : memref<4x16x64xbf16, #tpu.memory_space<vmem>>, vector<1x16x64xbf16>
    %111 = vector.shape_cast %110 : vector<1x16x64xbf16> to vector<16x64xbf16>
    %cst_85 = arith.constant dense<0.000000e+00> : vector<16x64xf32>
    %112 = tpu.matmul %88, %111, %cst_85 {dimension_numbers = #tpu.dot_dimension_numbers<[1], [0], [0], [1], [0, 0, 1, 1], [], []>} : vector<16x16xbf16>, vector<16x64xbf16>, vector<16x64xf32> -> vector<16x64xf32>
    %113 = arith.addf %109, %112 : vector<16x64xf32>
    %cst_86 = arith.constant dense<0.000000e+00> : vector<16x64xf32>
    %114 = tpu.matmul %91, %111, %cst_86 {dimension_numbers = #tpu.dot_dimension_numbers<[1], [0], [0], [1], [0, 0, 1, 1], [], []>} : vector<16x16xbf16>, vector<16x64xbf16>, vector<16x64xf32> -> vector<16x64xf32>
    %115 = arith.addf %113, %114 : vector<16x64xf32>
    %cst_87 = arith.constant dense<0.000000e+00> : vector<16x64xf32>
    %116 = tpu.matmul %94, %111, %cst_87 {dimension_numbers = #tpu.dot_dimension_numbers<[1], [0], [0], [1], [0, 0, 1, 1], [], []>} : vector<16x16xbf16>, vector<16x64xbf16>, vector<16x64xf32> -> vector<16x64xf32>
    %117 = arith.addf %115, %116 : vector<16x64xf32>
    %c3_88 = arith.constant 3 : index
    %c0_89 = arith.constant 0 : index
    %c0_90 = arith.constant 0 : index
    %118 = vector.load %arg4[%c3_88, %c0_89, %c0_90] : memref<4x16x64xbf16, #tpu.memory_space<vmem>>, vector<1x16x64xbf16>
    %119 = vector.shape_cast %118 : vector<1x16x64xbf16> to vector<16x64xbf16>
    %cst_91 = arith.constant dense<0.000000e+00> : vector<16x64xf32>
    %120 = tpu.matmul %88, %119, %cst_91 {dimension_numbers = #tpu.dot_dimension_numbers<[1], [0], [0], [1], [0, 0, 1, 1], [], []>} : vector<16x16xbf16>, vector<16x64xbf16>, vector<16x64xf32> -> vector<16x64xf32>
    %121 = arith.addf %117, %120 : vector<16x64xf32>
    %cst_92 = arith.constant dense<0.000000e+00> : vector<16x64xf32>
    %122 = tpu.matmul %91, %119, %cst_92 {dimension_numbers = #tpu.dot_dimension_numbers<[1], [0], [0], [1], [0, 0, 1, 1], [], []>} : vector<16x16xbf16>, vector<16x64xbf16>, vector<16x64xf32> -> vector<16x64xf32>
    %123 = arith.addf %121, %122 : vector<16x64xf32>
    %cst_93 = arith.constant dense<0.000000e+00> : vector<16x64xf32>
    %124 = tpu.matmul %94, %119, %cst_93 {dimension_numbers = #tpu.dot_dimension_numbers<[1], [0], [0], [1], [0, 0, 1, 1], [], []>} : vector<16x16xbf16>, vector<16x64xbf16>, vector<16x64xf32> -> vector<16x64xf32>
    %125 = arith.addf %123, %124 : vector<16x64xf32>
    %c0_94 = arith.constant 0 : index
    %c1_95 = arith.constant 1 : index
    %c0_96 = arith.constant 0 : index
    %c0_97 = arith.constant 0 : index
    %c0_98 = arith.constant 0 : index
    %c0_99 = arith.constant 0 : index
    %126 = vector.load %arg5[%c0_94, %c1_95, %c0_96, %c0_97, %c0_98, %c0_99] : memref<1x4x1x2x16x64xf32, #tpu.memory_space<vmem>>, vector<1x1x1x1x16x64xf32>
    %127 = vector.shape_cast %126 : vector<1x1x1x1x16x64xf32> to vector<16x64xf32>
    %128 = vector.shape_cast %125 : vector<16x64xf32> to vector<1x1x1x1x16x64xf32>
    tpu.vector_store %arg5[%c0_94, %c1_95, %c0_96, %c0_97, %c0_98, %c0_99], %128 {strides = array<i32>} : memref<1x4x1x2x16x64xf32, #tpu.memory_space<vmem>>, vector<1x1x1x1x16x64xf32>,
    %c0_100 = arith.constant 0 : index
    %c3_101 = arith.constant 3 : index
    %c0_102 = arith.constant 0 : index
    %c0_103 = arith.constant 0 : index
    %c0_104 = arith.constant 0 : index
    %129 = vector.load %arg3[%c0_100, %c3_101, %c0_102, %c0_103, %c0_104] : memref<1x8x1x16x16xf32, #tpu.memory_space<vmem>>, vector<1x1x1x16x16xf32>
    %130 = vector.shape_cast %129 : vector<1x1x1x16x16xf32> to vector<16x16xf32>
    %131 = arith.truncf %130 : vector<16x16xf32> to vector<16x16xbf16>
    %132 = arith.extf %131 : vector<16x16xbf16> to vector<16x16xf32>
    %133 = arith.subf %130, %132 : vector<16x16xf32>
    %134 = arith.truncf %133 : vector<16x16xf32> to vector<16x16xbf16>
    %135 = arith.extf %134 : vector<16x16xbf16> to vector<16x16xf32>
    %136 = arith.subf %133, %135 : vector<16x16xf32>
    %137 = arith.truncf %136 : vector<16x16xf32> to vector<16x16xbf16>
    %c0_105 = arith.constant 0 : index
    %c0_106 = arith.constant 0 : index
    %c0_107 = arith.constant 0 : index
    %138 = vector.load %arg4[%c0_105, %c0_106, %c0_107] : memref<4x16x64xbf16, #tpu.memory_space<vmem>>, vector<1x16x64xbf16>
    %139 = vector.shape_cast %138 : vector<1x16x64xbf16> to vector<16x64xbf16>
    %cst_108 = arith.constant dense<0.000000e+00> : vector<16x64xf32>
    %140 = tpu.matmul %131, %139, %cst_108 {dimension_numbers = #tpu.dot_dimension_numbers<[1], [0], [0], [1], [0, 0, 1, 1], [], []>} : vector<16x16xbf16>, vector<16x64xbf16>, vector<16x64xf32> -> vector<16x64xf32>
    %cst_109 = arith.constant dense<0.000000e+00> : vector<16x64xf32>
    %141 = tpu.matmul %134, %139, %cst_109 {dimension_numbers = #tpu.dot_dimension_numbers<[1], [0], [0], [1], [0, 0, 1, 1], [], []>} : vector<16x16xbf16>, vector<16x64xbf16>, vector<16x64xf32> -> vector<16x64xf32>
    %142 = arith.addf %140, %141 : vector<16x64xf32>
    %cst_110 = arith.constant dense<0.000000e+00> : vector<16x64xf32>
    %143 = tpu.matmul %137, %139, %cst_110 {dimension_numbers = #tpu.dot_dimension_numbers<[1], [0], [0], [1], [0, 0, 1, 1], [], []>} : vector<16x16xbf16>, vector<16x64xbf16>, vector<16x64xf32> -> vector<16x64xf32>
    %144 = arith.addf %142, %143 : vector<16x64xf32>
    %c1_111 = arith.constant 1 : index
    %c0_112 = arith.constant 0 : index
    %c0_113 = arith.constant 0 : index
    %145 = vector.load %arg4[%c1_111, %c0_112, %c0_113] : memref<4x16x64xbf16, #tpu.memory_space<vmem>>, vector<1x16x64xbf16>
    %146 = vector.shape_cast %145 : vector<1x16x64xbf16> to vector<16x64xbf16>
    %cst_114 = arith.constant dense<0.000000e+00> : vector<16x64xf32>
    %147 = tpu.matmul %131, %146, %cst_114 {dimension_numbers = #tpu.dot_dimension_numbers<[1], [0], [0], [1], [0, 0, 1, 1], [], []>} : vector<16x16xbf16>, vector<16x64xbf16>, vector<16x64xf32> -> vector<16x64xf32>
    %148 = arith.addf %144, %147 : vector<16x64xf32>
    %cst_115 = arith.constant dense<0.000000e+00> : vector<16x64xf32>
    %149 = tpu.matmul %134, %146, %cst_115 {dimension_numbers = #tpu.dot_dimension_numbers<[1], [0], [0], [1], [0, 0, 1, 1], [], []>} : vector<16x16xbf16>, vector<16x64xbf16>, vector<16x64xf32> -> vector<16x64xf32>
    %150 = arith.addf %148, %149 : vector<16x64xf32>
    %cst_116 = arith.constant dense<0.000000e+00> : vector<16x64xf32>
    %151 = tpu.matmul %137, %146, %cst_116 {dimension_numbers = #tpu.dot_dimension_numbers<[1], [0], [0], [1], [0, 0, 1, 1], [], []>} : vector<16x16xbf16>, vector<16x64xbf16>, vector<16x64xf32> -> vector<16x64xf32>
    %152 = arith.addf %150, %151 : vector<16x64xf32>
    %c2_117 = arith.constant 2 : index
    %c0_118 = arith.constant 0 : index
    %c0_119 = arith.constant 0 : index
    %153 = vector.load %arg4[%c2_117, %c0_118, %c0_119] : memref<4x16x64xbf16, #tpu.memory_space<vmem>>, vector<1x16x64xbf16>
    %154 = vector.shape_cast %153 : vector<1x16x64xbf16> to vector<16x64xbf16>
    %cst_120 = arith.constant dense<0.000000e+00> : vector<16x64xf32>
    %155 = tpu.matmul %131, %154, %cst_120 {dimension_numbers = #tpu.dot_dimension_numbers<[1], [0], [0], [1], [0, 0, 1, 1], [], []>} : vector<16x16xbf16>, vector<16x64xbf16>, vector<16x64xf32> -> vector<16x64xf32>
    %156 = arith.addf %152, %155 : vector<16x64xf32>
    %cst_121 = arith.constant dense<0.000000e+00> : vector<16x64xf32>
    %157 = tpu.matmul %134, %154, %cst_121 {dimension_numbers = #tpu.dot_dimension_numbers<[1], [0], [0], [1], [0, 0, 1, 1], [], []>} : vector<16x16xbf16>, vector<16x64xbf16>, vector<16x64xf32> -> vector<16x64xf32>
    %158 = arith.addf %156, %157 : vector<16x64xf32>
    %cst_122 = arith.constant dense<0.000000e+00> : vector<16x64xf32>
    %159 = tpu.matmul %137, %154, %cst_122 {dimension_numbers = #tpu.dot_dimension_numbers<[1], [0], [0], [1], [0, 0, 1, 1], [], []>} : vector<16x16xbf16>, vector<16x64xbf16>, vector<16x64xf32> -> vector<16x64xf32>
    %160 = arith.addf %158, %159 : vector<16x64xf32>
    %c3_123 = arith.constant 3 : index
    %c0_124 = arith.constant 0 : index
    %c0_125 = arith.constant 0 : index
    %161 = vector.load %arg4[%c3_123, %c0_124, %c0_125] : memref<4x16x64xbf16, #tpu.memory_space<vmem>>, vector<1x16x64xbf16>
    %162 = vector.shape_cast %161 : vector<1x16x64xbf16> to vector<16x64xbf16>
    %cst_126 = arith.constant dense<0.000000e+00> : vector<16x64xf32>
    %163 = tpu.matmul %131, %162, %cst_126 {dimension_numbers = #tpu.dot_dimension_numbers<[1], [0], [0], [1], [0, 0, 1, 1], [], []>} : vector<16x16xbf16>, vector<16x64xbf16>, vector<16x64xf32> -> vector<16x64xf32>
    %164 = arith.addf %160, %163 : vector<16x64xf32>
    %cst_127 = arith.constant dense<0.000000e+00> : vector<16x64xf32>
    %165 = tpu.matmul %134, %162, %cst_127 {dimension_numbers = #tpu.dot_dimension_numbers<[1], [0], [0], [1], [0, 0, 1, 1], [], []>} : vector<16x16xbf16>, vector<16x64xbf16>, vector<16x64xf32> -> vector<16x64xf32>
    %166 = arith.addf %164, %165 : vector<16x64xf32>
    %cst_128 = arith.constant dense<0.000000e+00> : vector<16x64xf32>
    %167 = tpu.matmul %137, %162, %cst_128 {dimension_numbers = #tpu.dot_dimension_numbers<[1], [0], [0], [1], [0, 0, 1, 1], [], []>} : vector<16x16xbf16>, vector<16x64xbf16>, vector<16x64xf32> -> vector<16x64xf32>
    %168 = arith.addf %166, %167 : vector<16x64xf32>
    %c0_129 = arith.constant 0 : index
    %c1_130 = arith.constant 1 : index
    %c0_131 = arith.constant 0 : index
    %c1_132 = arith.constant 1 : index
    %c0_133 = arith.constant 0 : index
    %c0_134 = arith.constant 0 : index
    %169 = vector.load %arg5[%c0_129, %c1_130, %c0_131, %c1_132, %c0_133, %c0_134] : memref<1x4x1x2x16x64xf32, #tpu.memory_space<vmem>>, vector<1x1x1x1x16x64xf32>
    %170 = vector.shape_cast %169 : vector<1x1x1x1x16x64xf32> to vector<16x64xf32>
    %171 = vector.shape_cast %168 : vector<16x64xf32> to vector<1x1x1x1x16x64xf32>
    tpu.vector_store %arg5[%c0_129, %c1_130, %c0_131, %c1_132, %c0_133, %c0_134], %171 {strides = array<i32>} : memref<1x4x1x2x16x64xf32, #tpu.memory_space<vmem>>, vector<1x1x1x1x16x64xf32>,
    %c0_135 = arith.constant 0 : index
    %c4 = arith.constant 4 : index
    %c0_136 = arith.constant 0 : index
    %c0_137 = arith.constant 0 : index
    %c0_138 = arith.constant 0 : index
    %172 = vector.load %arg3[%c0_135, %c4, %c0_136, %c0_137, %c0_138] : memref<1x8x1x16x16xf32, #tpu.memory_space<vmem>>, vector<1x1x1x16x16xf32>
    %173 = vector.shape_cast %172 : vector<1x1x1x16x16xf32> to vector<16x16xf32>
    %174 = arith.truncf %173 : vector<16x16xf32> to vector<16x16xbf16>
    %175 = arith.extf %174 : vector<16x16xbf16> to vector<16x16xf32>
    %176 = arith.subf %173, %175 : vector<16x16xf32>
    %177 = arith.truncf %176 : vector<16x16xf32> to vector<16x16xbf16>
    %178 = arith.extf %177 : vector<16x16xbf16> to vector<16x16xf32>
    %179 = arith.subf %176, %178 : vector<16x16xf32>
    %180 = arith.truncf %179 : vector<16x16xf32> to vector<16x16xbf16>
    %c0_139 = arith.constant 0 : index
    %c0_140 = arith.constant 0 : index
    %c0_141 = arith.constant 0 : index
    %181 = vector.load %arg4[%c0_139, %c0_140, %c0_141] : memref<4x16x64xbf16, #tpu.memory_space<vmem>>, vector<1x16x64xbf16>
    %182 = vector.shape_cast %181 : vector<1x16x64xbf16> to vector<16x64xbf16>
    %cst_142 = arith.constant dense<0.000000e+00> : vector<16x64xf32>
    %183 = tpu.matmul %174, %182, %cst_142 {dimension_numbers = #tpu.dot_dimension_numbers<[1], [0], [0], [1], [0, 0, 1, 1], [], []>} : vector<16x16xbf16>, vector<16x64xbf16>, vector<16x64xf32> -> vector<16x64xf32>
    %cst_143 = arith.constant dense<0.000000e+00> : vector<16x64xf32>
    %184 = tpu.matmul %177, %182, %cst_143 {dimension_numbers = #tpu.dot_dimension_numbers<[1], [0], [0], [1], [0, 0, 1, 1], [], []>} : vector<16x16xbf16>, vector<16x64xbf16>, vector<16x64xf32> -> vector<16x64xf32>
    %185 = arith.addf %183, %184 : vector<16x64xf32>
    %cst_144 = arith.constant dense<0.000000e+00> : vector<16x64xf32>
    %186 = tpu.matmul %180, %182, %cst_144 {dimension_numbers = #tpu.dot_dimension_numbers<[1], [0], [0], [1], [0, 0, 1, 1], [], []>} : vector<16x16xbf16>, vector<16x64xbf16>, vector<16x64xf32> -> vector<16x64xf32>
    %187 = arith.addf %185, %186 : vector<16x64xf32>
    %c1_145 = arith.constant 1 : index
    %c0_146 = arith.constant 0 : index
    %c0_147 = arith.constant 0 : index
    %188 = vector.load %arg4[%c1_145, %c0_146, %c0_147] : memref<4x16x64xbf16, #tpu.memory_space<vmem>>, vector<1x16x64xbf16>
    %189 = vector.shape_cast %188 : vector<1x16x64xbf16> to vector<16x64xbf16>
    %cst_148 = arith.constant dense<0.000000e+00> : vector<16x64xf32>
    %190 = tpu.matmul %174, %189, %cst_148 {dimension_numbers = #tpu.dot_dimension_numbers<[1], [0], [0], [1], [0, 0, 1, 1], [], []>} : vector<16x16xbf16>, vector<16x64xbf16>, vector<16x64xf32> -> vector<16x64xf32>
    %191 = arith.addf %187, %190 : vector<16x64xf32>
    %cst_149 = arith.constant dense<0.000000e+00> : vector<16x64xf32>
    %192 = tpu.matmul %177, %189, %cst_149 {dimension_numbers = #tpu.dot_dimension_numbers<[1], [0], [0], [1], [0, 0, 1, 1], [], []>} : vector<16x16xbf16>, vector<16x64xbf16>, vector<16x64xf32> -> vector<16x64xf32>
    %193 = arith.addf %191, %192 : vector<16x64xf32>
    %cst_150 = arith.constant dense<0.000000e+00> : vector<16x64xf32>
    %194 = tpu.matmul %180, %189, %cst_150 {dimension_numbers = #tpu.dot_dimension_numbers<[1], [0], [0], [1], [0, 0, 1, 1], [], []>} : vector<16x16xbf16>, vector<16x64xbf16>, vector<16x64xf32> -> vector<16x64xf32>
    %195 = arith.addf %193, %194 : vector<16x64xf32>
    %c2_151 = arith.constant 2 : index
    %c0_152 = arith.constant 0 : index
    %c0_153 = arith.constant 0 : index
    %196 = vector.load %arg4[%c2_151, %c0_152, %c0_153] : memref<4x16x64xbf16, #tpu.memory_space<vmem>>, vector<1x16x64xbf16>
    %197 = vector.shape_cast %196 : vector<1x16x64xbf16> to vector<16x64xbf16>
    %cst_154 = arith.constant dense<0.000000e+00> : vector<16x64xf32>
    %198 = tpu.matmul %174, %197, %cst_154 {dimension_numbers = #tpu.dot_dimension_numbers<[1], [0], [0], [1], [0, 0, 1, 1], [], []>} : vector<16x16xbf16>, vector<16x64xbf16>, vector<16x64xf32> -> vector<16x64xf32>
    %199 = arith.addf %195, %198 : vector<16x64xf32>
    %cst_155 = arith.constant dense<0.000000e+00> : vector<16x64xf32>
    %200 = tpu.matmul %177, %197, %cst_155 {dimension_numbers = #tpu.dot_dimension_numbers<[1], [0], [0], [1], [0, 0, 1, 1], [], []>} : vector<16x16xbf16>, vector<16x64xbf16>, vector<16x64xf32> -> vector<16x64xf32>
    %201 = arith.addf %199, %200 : vector<16x64xf32>
    %cst_156 = arith.constant dense<0.000000e+00> : vector<16x64xf32>
    %202 = tpu.matmul %180, %197, %cst_156 {dimension_numbers = #tpu.dot_dimension_numbers<[1], [0], [0], [1], [0, 0, 1, 1], [], []>} : vector<16x16xbf16>, vector<16x64xbf16>, vector<16x64xf32> -> vector<16x64xf32>
    %203 = arith.addf %201, %202 : vector<16x64xf32>
    %c3_157 = arith.constant 3 : index
    %c0_158 = arith.constant 0 : index
    %c0_159 = arith.constant 0 : index
    %204 = vector.load %arg4[%c3_157, %c0_158, %c0_159] : memref<4x16x64xbf16, #tpu.memory_space<vmem>>, vector<1x16x64xbf16>
    %205 = vector.shape_cast %204 : vector<1x16x64xbf16> to vector<16x64xbf16>
    %cst_160 = arith.constant dense<0.000000e+00> : vector<16x64xf32>
    %206 = tpu.matmul %174, %205, %cst_160 {dimension_numbers = #tpu.dot_dimension_numbers<[1], [0], [0], [1], [0, 0, 1, 1], [], []>} : vector<16x16xbf16>, vector<16x64xbf16>, vector<16x64xf32> -> vector<16x64xf32>
    %207 = arith.addf %203, %206 : vector<16x64xf32>
    %cst_161 = arith.constant dense<0.000000e+00> : vector<16x64xf32>
    %208 = tpu.matmul %177, %205, %cst_161 {dimension_numbers = #tpu.dot_dimension_numbers<[1], [0], [0], [1], [0, 0, 1, 1], [], []>} : vector<16x16xbf16>, vector<16x64xbf16>, vector<16x64xf32> -> vector<16x64xf32>
    %209 = arith.addf %207, %208 : vector<16x64xf32>
    %cst_162 = arith.constant dense<0.000000e+00> : vector<16x64xf32>
    %210 = tpu.matmul %180, %205, %cst_162 {dimension_numbers = #tpu.dot_dimension_numbers<[1], [0], [0], [1], [0, 0, 1, 1], [], []>} : vector<16x16xbf16>, vector<16x64xbf16>, vector<16x64xf32> -> vector<16x64xf32>
    %211 = arith.addf %209, %210 : vector<16x64xf32>
    %c0_163 = arith.constant 0 : index
    %c2_164 = arith.constant 2 : index
    %c0_165 = arith.constant 0 : index
    %c0_166 = arith.constant 0 : index
    %c0_167 = arith.constant 0 : index
    %c0_168 = arith.constant 0 : index
    %212 = vector.load %arg5[%c0_163, %c2_164, %c0_165, %c0_166, %c0_167, %c0_168] : memref<1x4x1x2x16x64xf32, #tpu.memory_space<vmem>>, vector<1x1x1x1x16x64xf32>
    %213 = vector.shape_cast %212 : vector<1x1x1x1x16x64xf32> to vector<16x64xf32>
    %214 = vector.shape_cast %211 : vector<16x64xf32> to vector<1x1x1x1x16x64xf32>
    tpu.vector_store %arg5[%c0_163, %c2_164, %c0_165, %c0_166, %c0_167, %c0_168], %214 {strides = array<i32>} : memref<1x4x1x2x16x64xf32, #tpu.memory_space<vmem>>, vector<1x1x1x1x16x64xf32>,
    %c0_169 = arith.constant 0 : index
    %c5 = arith.constant 5 : index
    %c0_170 = arith.constant 0 : index
    %c0_171 = arith.constant 0 : index
    %c0_172 = arith.constant 0 : index
    %215 = vector.load %arg3[%c0_169, %c5, %c0_170, %c0_171, %c0_172] : memref<1x8x1x16x16xf32, #tpu.memory_space<vmem>>, vector<1x1x1x16x16xf32>
    %216 = vector.shape_cast %215 : vector<1x1x1x16x16xf32> to vector<16x16xf32>
    %217 = arith.truncf %216 : vector<16x16xf32> to vector<16x16xbf16>
    %218 = arith.extf %217 : vector<16x16xbf16> to vector<16x16xf32>
    %219 = arith.subf %216, %218 : vector<16x16xf32>
    %220 = arith.truncf %219 : vector<16x16xf32> to vector<16x16xbf16>
    %221 = arith.extf %220 : vector<16x16xbf16> to vector<16x16xf32>
    %222 = arith.subf %219, %221 : vector<16x16xf32>
    %223 = arith.truncf %222 : vector<16x16xf32> to vector<16x16xbf16>
    %c0_173 = arith.constant 0 : index
    %c0_174 = arith.constant 0 : index
    %c0_175 = arith.constant 0 : index
    %224 = vector.load %arg4[%c0_173, %c0_174, %c0_175] : memref<4x16x64xbf16, #tpu.memory_space<vmem>>, vector<1x16x64xbf16>
    %225 = vector.shape_cast %224 : vector<1x16x64xbf16> to vector<16x64xbf16>
    %cst_176 = arith.constant dense<0.000000e+00> : vector<16x64xf32>
    %226 = tpu.matmul %217, %225, %cst_176 {dimension_numbers = #tpu.dot_dimension_numbers<[1], [0], [0], [1], [0, 0, 1, 1], [], []>} : vector<16x16xbf16>, vector<16x64xbf16>, vector<16x64xf32> -> vector<16x64xf32>
    %cst_177 = arith.constant dense<0.000000e+00> : vector<16x64xf32>
    %227 = tpu.matmul %220, %225, %cst_177 {dimension_numbers = #tpu.dot_dimension_numbers<[1], [0], [0], [1], [0, 0, 1, 1], [], []>} : vector<16x16xbf16>, vector<16x64xbf16>, vector<16x64xf32> -> vector<16x64xf32>
    %228 = arith.addf %226, %227 : vector<16x64xf32>
    %cst_178 = arith.constant dense<0.000000e+00> : vector<16x64xf32>
    %229 = tpu.matmul %223, %225, %cst_178 {dimension_numbers = #tpu.dot_dimension_numbers<[1], [0], [0], [1], [0, 0, 1, 1], [], []>} : vector<16x16xbf16>, vector<16x64xbf16>, vector<16x64xf32> -> vector<16x64xf32>
    %230 = arith.addf %228, %229 : vector<16x64xf32>
    %c1_179 = arith.constant 1 : index
    %c0_180 = arith.constant 0 : index
    %c0_181 = arith.constant 0 : index
    %231 = vector.load %arg4[%c1_179, %c0_180, %c0_181] : memref<4x16x64xbf16, #tpu.memory_space<vmem>>, vector<1x16x64xbf16>
    %232 = vector.shape_cast %231 : vector<1x16x64xbf16> to vector<16x64xbf16>
    %cst_182 = arith.constant dense<0.000000e+00> : vector<16x64xf32>
    %233 = tpu.matmul %217, %232, %cst_182 {dimension_numbers = #tpu.dot_dimension_numbers<[1], [0], [0], [1], [0, 0, 1, 1], [], []>} : vector<16x16xbf16>, vector<16x64xbf16>, vector<16x64xf32> -> vector<16x64xf32>
    %234 = arith.addf %230, %233 : vector<16x64xf32>
    %cst_183 = arith.constant dense<0.000000e+00> : vector<16x64xf32>
    %235 = tpu.matmul %220, %232, %cst_183 {dimension_numbers = #tpu.dot_dimension_numbers<[1], [0], [0], [1], [0, 0, 1, 1], [], []>} : vector<16x16xbf16>, vector<16x64xbf16>, vector<16x64xf32> -> vector<16x64xf32>
    %236 = arith.addf %234, %235 : vector<16x64xf32>
    %cst_184 = arith.constant dense<0.000000e+00> : vector<16x64xf32>
    %237 = tpu.matmul %223, %232, %cst_184 {dimension_numbers = #tpu.dot_dimension_numbers<[1], [0], [0], [1], [0, 0, 1, 1], [], []>} : vector<16x16xbf16>, vector<16x64xbf16>, vector<16x64xf32> -> vector<16x64xf32>
    %238 = arith.addf %236, %237 : vector<16x64xf32>
    %c2_185 = arith.constant 2 : index
    %c0_186 = arith.constant 0 : index
    %c0_187 = arith.constant 0 : index
    %239 = vector.load %arg4[%c2_185, %c0_186, %c0_187] : memref<4x16x64xbf16, #tpu.memory_space<vmem>>, vector<1x16x64xbf16>
    %240 = vector.shape_cast %239 : vector<1x16x64xbf16> to vector<16x64xbf16>
    %cst_188 = arith.constant dense<0.000000e+00> : vector<16x64xf32>
    %241 = tpu.matmul %217, %240, %cst_188 {dimension_numbers = #tpu.dot_dimension_numbers<[1], [0], [0], [1], [0, 0, 1, 1], [], []>} : vector<16x16xbf16>, vector<16x64xbf16>, vector<16x64xf32> -> vector<16x64xf32>
    %242 = arith.addf %238, %241 : vector<16x64xf32>
    %cst_189 = arith.constant dense<0.000000e+00> : vector<16x64xf32>
    %243 = tpu.matmul %220, %240, %cst_189 {dimension_numbers = #tpu.dot_dimension_numbers<[1], [0], [0], [1], [0, 0, 1, 1], [], []>} : vector<16x16xbf16>, vector<16x64xbf16>, vector<16x64xf32> -> vector<16x64xf32>
    %244 = arith.addf %242, %243 : vector<16x64xf32>
    %cst_190 = arith.constant dense<0.000000e+00> : vector<16x64xf32>
    %245 = tpu.matmul %223, %240, %cst_190 {dimension_numbers = #tpu.dot_dimension_numbers<[1], [0], [0], [1], [0, 0, 1, 1], [], []>} : vector<16x16xbf16>, vector<16x64xbf16>, vector<16x64xf32> -> vector<16x64xf32>
    %246 = arith.addf %244, %245 : vector<16x64xf32>
    %c3_191 = arith.constant 3 : index
    %c0_192 = arith.constant 0 : index
    %c0_193 = arith.constant 0 : index
    %247 = vector.load %arg4[%c3_191, %c0_192, %c0_193] : memref<4x16x64xbf16, #tpu.memory_space<vmem>>, vector<1x16x64xbf16>
    %248 = vector.shape_cast %247 : vector<1x16x64xbf16> to vector<16x64xbf16>
    %cst_194 = arith.constant dense<0.000000e+00> : vector<16x64xf32>
    %249 = tpu.matmul %217, %248, %cst_194 {dimension_numbers = #tpu.dot_dimension_numbers<[1], [0], [0], [1], [0, 0, 1, 1], [], []>} : vector<16x16xbf16>, vector<16x64xbf16>, vector<16x64xf32> -> vector<16x64xf32>
    %250 = arith.addf %246, %249 : vector<16x64xf32>
    %cst_195 = arith.constant dense<0.000000e+00> : vector<16x64xf32>
    %251 = tpu.matmul %220, %248, %cst_195 {dimension_numbers = #tpu.dot_dimension_numbers<[1], [0], [0], [1], [0, 0, 1, 1], [], []>} : vector<16x16xbf16>, vector<16x64xbf16>, vector<16x64xf32> -> vector<16x64xf32>
    %252 = arith.addf %250, %251 : vector<16x64xf32>
    %cst_196 = arith.constant dense<0.000000e+00> : vector<16x64xf32>
    %253 = tpu.matmul %223, %248, %cst_196 {dimension_numbers = #tpu.dot_dimension_numbers<[1], [0], [0], [1], [0, 0, 1, 1], [], []>} : vector<16x16xbf16>, vector<16x64xbf16>, vector<16x64xf32> -> vector<16x64xf32>
    %254 = arith.addf %252, %253 : vector<16x64xf32>
    %c0_197 = arith.constant 0 : index
    %c2_198 = arith.constant 2 : index
    %c0_199 = arith.constant 0 : index
    %c1_200 = arith.constant 1 : index
    %c0_201 = arith.constant 0 : index
    %c0_202 = arith.constant 0 : index
    %255 = vector.load %arg5[%c0_197, %c2_198, %c0_199, %c1_200, %c0_201, %c0_202] : memref<1x4x1x2x16x64xf32, #tpu.memory_space<vmem>>, vector<1x1x1x1x16x64xf32>
    %256 = vector.shape_cast %255 : vector<1x1x1x1x16x64xf32> to vector<16x64xf32>
    %257 = vector.shape_cast %254 : vector<16x64xf32> to vector<1x1x1x1x16x64xf32>
    tpu.vector_store %arg5[%c0_197, %c2_198, %c0_199, %c1_200, %c0_201, %c0_202], %257 {strides = array<i32>} : memref<1x4x1x2x16x64xf32, #tpu.memory_space<vmem>>, vector<1x1x1x1x16x64xf32>,
    %c0_203 = arith.constant 0 : index
    %c6 = arith.constant 6 : index
    %c0_204 = arith.constant 0 : index
    %c0_205 = arith.constant 0 : index
    %c0_206 = arith.constant 0 : index
    %258 = vector.load %arg3[%c0_203, %c6, %c0_204, %c0_205, %c0_206] : memref<1x8x1x16x16xf32, #tpu.memory_space<vmem>>, vector<1x1x1x16x16xf32>
    %259 = vector.shape_cast %258 : vector<1x1x1x16x16xf32> to vector<16x16xf32>
    %260 = arith.truncf %259 : vector<16x16xf32> to vector<16x16xbf16>
    %261 = arith.extf %260 : vector<16x16xbf16> to vector<16x16xf32>
    %262 = arith.subf %259, %261 : vector<16x16xf32>
    %263 = arith.truncf %262 : vector<16x16xf32> to vector<16x16xbf16>
    %264 = arith.extf %263 : vector<16x16xbf16> to vector<16x16xf32>
    %265 = arith.subf %262, %264 : vector<16x16xf32>
    %266 = arith.truncf %265 : vector<16x16xf32> to vector<16x16xbf16>
    %c0_207 = arith.constant 0 : index
    %c0_208 = arith.constant 0 : index
    %c0_209 = arith.constant 0 : index
    %267 = vector.load %arg4[%c0_207, %c0_208, %c0_209] : memref<4x16x64xbf16, #tpu.memory_space<vmem>>, vector<1x16x64xbf16>
    %268 = vector.shape_cast %267 : vector<1x16x64xbf16> to vector<16x64xbf16>
    %cst_210 = arith.constant dense<0.000000e+00> : vector<16x64xf32>
    %269 = tpu.matmul %260, %268, %cst_210 {dimension_numbers = #tpu.dot_dimension_numbers<[1], [0], [0], [1], [0, 0, 1, 1], [], []>} : vector<16x16xbf16>, vector<16x64xbf16>, vector<16x64xf32> -> vector<16x64xf32>
    %cst_211 = arith.constant dense<0.000000e+00> : vector<16x64xf32>
    %270 = tpu.matmul %263, %268, %cst_211 {dimension_numbers = #tpu.dot_dimension_numbers<[1], [0], [0], [1], [0, 0, 1, 1], [], []>} : vector<16x16xbf16>, vector<16x64xbf16>, vector<16x64xf32> -> vector<16x64xf32>
    %271 = arith.addf %269, %270 : vector<16x64xf32>
    %cst_212 = arith.constant dense<0.000000e+00> : vector<16x64xf32>
    %272 = tpu.matmul %266, %268, %cst_212 {dimension_numbers = #tpu.dot_dimension_numbers<[1], [0], [0], [1], [0, 0, 1, 1], [], []>} : vector<16x16xbf16>, vector<16x64xbf16>, vector<16x64xf32> -> vector<16x64xf32>
    %273 = arith.addf %271, %272 : vector<16x64xf32>
    %c1_213 = arith.constant 1 : index
    %c0_214 = arith.constant 0 : index
    %c0_215 = arith.constant 0 : index
    %274 = vector.load %arg4[%c1_213, %c0_214, %c0_215] : memref<4x16x64xbf16, #tpu.memory_space<vmem>>, vector<1x16x64xbf16>
    %275 = vector.shape_cast %274 : vector<1x16x64xbf16> to vector<16x64xbf16>
    %cst_216 = arith.constant dense<0.000000e+00> : vector<16x64xf32>
    %276 = tpu.matmul %260, %275, %cst_216 {dimension_numbers = #tpu.dot_dimension_numbers<[1], [0], [0], [1], [0, 0, 1, 1], [], []>} : vector<16x16xbf16>, vector<16x64xbf16>, vector<16x64xf32> -> vector<16x64xf32>
    %277 = arith.addf %273, %276 : vector<16x64xf32>
    %cst_217 = arith.constant dense<0.000000e+00> : vector<16x64xf32>
    %278 = tpu.matmul %263, %275, %cst_217 {dimension_numbers = #tpu.dot_dimension_numbers<[1], [0], [0], [1], [0, 0, 1, 1], [], []>} : vector<16x16xbf16>, vector<16x64xbf16>, vector<16x64xf32> -> vector<16x64xf32>
    %279 = arith.addf %277, %278 : vector<16x64xf32>
    %cst_218 = arith.constant dense<0.000000e+00> : vector<16x64xf32>
    %280 = tpu.matmul %266, %275, %cst_218 {dimension_numbers = #tpu.dot_dimension_numbers<[1], [0], [0], [1], [0, 0, 1, 1], [], []>} : vector<16x16xbf16>, vector<16x64xbf16>, vector<16x64xf32> -> vector<16x64xf32>
    %281 = arith.addf %279, %280 : vector<16x64xf32>
    %c2_219 = arith.constant 2 : index
    %c0_220 = arith.constant 0 : index
    %c0_221 = arith.constant 0 : index
    %282 = vector.load %arg4[%c2_219, %c0_220, %c0_221] : memref<4x16x64xbf16, #tpu.memory_space<vmem>>, vector<1x16x64xbf16>
    %283 = vector.shape_cast %282 : vector<1x16x64xbf16> to vector<16x64xbf16>
    %cst_222 = arith.constant dense<0.000000e+00> : vector<16x64xf32>
    %284 = tpu.matmul %260, %283, %cst_222 {dimension_numbers = #tpu.dot_dimension_numbers<[1], [0], [0], [1], [0, 0, 1, 1], [], []>} : vector<16x16xbf16>, vector<16x64xbf16>, vector<16x64xf32> -> vector<16x64xf32>
    %285 = arith.addf %281, %284 : vector<16x64xf32>
    %cst_223 = arith.constant dense<0.000000e+00> : vector<16x64xf32>
    %286 = tpu.matmul %263, %283, %cst_223 {dimension_numbers = #tpu.dot_dimension_numbers<[1], [0], [0], [1], [0, 0, 1, 1], [], []>} : vector<16x16xbf16>, vector<16x64xbf16>, vector<16x64xf32> -> vector<16x64xf32>
    %287 = arith.addf %285, %286 : vector<16x64xf32>
    %cst_224 = arith.constant dense<0.000000e+00> : vector<16x64xf32>
    %288 = tpu.matmul %266, %283, %cst_224 {dimension_numbers = #tpu.dot_dimension_numbers<[1], [0], [0], [1], [0, 0, 1, 1], [], []>} : vector<16x16xbf16>, vector<16x64xbf16>, vector<16x64xf32> -> vector<16x64xf32>
    %289 = arith.addf %287, %288 : vector<16x64xf32>
    %c3_225 = arith.constant 3 : index
    %c0_226 = arith.constant 0 : index
    %c0_227 = arith.constant 0 : index
    %290 = vector.load %arg4[%c3_225, %c0_226, %c0_227] : memref<4x16x64xbf16, #tpu.memory_space<vmem>>, vector<1x16x64xbf16>
    %291 = vector.shape_cast %290 : vector<1x16x64xbf16> to vector<16x64xbf16>
    %cst_228 = arith.constant dense<0.000000e+00> : vector<16x64xf32>
    %292 = tpu.matmul %260, %291, %cst_228 {dimension_numbers = #tpu.dot_dimension_numbers<[1], [0], [0], [1], [0, 0, 1, 1], [], []>} : vector<16x16xbf16>, vector<16x64xbf16>, vector<16x64xf32> -> vector<16x64xf32>
    %293 = arith.addf %289, %292 : vector<16x64xf32>
    %cst_229 = arith.constant dense<0.000000e+00> : vector<16x64xf32>
    %294 = tpu.matmul %263, %291, %cst_229 {dimension_numbers = #tpu.dot_dimension_numbers<[1], [0], [0], [1], [0, 0, 1, 1], [], []>} : vector<16x16xbf16>, vector<16x64xbf16>, vector<16x64xf32> -> vector<16x64xf32>
    %295 = arith.addf %293, %294 : vector<16x64xf32>
    %cst_230 = arith.constant dense<0.000000e+00> : vector<16x64xf32>
    %296 = tpu.matmul %266, %291, %cst_230 {dimension_numbers = #tpu.dot_dimension_numbers<[1], [0], [0], [1], [0, 0, 1, 1], [], []>} : vector<16x16xbf16>, vector<16x64xbf16>, vector<16x64xf32> -> vector<16x64xf32>
    %297 = arith.addf %295, %296 : vector<16x64xf32>
    %c0_231 = arith.constant 0 : index
    %c3_232 = arith.constant 3 : index
    %c0_233 = arith.constant 0 : index
    %c0_234 = arith.constant 0 : index
    %c0_235 = arith.constant 0 : index
    %c0_236 = arith.constant 0 : index
    %298 = vector.load %arg5[%c0_231, %c3_232, %c0_233, %c0_234, %c0_235, %c0_236] : memref<1x4x1x2x16x64xf32, #tpu.memory_space<vmem>>, vector<1x1x1x1x16x64xf32>
    %299 = vector.shape_cast %298 : vector<1x1x1x1x16x64xf32> to vector<16x64xf32>
    %300 = vector.shape_cast %297 : vector<16x64xf32> to vector<1x1x1x1x16x64xf32>
    tpu.vector_store %arg5[%c0_231, %c3_232, %c0_233, %c0_234, %c0_235, %c0_236], %300 {strides = array<i32>} : memref<1x4x1x2x16x64xf32, #tpu.memory_space<vmem>>, vector<1x1x1x1x16x64xf32>,
    %c0_237 = arith.constant 0 : index
    %c7 = arith.constant 7 : index
    %c0_238 = arith.constant 0 : index
    %c0_239 = arith.constant 0 : index
    %c0_240 = arith.constant 0 : index
    %301 = vector.load %arg3[%c0_237, %c7, %c0_238, %c0_239, %c0_240] : memref<1x8x1x16x16xf32, #tpu.memory_space<vmem>>, vector<1x1x1x16x16xf32>
    %302 = vector.shape_cast %301 : vector<1x1x1x16x16xf32> to vector<16x16xf32>
    %303 = arith.truncf %302 : vector<16x16xf32> to vector<16x16xbf16>
    %304 = arith.extf %303 : vector<16x16xbf16> to vector<16x16xf32>
    %305 = arith.subf %302, %304 : vector<16x16xf32>
    %306 = arith.truncf %305 : vector<16x16xf32> to vector<16x16xbf16>
    %307 = arith.extf %306 : vector<16x16xbf16> to vector<16x16xf32>
    %308 = arith.subf %305, %307 : vector<16x16xf32>
    %309 = arith.truncf %308 : vector<16x16xf32> to vector<16x16xbf16>
    %c0_241 = arith.constant 0 : index
    %c0_242 = arith.constant 0 : index
    %c0_243 = arith.constant 0 : index
    %310 = vector.load %arg4[%c0_241, %c0_242, %c0_243] : memref<4x16x64xbf16, #tpu.memory_space<vmem>>, vector<1x16x64xbf16>
    %311 = vector.shape_cast %310 : vector<1x16x64xbf16> to vector<16x64xbf16>
    %cst_244 = arith.constant dense<0.000000e+00> : vector<16x64xf32>
    %312 = tpu.matmul %303, %311, %cst_244 {dimension_numbers = #tpu.dot_dimension_numbers<[1], [0], [0], [1], [0, 0, 1, 1], [], []>} : vector<16x16xbf16>, vector<16x64xbf16>, vector<16x64xf32> -> vector<16x64xf32>
    %cst_245 = arith.constant dense<0.000000e+00> : vector<16x64xf32>
    %313 = tpu.matmul %306, %311, %cst_245 {dimension_numbers = #tpu.dot_dimension_numbers<[1], [0], [0], [1], [0, 0, 1, 1], [], []>} : vector<16x16xbf16>, vector<16x64xbf16>, vector<16x64xf32> -> vector<16x64xf32>
    %314 = arith.addf %312, %313 : vector<16x64xf32>
    %cst_246 = arith.constant dense<0.000000e+00> : vector<16x64xf32>
    %315 = tpu.matmul %309, %311, %cst_246 {dimension_numbers = #tpu.dot_dimension_numbers<[1], [0], [0], [1], [0, 0, 1, 1], [], []>} : vector<16x16xbf16>, vector<16x64xbf16>, vector<16x64xf32> -> vector<16x64xf32>
    %316 = arith.addf %314, %315 : vector<16x64xf32>
    %c1_247 = arith.constant 1 : index
    %c0_248 = arith.constant 0 : index
    %c0_249 = arith.constant 0 : index
    %317 = vector.load %arg4[%c1_247, %c0_248, %c0_249] : memref<4x16x64xbf16, #tpu.memory_space<vmem>>, vector<1x16x64xbf16>
    %318 = vector.shape_cast %317 : vector<1x16x64xbf16> to vector<16x64xbf16>
    %cst_250 = arith.constant dense<0.000000e+00> : vector<16x64xf32>
    %319 = tpu.matmul %303, %318, %cst_250 {dimension_numbers = #tpu.dot_dimension_numbers<[1], [0], [0], [1], [0, 0, 1, 1], [], []>} : vector<16x16xbf16>, vector<16x64xbf16>, vector<16x64xf32> -> vector<16x64xf32>
    %320 = arith.addf %316, %319 : vector<16x64xf32>
    %cst_251 = arith.constant dense<0.000000e+00> : vector<16x64xf32>
    %321 = tpu.matmul %306, %318, %cst_251 {dimension_numbers = #tpu.dot_dimension_numbers<[1], [0], [0], [1], [0, 0, 1, 1], [], []>} : vector<16x16xbf16>, vector<16x64xbf16>, vector<16x64xf32> -> vector<16x64xf32>
    %322 = arith.addf %320, %321 : vector<16x64xf32>
    %cst_252 = arith.constant dense<0.000000e+00> : vector<16x64xf32>
    %323 = tpu.matmul %309, %318, %cst_252 {dimension_numbers = #tpu.dot_dimension_numbers<[1], [0], [0], [1], [0, 0, 1, 1], [], []>} : vector<16x16xbf16>, vector<16x64xbf16>, vector<16x64xf32> -> vector<16x64xf32>
    %324 = arith.addf %322, %323 : vector<16x64xf32>
    %c2_253 = arith.constant 2 : index
    %c0_254 = arith.constant 0 : index
    %c0_255 = arith.constant 0 : index
    %325 = vector.load %arg4[%c2_253, %c0_254, %c0_255] : memref<4x16x64xbf16, #tpu.memory_space<vmem>>, vector<1x16x64xbf16>
    %326 = vector.shape_cast %325 : vector<1x16x64xbf16> to vector<16x64xbf16>
    %cst_256 = arith.constant dense<0.000000e+00> : vector<16x64xf32>
    %327 = tpu.matmul %303, %326, %cst_256 {dimension_numbers = #tpu.dot_dimension_numbers<[1], [0], [0], [1], [0, 0, 1, 1], [], []>} : vector<16x16xbf16>, vector<16x64xbf16>, vector<16x64xf32> -> vector<16x64xf32>
    %328 = arith.addf %324, %327 : vector<16x64xf32>
    %cst_257 = arith.constant dense<0.000000e+00> : vector<16x64xf32>
    %329 = tpu.matmul %306, %326, %cst_257 {dimension_numbers = #tpu.dot_dimension_numbers<[1], [0], [0], [1], [0, 0, 1, 1], [], []>} : vector<16x16xbf16>, vector<16x64xbf16>, vector<16x64xf32> -> vector<16x64xf32>
    %330 = arith.addf %328, %329 : vector<16x64xf32>
    %cst_258 = arith.constant dense<0.000000e+00> : vector<16x64xf32>
    %331 = tpu.matmul %309, %326, %cst_258 {dimension_numbers = #tpu.dot_dimension_numbers<[1], [0], [0], [1], [0, 0, 1, 1], [], []>} : vector<16x16xbf16>, vector<16x64xbf16>, vector<16x64xf32> -> vector<16x64xf32>
    %332 = arith.addf %330, %331 : vector<16x64xf32>
    %c3_259 = arith.constant 3 : index
    %c0_260 = arith.constant 0 : index
    %c0_261 = arith.constant 0 : index
    %333 = vector.load %arg4[%c3_259, %c0_260, %c0_261] : memref<4x16x64xbf16, #tpu.memory_space<vmem>>, vector<1x16x64xbf16>
    %334 = vector.shape_cast %333 : vector<1x16x64xbf16> to vector<16x64xbf16>
    %cst_262 = arith.constant dense<0.000000e+00> : vector<16x64xf32>
    %335 = tpu.matmul %303, %334, %cst_262 {dimension_numbers = #tpu.dot_dimension_numbers<[1], [0], [0], [1], [0, 0, 1, 1], [], []>} : vector<16x16xbf16>, vector<16x64xbf16>, vector<16x64xf32> -> vector<16x64xf32>
    %336 = arith.addf %332, %335 : vector<16x64xf32>
    %cst_263 = arith.constant dense<0.000000e+00> : vector<16x64xf32>
    %337 = tpu.matmul %306, %334, %cst_263 {dimension_numbers = #tpu.dot_dimension_numbers<[1], [0], [0], [1], [0, 0, 1, 1], [], []>} : vector<16x16xbf16>, vector<16x64xbf16>, vector<16x64xf32> -> vector<16x64xf32>
    %338 = arith.addf %336, %337 : vector<16x64xf32>
    %cst_264 = arith.constant dense<0.000000e+00> : vector<16x64xf32>
    %339 = tpu.matmul %309, %334, %cst_264 {dimension_numbers = #tpu.dot_dimension_numbers<[1], [0], [0], [1], [0, 0, 1, 1], [], []>} : vector<16x16xbf16>, vector<16x64xbf16>, vector<16x64xf32> -> vector<16x64xf32>
    %340 = arith.addf %338, %339 : vector<16x64xf32>
    %c0_265 = arith.constant 0 : index
    %c3_266 = arith.constant 3 : index
    %c0_267 = arith.constant 0 : index
    %c1_268 = arith.constant 1 : index
    %c0_269 = arith.constant 0 : index
    %c0_270 = arith.constant 0 : index
    %341 = vector.load %arg5[%c0_265, %c3_266, %c0_267, %c1_268, %c0_269, %c0_270] : memref<1x4x1x2x16x64xf32, #tpu.memory_space<vmem>>, vector<1x1x1x1x16x64xf32>
    %342 = vector.shape_cast %341 : vector<1x1x1x1x16x64xf32> to vector<16x64xf32>
    %343 = vector.shape_cast %340 : vector<16x64xf32> to vector<1x1x1x1x16x64xf32>
    tpu.vector_store %arg5[%c0_265, %c3_266, %c0_267, %c1_268, %c0_269, %c0_270], %343 {strides = array<i32>} : memref<1x4x1x2x16x64xf32, #tpu.memory_space<vmem>>, vector<1x1x1x1x16x64xf32>,
    return
  }
  func.func @transform_0(%arg0: i32, %arg1: i32, %arg2: i32) -> (i32, i32, i32, i32, i32) {
    %c0_i32 = arith.constant 0 : i32
    %c0_i32_0 = arith.constant 0 : i32
    %c0_i32_1 = arith.constant 0 : i32
    return %arg0, %arg2, %arg1, %c0_i32, %c0_i32_0 : i32, i32, i32, i32, i32
  }
  func.func @transform_1(%arg0: i32, %arg1: i32, %arg2: i32) -> (i32, i32, i32) {
    %c0_i32 = arith.constant 0 : i32
    %c0_i32_0 = arith.constant 0 : i32
    %c0_i32_1 = arith.constant 0 : i32
    %c0_i32_2 = arith.constant 0 : i32
    return %c0_i32, %c0_i32_0, %c0_i32_1 : i32, i32, i32
  }
  func.func @transform_2(%arg0: i32, %arg1: i32, %arg2: i32) -> (i32, i32, i32, i32, i32, i32) {
    %c0_i32 = arith.constant 0 : i32
    %c0_i32_0 = arith.constant 0 : i32
    %c0_i32_1 = arith.constant 0 : i32
    %c0_i32_2 = arith.constant 0 : i32
    return %arg0, %arg2, %arg1, %c0_i32, %c0_i32_0, %c0_i32_1 : i32, i32, i32, i32, i32, i32
  }
}

</mosaic_0001>

<llo_original>
// kernel: dup_up_3d.1
$region0: #{dup_up_3d.1}
  #allocation0 [shape = 'u32[]', space=smem, size = 0x4, offset = 0x4, fixed_abs, tag = 'smem constant byte address 0x4 - core index']
  #allocation1 [shape = 'u32[144,128]{1,0:T(1,128)}', space=vmem, size = 0x12000, scoped, tag = 'internal scratch']
  #allocation7 [shape = 's32[]', space=sflag, size = 0x4, offset = 0, fixed_abs, tag = 'sflag constant byte address 0x0 - dummy sync flag']
  %s0 = inlined_call_operand.hbm [shape: f32[2,8,4,16,16], index: 0, kind: input, shape index: {}]
  %s1 = inlined_call_operand.hbm [shape: bf16[4,16,64], index: 1, kind: input, shape index: {}]
  %s2 = inlined_call_operand.vmem [shape: f32[2,4,4,2,16,64], index: 2, kind: output, shape index: {}]
  %s3 = sld [smem:[#allocation0]]
  $region83: #{dup_up_3d.1} parent=0
    _
  %s5 = ssub.s32 1, %s3
  %s6 = scalar_select 0, %s5, %s3
  $region1: #{dup_up_3d.1} parent=0
    #allocation2 [shape = 'u8[131072]{0}', space=vmem, size = 0x20000, scoped, tag = 'input window, operand 0']
    #allocation3 [shape = 's32[2]{0}', space=sflag, size = 0x8, scoped, tag = 'scoped memory for dup_up_3d.1']
    #allocation4 [shape = 'u8[16384]{0}', space=vmem, size = 0x4000, scoped, tag = 'input window, operand 1, single buffered']
    #allocation5 [shape = 's32[1]{0}', space=sflag, size = 0x4, scoped, tag = 'scoped memory for dup_up_3d.1']
    #allocation6 [shape = 'u8[131072]{0}', space=vmem, size = 0x20000, scoped, tag = 'output window, operand 0']
    %7 = vsyncpa [#allocation3], 0
    %s8 = scalar_lea.sflag [#allocation3], 1
    %9 = vsyncpa %s8, 0
    %10 = vsyncpa [#allocation5], 0
    loop: start=0, step=1, limit=10
    $region2: #{dup_up_3d.1} parent=1 // loop_pre_header
      _
    $region3: #{dup_up_3d.1} parent=1 // loop_header
      %s12 = sphi 0, %s16
      %p13 = scmp.ge.s32.totalorder %s12, 10
      %s19 = sphi 0, %s38
      %s20 = sphi 0, %s34
      %s21 = sphi 0, %s30
      %s22 = sphi 0, %s19
      %s23 = sphi 0, %s20
      %s24 = sphi 0, %s21
      %s25 = sphi 0, %s22
      %s26 = sphi 0, %s23
      %s27 = sphi 0, %s24
      %s45 = sphi 0, %s47
      %s48 = sphi 0, %s45
      %s49 = sphi 0, %s48
      %s65 = sphi 0, %s49
      %s69 = sphi 0, %s69
      %s71 = sphi 0, %s69
      %s72 = sphi 0, %s71
      %s86 = sphi 0, %s72
      %s96 = sphi 0, %s98
      %s99 = sphi 0, %s96
      %s100 = sphi 0, %s99
      %s116 = sphi 0, %s100
    $region4: #{dup_up_3d.1} parent=1 // loop_header_branch
      %15 = sbr.rel (%p13) target = $region8
    $region5: #{dup_up_3d.1} parent=1 // loop_body
      %s17 = ssub.s32 %s12, 1
      %s18 = ssub.s32 %s12, 2
      %s28 = sadd.s32 1, %s21
      %p29 = scmp.ge.s32.totalorder %s28, 1
      %s30 = scalar_select %p29, 0, %s28
      %s31 = sadd.s32 1, %s20
      %s32 = scalar_select %p29, %s31, %s20
      %p33 = scmp.ge.s32.totalorder %s32, 4
      %s34 = scalar_select %p33, 0, %s32
      %s35 = sadd.s32 1, %s19
      %s36 = scalar_select %p33, %s35, %s19
      %p37 = scmp.ge.s32.totalorder %s36, 2
      %s38 = scalar_select %p37, 0, %s36
      %s39 = ssub.s32 %s19, %s38
      %s40 = ssub.s32 %s21, %s30
      %s41 = sor.u32 %s39, %s40
      %s42 = ssub.s32 %s20, %s34
      %s43 = sor.u32 %s41, %s42
      %p44 = scmp.eq.s32.totalorder %s43, 0
      %s46 = sadd.s32 %s45, 1
      %s47 = scalar_select %p44, %s45, %s46
      %p50 = pneg %p44
      %p51 = scmp.eq.s32.totalorder %s12, 7
      %p52 = por %p50, %p51
      %p53 = scmp.ne.s32.totalorder %s45, %s48
      %p54 = scmp.eq.s32.totalorder %s12, 0
      %p55 = por %p53, %p54
      %p56 = scmp.ne.s32.totalorder %s45, %s48
      %p57 = scmp.eq.s32.totalorder %s17, 7
      %p58 = por %p56, %p57
      %p59 = scmp.ne.s32.totalorder %s48, %s49
      %p60 = scmp.eq.s32.totalorder %s17, 0
      %p61 = por %p59, %p60
      %p62 = scmp.ne.s32.totalorder %s48, %s49
      %p63 = scmp.eq.s32.totalorder %s18, 7
      %p64 = por %p62, %p63
      %p66 = scmp.ne.s32.totalorder %s49, %s65
      %p67 = scmp.eq.s32.totalorder %s18, 0
      %p68 = por %p66, %p67
      %s70 = sadd.s32 %s69, 1
      %p73 = scmp.eq.s32.totalorder %s12, 7
      %p74 = scmp.ne.s32.totalorder %s69, %s71
      %p75 = scmp.eq.s32.totalorder %s12, 0
      %p76 = por %p74, %p75
      %p77 = scmp.ne.s32.totalorder %s69, %s71
      %p78 = scmp.eq.s32.totalorder %s17, 7
      %p79 = por %p77, %p78
      %p80 = scmp.ne.s32.totalorder %s71, %s72
      %p81 = scmp.eq.s32.totalorder %s17, 0
      %p82 = por %p80, %p81
      %p83 = scmp.ne.s32.totalorder %s71, %s72
      %p84 = scmp.eq.s32.totalorder %s18, 7
      %p85 = por %p83, %p84
      %p87 = scmp.ne.s32.totalorder %s72, %s86
      %p88 = scmp.eq.s32.totalorder %s18, 0
      %p89 = por %p87, %p88
      %s90 = ssub.s32 %s19, %s38
      %s91 = ssub.s32 %s21, %s30
      %s92 = sor.u32 %s90, %s91
      %s93 = ssub.s32 %s20, %s34
      %s94 = sor.u32 %s92, %s93
      %p95 = scmp.eq.s32.totalorder %s94, 0
      %s97 = sadd.s32 %s96, 1
      %s98 = scalar_select %p95, %s96, %s97
      %p101 = pneg %p95
      %p102 = scmp.eq.s32.totalorder %s12, 7
      %p103 = por %p101, %p102
      %p104 = scmp.ne.s32.totalorder %s96, %s99
      %p105 = scmp.eq.s32.totalorder %s12, 0
      %p106 = por %p104, %p105
      %p107 = scmp.ne.s32.totalorder %s96, %s99
      %p108 = scmp.eq.s32.totalorder %s17, 7
      %p109 = por %p107, %p108
      %p110 = scmp.ne.s32.totalorder %s99, %s100
      %p111 = scmp.eq.s32.totalorder %s17, 0
      %p112 = por %p110, %p111
      %p113 = scmp.ne.s32.totalorder %s99, %s100
      %p114 = scmp.eq.s32.totalorder %s18, 7
      %p115 = por %p113, %p114
      %p117 = scmp.ne.s32.totalorder %s100, %s116
      %p118 = scmp.eq.s32.totalorder %s18, 0
      %p119 = por %p117, %p118
      %p120 = scmp.le.s32.totalorder 1, %s12
      %p121 = scmp.lt.s32.totalorder %s12, 9
      %p122 = pnand %p120, %p121
      %p123 = pneg %p122
      // Predicated region
      $region9: #{dup_up_3d.1} parent=5 // pred_check
        _
      $region10: #{dup_up_3d.1} parent=5 // pred_check_branch
        %125 = sbr.rel (%p122) target = $region12
      $region11: #{dup_up_3d.1} parent=5 // pred_region
        %s126 = ssub.s32 %s12, 1
        // Predicated region
        $region13: #{dup_up_3d.1} parent=11 // pred_check
          %p127 = pneg %p82
        $region14: #{dup_up_3d.1} parent=11 // pred_check_branch
          %129 = sbr.rel (%p127) target = $region16
        $region15: #{dup_up_3d.1} parent=11 // pred_region
          %s131 = ssub.s32 512, 512
          %132 = vsyncadd [#allocation5], %s131
          %s133 = sshll.u32 [#allocation4], 4
          %s134 = int_to_ptr.vmem [resolvable:$true] %s133
          %139 = dma.hbm_to_vmem [thread:$0]  %s1, 512, %s134, [#allocation5], 64, 64, 4
        $region16: #{dup_up_3d.1} parent=11 // pred_fallthru
          _
      $region12: #{dup_up_3d.1} parent=5 // pred_fallthru
        _
      %p140 = scmp.lt.s32.totalorder %s12, 8
      // Predicated region
      $region17: #{dup_up_3d.1} parent=5 // pred_check
        %p141 = pneg %p140
      $region18: #{dup_up_3d.1} parent=5 // pred_check_branch
        %143 = sbr.rel (%p141) target = $region20
      $region19: #{dup_up_3d.1} parent=5 // pred_region
        // Predicated region
        $region21: #{dup_up_3d.1} parent=19 // pred_check
          %p144 = pneg %p55
        $region22: #{dup_up_3d.1} parent=19 // pred_check_branch
          %146 = sbr.rel (%p144) target = $region24
        $region23: #{dup_up_3d.1} parent=19 // pred_region
          #allocation8 [shape = 'u32[6]{0}', space=smem, size = 0x18, scoped, tag = 'DMA stride descriptor']
          %s147 = sand.u32 %s45, 1
          %s148 = scalar_lea.sflag [#allocation3], %s147
          %s149 = sand.u32 %s45, 1
          %s150 = smul.addr %s149, 128
          %s151 = scalar_lea.vmem [#allocation2], %s150
          %s152 = smul.u32 8, %s21
          %s154 = ssub.s32 2048, 2048
          %155 = vsyncadd %s148, %s154
          %s156 = smul.addr %s20, 2
          %s157 = smul.addr %s152, 8
          %s158 = sadd.s32 %s156, %s157
          %s159 = smul.addr %s19, 64
          %s160 = sadd.s32 %s158, %s159
          %s161 = smul.addr %s160, 128
          %s162 = scalar_lea.hbm %s0, %s161
          %s164 = sshll.u32 1, 14
          %s165 = sxor.u32 4294967295, %s164
          %s167 = sld [smem:[#allocation0]]
          %s168 = sadd.s32 2, %s167
          %s170 = sshll.u32 7, 26
          %s171 = sxor.u32 4294967295, %s170
          %s172 = sand.u32 0, %s171
          %s173 = sshll.u32 %s168, 26
          %s174 = sor.u32 %s172, %s173
          %s175 = sshll.u32 %s151, 4
          %s176 = int_to_ptr.vmem [resolvable:$true] %s175
          %182 = sst [smem:[#allocation8]] 1024
          %s183 = scalar_lea.smem [#allocation8], 1
          %184 = sst [smem:[%s183]] 256
          %s185 = scalar_lea.smem [#allocation8], 2
          %186 = sst [smem:[%s185]] 2
          %s187 = scalar_lea.smem [#allocation8], 3
          %188 = sst [smem:[%s187]] 128
          %s189 = scalar_lea.smem [#allocation8], 4
          %190 = sst [smem:[%s189]] 128
          %s191 = scalar_lea.smem [#allocation8], 5
          %192 = sst [smem:[%s191]] 8
          %194 = dma.general %s162, 2048, %s176, %s148, [#allocation7], [#allocation8], %s174, 0
        $region24: #{dup_up_3d.1} parent=19 // pred_fallthru
          _
      $region20: #{dup_up_3d.1} parent=5 // pred_fallthru
        _
      %p195 = scmp.le.s32.totalorder 1, %s12
      %p196 = scmp.lt.s32.totalorder %s12, 9
      %p197 = pnand %p195, %p196
      %p198 = pneg %p197
      // Predicated region
      $region25: #{dup_up_3d.1} parent=5 // pred_check
        _
      $region26: #{dup_up_3d.1} parent=5 // pred_check_branch
        %200 = sbr.rel (%p197) target = $region28
      $region27: #{dup_up_3d.1} parent=5 // pred_region
        %s201 = ssub.s32 %s12, 1
        %s202 = sand.u32 %s48, 1
        %s203 = scalar_lea.sflag [#allocation3], %s202
        %s204 = sand.u32 %s48, 1
        %s205 = smul.addr %s204, 128
        %s206 = scalar_lea.vmem [#allocation2], %s205
        // Predicated region
        $region29: #{dup_up_3d.1} parent=27 // pred_check
          %p207 = pneg %p61
        $region30: #{dup_up_3d.1} parent=27 // pred_check_branch
          %209 = sbr.rel (%p207) target = $region32
        $region31: #{dup_up_3d.1} parent=27 // pred_region
          %210 = dma.done %s203, 2048
        $region32: #{dup_up_3d.1} parent=27 // pred_fallthru
          _
        // Predicated region
        $region33: #{dup_up_3d.1} parent=27 // pred_check
          %p211 = pneg %p82
        $region34: #{dup_up_3d.1} parent=27 // pred_check_branch
          %213 = sbr.rel (%p211) target = $region36
        $region35: #{dup_up_3d.1} parent=27 // pred_region
          %214 = dma.done [#allocation5], 512
        $region36: #{dup_up_3d.1} parent=27 // pred_fallthru
          _
        %s215 = sand.u32 %s48, 1
        %s216 = scalar_lea.sflag [#allocation3], %s215
        %s217 = sand.u32 %s48, 1
        %s218 = smul.addr %s217, 128
        %s219 = scalar_lea.vmem [#allocation2], %s218
        %p220 = pneg %p61
        %p221 = pneg %p58
        %p222 = pneg %p82
        %p223 = pneg %p79
        %p224 = pneg %p112
        %p225 = pneg %p109
        %s226 = sand.u32 %s99, 1
        %s227 = sand.u32 %s99, 1
        %s228 = smul.addr %s227, 128
        %s229 = scalar_lea.vmem [#allocation6], %s228
        %s230 = smul.u32 8, %s24
        %s231 = smul.u32 4, %s24
        %v233 = vld [vmem:[%s206] sm:$0xff]
        %v234 = vld [vmem:[%s206 + $0x8] sm:$0xff]
        %v235 = vpack.c.bf16 %v234, %v233
        %v236 = vunpack.c.l.bf16 %v235
        %v237 = vunpack.c.h.bf16 %v235
        %v238 = vsub.f32 %v233, %v236
        %v239 = vsub.f32 %v234, %v237
        %v240 = vpack.c.bf16 %v239, %v238
        %v241 = vunpack.c.l.bf16 %v240
        %v242 = vunpack.c.h.bf16 %v240
        %v243 = vsub.f32 %v238, %v241
        %v244 = vsub.f32 %v239, %v242
        %v245 = vpack.c.bf16 %v244, %v243
        %v246 = vld [vmem:[#allocation4] sm:$0xf]
        %v247 = vld [vmem:[#allocation4 + $0x4] sm:$0xf]
        %v250 = vunpack.c.l.b16 %v246
        %v251 = vunpack.c.l.b16 %v247
        %v252 = vpack.c.b16 %v251, %v250
        %vm254 = vcmask 130048
        %v256 = vsel %vm254, %v240, 0
        %258 = vmatprep.subr.bf16.mxu0 0
        %259 = vmatpush1.bf16.msra.mxu0 %v252
        %260 = vmatprep.subr.bf16.mxu0 0
        %261 = vmatpush1.bf16.msra.mxu0 0
        %262 = vmatprep.subr.bf16.mxu0 0
        %263 = vmatpush1.bf16.msra.mxu0 0
        %264 = vmatprep.subr.bf16.mxu0 0
        %265 = vmatpush1.bf16.msra.mxu0 0
        %266 = vmatprep.subr.bf16.mxu0 0
        %267 = vmatpush1.bf16.msra.mxu0 0
        %268 = vmatprep.subr.bf16.mxu0 0
        %269 = vmatpush1.bf16.msra.mxu0 0
        %270 = vmatprep.subr.bf16.mxu0 0
        %271 = vmatpush1.bf16.msra.mxu0 0
        %272 = vmatprep.subr.bf16.mxu0 0
        %273 = vmatpush1.bf16.msra.mxu0 0
        %274 = vmatprep.subr.bf16.mxu0 0
        %275 = vmatpush1.bf16.msra.mxu0 0
        %276 = vmatprep.subr.bf16.mxu0 0
        %277 = vmatpush1.bf16.msra.mxu0 0
        %278 = vmatprep.subr.bf16.mxu0 0
        %279 = vmatpush1.bf16.msra.mxu0 0
        %280 = vmatprep.subr.bf16.mxu0 0
        %281 = vmatpush1.bf16.msra.mxu0 0
        %282 = vmatprep.subr.bf16.mxu0 0
        %283 = vmatpush1.bf16.msra.mxu0 0
        %284 = vmatprep.subr.bf16.mxu0 0
        %285 = vmatpush1.bf16.msra.mxu0 0
        %286 = vmatprep.subr.bf16.mxu0 0
        %287 = vmatpush1.bf16.msra.mxu0 0
        %288 = vmatprep.subr.bf16.mxu0 0
        %289 = vmatpush1.bf16.msra.mxu0 0
        %290 = vmatprep.mubr.bf16.mxu0 0
        %291 = vmatmul.mubr.bf16.gmra.mrb[0].mxu0 %v256
        %v292 = vpop.f32.mrb[0].mxu0
        %v293 = vadd.f32 0.0, %v292
        %v294 = vpop.f32.mrb[0].mxu0
        %v295 = vpop.f32.mrb[0].mxu0
        %v296 = vadd.f32 0.0, %v295
        %v297 = vpop.f32.mrb[0].mxu0
        %298 = vdwg.mxu0
        %v300 = vsel %vm254, %v235, 0
        %302 = vmatprep.subr.bf16.mxu0 0
        %303 = vmatpush1.bf16.msra.mxu0 %v252
        %304 = vmatprep.subr.bf16.mxu0 0
        %305 = vmatpush1.bf16.msra.mxu0 0
        %306 = vmatprep.subr.bf16.mxu0 0
        %307 = vmatpush1.bf16.msra.mxu0 0
        %308 = vmatprep.subr.bf16.mxu0 0
        %309 = vmatpush1.bf16.msra.mxu0 0
        %310 = vmatprep.subr.bf16.mxu0 0
        %311 = vmatpush1.bf16.msra.mxu0 0
        %312 = vmatprep.subr.bf16.mxu0 0
        %313 = vmatpush1.bf16.msra.mxu0 0
        %314 = vmatprep.subr.bf16.mxu0 0
        %315 = vmatpush1.bf16.msra.mxu0 0
        %316 = vmatprep.subr.bf16.mxu0 0
        %317 = vmatpush1.bf16.msra.mxu0 0
        %318 = vmatprep.subr.bf16.mxu0 0
        %319 = vmatpush1.bf16.msra.mxu0 0
        %320 = vmatprep.subr.bf16.mxu0 0
        %321 = vmatpush1.bf16.msra.mxu0 0
        %322 = vmatprep.subr.bf16.mxu0 0
        %323 = vmatpush1.bf16.msra.mxu0 0
        %324 = vmatprep.subr.bf16.mxu0 0
        %325 = vmatpush1.bf16.msra.mxu0 0
        %326 = vmatprep.subr.bf16.mxu0 0
        %327 = vmatpush1.bf16.msra.mxu0 0
        %328 = vmatprep.subr.bf16.mxu0 0
        %329 = vmatpush1.bf16.msra.mxu0 0
        %330 = vmatprep.subr.bf16.mxu0 0
        %331 = vmatpush1.bf16.msra.mxu0 0
        %332 = vmatprep.subr.bf16.mxu0 0
        %333 = vmatpush1.bf16.msra.mxu0 0
        %334 = vmatprep.mubr.bf16.mxu0 0
        %335 = vmatmul.mubr.bf16.gmra.mrb[0].mxu0 %v300
        %v336 = vpop.f32.mrb[0].mxu0
        %v337 = vadd.f32 %v293, %v336
        %v338 = vpop.f32.mrb[0].mxu0
        %v339 = vpop.f32.mrb[0].mxu0
        %v340 = vadd.f32 %v296, %v339
        %v341 = vpop.f32.mrb[0].mxu0
        %342 = vdwg.mxu0
        %v344 = vsel %vm254, %v245, 0
        %346 = vmatprep.subr.bf16.mxu0 0
        %347 = vmatpush1.bf16.msra.mxu0 %v252
        %348 = vmatprep.subr.bf16.mxu0 0
        %349 = vmatpush1.bf16.msra.mxu0 0
        %350 = vmatprep.subr.bf16.mxu0 0
        %351 = vmatpush1.bf16.msra.mxu0 0
        %352 = vmatprep.subr.bf16.mxu0 0
        %353 = vmatpush1.bf16.msra.mxu0 0
        %354 = vmatprep.subr.bf16.mxu0 0
        %355 = vmatpush1.bf16.msra.mxu0 0
        %356 = vmatprep.subr.bf16.mxu0 0
        %357 = vmatpush1.bf16.msra.mxu0 0
        %358 = vmatprep.subr.bf16.mxu0 0
        %359 = vmatpush1.bf16.msra.mxu0 0
        %360 = vmatprep.subr.bf16.mxu0 0
        %361 = vmatpush1.bf16.msra.mxu0 0
        %362 = vmatprep.subr.bf16.mxu0 0
        %363 = vmatpush1.bf16.msra.mxu0 0
        %364 = vmatprep.subr.bf16.mxu0 0
        %365 = vmatpush1.bf16.msra.mxu0 0
        %366 = vmatprep.subr.bf16.mxu0 0
        %367 = vmatpush1.bf16.msra.mxu0 0
        %368 = vmatprep.subr.bf16.mxu0 0
        %369 = vmatpush1.bf16.msra.mxu0 0
        %370 = vmatprep.subr.bf16.mxu0 0
        %371 = vmatpush1.bf16.msra.mxu0 0
        %372 = vmatprep.subr.bf16.mxu0 0
        %373 = vmatpush1.bf16.msra.mxu0 0
        %374 = vmatprep.subr.bf16.mxu0 0
        %375 = vmatpush1.bf16.msra.mxu0 0
        %376 = vmatprep.subr.bf16.mxu0 0
        %377 = vmatpush1.bf16.msra.mxu0 0
        %378 = vmatprep.mubr.bf16.mxu0 0
        %379 = vmatmul.mubr.bf16.gmra.mrb[0].mxu0 %v344
        %v380 = vpop.f32.mrb[0].mxu0
        %v381 = vadd.f32 0.0, %v380
        %v382 = vpop.f32.mrb[0].mxu0
        %v383 = vpop.f32.mrb[0].mxu0
        %v384 = vadd.f32 0.0, %v383
        %v385 = vpop.f32.mrb[0].mxu0
        %386 = vdwg.mxu0
        %v387 = vadd.f32 %v337, %v381
        %v388 = vadd.f32 %v340, %v384
        %s389 = scalar_lea.vmem [#allocation4], 8
        %v390 = vld [vmem:[%s389] sm:$0xf]
        %v391 = vld [vmem:[%s389 + $0x4] sm:$0xf]
        %v394 = vunpack.c.l.b16 %v390
        %v395 = vunpack.c.l.b16 %v391
        %v396 = vpack.c.b16 %v395, %v394
        %398 = vmatprep.subr.bf16.mxu0 0
        %399 = vmatpush1.bf16.msra.mxu0 %v396
        %400 = vmatprep.subr.bf16.mxu0 0
        %401 = vmatpush1.bf16.msra.mxu0 0
        %402 = vmatprep.subr.bf16.mxu0 0
        %403 = vmatpush1.bf16.msra.mxu0 0
        %404 = vmatprep.subr.bf16.mxu0 0
        %405 = vmatpush1.bf16.msra.mxu0 0
        %406 = vmatprep.subr.bf16.mxu0 0
        %407 = vmatpush1.bf16.msra.mxu0 0
        %408 = vmatprep.subr.bf16.mxu0 0
        %409 = vmatpush1.bf16.msra.mxu0 0
        %410 = vmatprep.subr.bf16.mxu0 0
        %411 = vmatpush1.bf16.msra.mxu0 0
        %412 = vmatprep.subr.bf16.mxu0 0
        %413 = vmatpush1.bf16.msra.mxu0 0
        %414 = vmatprep.subr.bf16.mxu0 0
        %415 = vmatpush1.bf16.msra.mxu0 0
        %416 = vmatprep.subr.bf16.mxu0 0
        %417 = vmatpush1.bf16.msra.mxu0 0
        %418 = vmatprep.subr.bf16.mxu0 0
        %419 = vmatpush1.bf16.msra.mxu0 0
        %420 = vmatprep.subr.bf16.mxu0 0
        %421 = vmatpush1.bf16.msra.mxu0 0
        %422 = vmatprep.subr.bf16.mxu0 0
        %423 = vmatpush1.bf16.msra.mxu0 0
        %424 = vmatprep.subr.bf16.mxu0 0
        %425 = vmatpush1.bf16.msra.mxu0 0
        %426 = vmatprep.subr.bf16.mxu0 0
        %427 = vmatpush1.bf16.msra.mxu0 0
        %428 = vmatprep.subr.bf16.mxu0 0
        %429 = vmatpush1.bf16.msra.mxu0 0
        %430 = vmatprep.mubr.bf16.mxu0 0
        %431 = vmatmul.mubr.bf16.gmra.mrb[0].mxu0 %v300
        %v432 = vpop.f32.mrb[0].mxu0
        %v433 = vadd.f32 0.0, %v432
        %v434 = vpop.f32.mrb[0].mxu0
        %v435 = vpop.f32.mrb[0].mxu0
        %v436 = vadd.f32 0.0, %v435
        %v437 = vpop.f32.mrb[0].mxu0
        %438 = vdwg.mxu0
        %v439 = vadd.f32 %v387, %v433
        %v440 = vadd.f32 %v388, %v436
        %441 = vmatprep.subr.bf16.mxu0 0
        %442 = vmatpush1.bf16.msra.mxu0 %v396
        %443 = vmatprep.subr.bf16.mxu0 0
        %444 = vmatpush1.bf16.msra.mxu0 0
        %445 = vmatprep.subr.bf16.mxu0 0
        %446 = vmatpush1.bf16.msra.mxu0 0
        %447 = vmatprep.subr.bf16.mxu0 0
        %448 = vmatpush1.bf16.msra.mxu0 0
        %449 = vmatprep.subr.bf16.mxu0 0
        %450 = vmatpush1.bf16.msra.mxu0 0
        %451 = vmatprep.subr.bf16.mxu0 0
        %452 = vmatpush1.bf16.msra.mxu0 0
        %453 = vmatprep.subr.bf16.mxu0 0
        %454 = vmatpush1.bf16.msra.mxu0 0
        %455 = vmatprep.subr.bf16.mxu0 0
        %456 = vmatpush1.bf16.msra.mxu0 0
        %457 = vmatprep.subr.bf16.mxu0 0
        %458 = vmatpush1.bf16.msra.mxu0 0
        %459 = vmatprep.subr.bf16.mxu0 0
        %460 = vmatpush1.bf16.msra.mxu0 0
        %461 = vmatprep.subr.bf16.mxu0 0
        %462 = vmatpush1.bf16.msra.mxu0 0
        %463 = vmatprep.subr.bf16.mxu0 0
        %464 = vmatpush1.bf16.msra.mxu0 0
        %465 = vmatprep.subr.bf16.mxu0 0
        %466 = vmatpush1.bf16.msra.mxu0 0
        %467 = vmatprep.subr.bf16.mxu0 0
        %468 = vmatpush1.bf16.msra.mxu0 0
        %469 = vmatprep.subr.bf16.mxu0 0
        %470 = vmatpush1.bf16.msra.mxu0 0
        %471 = vmatprep.subr.bf16.mxu0 0
        %472 = vmatpush1.bf16.msra.mxu0 0
        %473 = vmatprep.mubr.bf16.mxu0 0
        %474 = vmatmul.mubr.bf16.gmra.mrb[0].mxu0 %v256
        %v475 = vpop.f32.mrb[0].mxu0
        %v476 = vadd.f32 0.0, %v475
        %v477 = vpop.f32.mrb[0].mxu0
        %v478 = vpop.f32.mrb[0].mxu0
        %v479 = vadd.f32 0.0, %v478
        %v480 = vpop.f32.mrb[0].mxu0
        %481 = vdwg.mxu0
        %v482 = vadd.f32 %v439, %v476
        %v483 = vadd.f32 %v440, %v479
        %484 = vmatprep.subr.bf16.mxu0 0
        %485 = vmatpush1.bf16.msra.mxu0 %v396
        %486 = vmatprep.subr.bf16.mxu0 0
        %487 = vmatpush1.bf16.msra.mxu0 0
        %488 = vmatprep.subr.bf16.mxu0 0
        %489 = vmatpush1.bf16.msra.mxu0 0
        %490 = vmatprep.subr.bf16.mxu0 0
        %491 = vmatpush1.bf16.msra.mxu0 0
        %492 = vmatprep.subr.bf16.mxu0 0
        %493 = vmatpush1.bf16.msra.mxu0 0
        %494 = vmatprep.subr.bf16.mxu0 0
        %495 = vmatpush1.bf16.msra.mxu0 0
        %496 = vmatprep.subr.bf16.mxu0 0
        %497 = vmatpush1.bf16.msra.mxu0 0
        %498 = vmatprep.subr.bf16.mxu0 0
        %499 = vmatpush1.bf16.msra.mxu0 0
        %500 = vmatprep.subr.bf16.mxu0 0
        %501 = vmatpush1.bf16.msra.mxu0 0
        %502 = vmatprep.subr.bf16.mxu0 0
        %503 = vmatpush1.bf16.msra.mxu0 0
        %504 = vmatprep.subr.bf16.mxu0 0
        %505 = vmatpush1.bf16.msra.mxu0 0
        %506 = vmatprep.subr.bf16.mxu0 0
        %507 = vmatpush1.bf16.msra.mxu0 0
        %508 = vmatprep.subr.bf16.mxu0 0
        %509 = vmatpush1.bf16.msra.mxu0 0
        %510 = vmatprep.subr.bf16.mxu0 0
        %511 = vmatpush1.bf16.msra.mxu0 0
        %512 = vmatprep.subr.bf16.mxu0 0
        %513 = vmatpush1.bf16.msra.mxu0 0
        %514 = vmatprep.subr.bf16.mxu0 0
        %515 = vmatpush1.bf16.msra.mxu0 0
        %516 = vmatprep.mubr.bf16.mxu0 0
        %517 = vmatmul.mubr.bf16.gmra.mrb[0].mxu0 %v344
        %v518 = vpop.f32.mrb[0].mxu0
        %v519 = vadd.f32 0.0, %v518
        %v520 = vpop.f32.mrb[0].mxu0
        %v521 = vpop.f32.mrb[0].mxu0
        %v522 = vadd.f32 0.0, %v521
        %v523 = vpop.f32.mrb[0].mxu0
        %524 = vdwg.mxu0
        %v525 = vadd.f32 %v482, %v519
        %v526 = vadd.f32 %v483, %v522
        %s527 = scalar_lea.vmem [#allocation4], 16
        %v528 = vld [vmem:[%s527] sm:$0xf]
        %v529 = vld [vmem:[%s527 + $0x4] sm:$0xf]
        %v532 = vunpack.c.l.b16 %v528
        %v533 = vunpack.c.l.b16 %v529
        %v534 = vpack.c.b16 %v533, %v532
        %536 = vmatprep.subr.bf16.mxu0 0
        %537 = vmatpush1.bf16.msra.mxu0 %v534
        %538 = vmatprep.subr.bf16.mxu0 0
        %539 = vmatpush1.bf16.msra.mxu0 0
        %540 = vmatprep.subr.bf16.mxu0 0
        %541 = vmatpush1.bf16.msra.mxu0 0
        %542 = vmatprep.subr.bf16.mxu0 0
        %543 = vmatpush1.bf16.msra.mxu0 0
        %544 = vmatprep.subr.bf16.mxu0 0
        %545 = vmatpush1.bf16.msra.mxu0 0
        %546 = vmatprep.subr.bf16.mxu0 0
        %547 = vmatpush1.bf16.msra.mxu0 0
        %548 = vmatprep.subr.bf16.mxu0 0
        %549 = vmatpush1.bf16.msra.mxu0 0
        %550 = vmatprep.subr.bf16.mxu0 0
        %551 = vmatpush1.bf16.msra.mxu0 0
        %552 = vmatprep.subr.bf16.mxu0 0
        %553 = vmatpush1.bf16.msra.mxu0 0
        %554 = vmatprep.subr.bf16.mxu0 0
        %555 = vmatpush1.bf16.msra.mxu0 0
        %556 = vmatprep.subr.bf16.mxu0 0
        %557 = vmatpush1.bf16.msra.mxu0 0
        %558 = vmatprep.subr.bf16.mxu0 0
        %559 = vmatpush1.bf16.msra.mxu0 0
        %560 = vmatprep.subr.bf16.mxu0 0
        %561 = vmatpush1.bf16.msra.mxu0 0
        %562 = vmatprep.subr.bf16.mxu0 0
        %563 = vmatpush1.bf16.msra.mxu0 0
        %564 = vmatprep.subr.bf16.mxu0 0
        %565 = vmatpush1.bf16.msra.mxu0 0
        %566 = vmatprep.subr.bf16.mxu0 0
        %567 = vmatpush1.bf16.msra.mxu0 0
        %568 = vmatprep.mubr.bf16.mxu0 0
        %569 = vmatmul.mubr.bf16.gmra.mrb[0].mxu0 %v300
        %v570 = vpop.f32.mrb[0].mxu0
        %v571 = vadd.f32 0.0, %v570
        %v572 = vpop.f32.mrb[0].mxu0
        %v573 = vpop.f32.mrb[0].mxu0
        %v574 = vadd.f32 0.0, %v573
        %v575 = vpop.f32.mrb[0].mxu0
        %576 = vdwg.mxu0
        %v577 = vadd.f32 %v525, %v571
        %v578 = vadd.f32 %v526, %v574
        %579 = vmatprep.subr.bf16.mxu0 0
        %580 = vmatpush1.bf16.msra.mxu0 %v534
        %581 = vmatprep.subr.bf16.mxu0 0
        %582 = vmatpush1.bf16.msra.mxu0 0
        %583 = vmatprep.subr.bf16.mxu0 0
        %584 = vmatpush1.bf16.msra.mxu0 0
        %585 = vmatprep.subr.bf16.mxu0 0
        %586 = vmatpush1.bf16.msra.mxu0 0
        %587 = vmatprep.subr.bf16.mxu0 0
        %588 = vmatpush1.bf16.msra.mxu0 0
        %589 = vmatprep.subr.bf16.mxu0 0
        %590 = vmatpush1.bf16.msra.mxu0 0
        %591 = vmatprep.subr.bf16.mxu0 0
        %592 = vmatpush1.bf16.msra.mxu0 0
        %593 = vmatprep.subr.bf16.mxu0 0
        %594 = vmatpush1.bf16.msra.mxu0 0
        %595 = vmatprep.subr.bf16.mxu0 0
        %596 = vmatpush1.bf16.msra.mxu0 0
        %597 = vmatprep.subr.bf16.mxu0 0
        %598 = vmatpush1.bf16.msra.mxu0 0
        %599 = vmatprep.subr.bf16.mxu0 0
        %600 = vmatpush1.bf16.msra.mxu0 0
        %601 = vmatprep.subr.bf16.mxu0 0
        %602 = vmatpush1.bf16.msra.mxu0 0
        %603 = vmatprep.subr.bf16.mxu0 0
        %604 = vmatpush1.bf16.msra.mxu0 0
        %605 = vmatprep.subr.bf16.mxu0 0
        %606 = vmatpush1.bf16.msra.mxu0 0
        %607 = vmatprep.subr.bf16.mxu0 0
        %608 = vmatpush1.bf16.msra.mxu0 0
        %609 = vmatprep.subr.bf16.mxu0 0
        %610 = vmatpush1.bf16.msra.mxu0 0
        %611 = vmatprep.mubr.bf16.mxu0 0
        %612 = vmatmul.mubr.bf16.gmra.mrb[0].mxu0 %v256
        %v613 = vpop.f32.mrb[0].mxu0
        %v614 = vadd.f32 0.0, %v613
        %v615 = vpop.f32.mrb[0].mxu0
        %v616 = vpop.f32.mrb[0].mxu0
        %v617 = vadd.f32 0.0, %v616
        %v618 = vpop.f32.mrb[0].mxu0
        %619 = vdwg.mxu0
        %v620 = vadd.f32 %v577, %v614
        %v621 = vadd.f32 %v578, %v617
        %622 = vmatprep.subr.bf16.mxu0 0
        %623 = vmatpush1.bf16.msra.mxu0 %v534
        %624 = vmatprep.subr.bf16.mxu0 0
        %625 = vmatpush1.bf16.msra.mxu0 0
        %626 = vmatprep.subr.bf16.mxu0 0
        %627 = vmatpush1.bf16.msra.mxu0 0
        %628 = vmatprep.subr.bf16.mxu0 0
        %629 = vmatpush1.bf16.msra.mxu0 0
        %630 = vmatprep.subr.bf16.mxu0 0
        %631 = vmatpush1.bf16.msra.mxu0 0
        %632 = vmatprep.subr.bf16.mxu0 0
        %633 = vmatpush1.bf16.msra.mxu0 0
        %634 = vmatprep.subr.bf16.mxu0 0
        %635 = vmatpush1.bf16.msra.mxu0 0
        %636 = vmatprep.subr.bf16.mxu0 0
        %637 = vmatpush1.bf16.msra.mxu0 0
        %638 = vmatprep.subr.bf16.mxu0 0
        %639 = vmatpush1.bf16.msra.mxu0 0
        %640 = vmatprep.subr.bf16.mxu0 0
        %641 = vmatpush1.bf16.msra.mxu0 0
        %642 = vmatprep.subr.bf16.mxu0 0
        %643 = vmatpush1.bf16.msra.mxu0 0
        %644 = vmatprep.subr.bf16.mxu0 0
        %645 = vmatpush1.bf16.msra.mxu0 0
        %646 = vmatprep.subr.bf16.mxu0 0
        %647 = vmatpush1.bf16.msra.mxu0 0
        %648 = vmatprep.subr.bf16.mxu0 0
        %649 = vmatpush1.bf16.msra.mxu0 0
        %650 = vmatprep.subr.bf16.mxu0 0
        %651 = vmatpush1.bf16.msra.mxu0 0
        %652 = vmatprep.subr.bf16.mxu0 0
        %653 = vmatpush1.bf16.msra.mxu0 0
        %654 = vmatprep.mubr.bf16.mxu0 0
        %655 = vmatmul.mubr.bf16.gmra.mrb[0].mxu0 %v344
        %v656 = vpop.f32.mrb[0].mxu0
        %v657 = vadd.f32 0.0, %v656
        %v658 = vpop.f32.mrb[0].mxu0
        %v659 = vpop.f32.mrb[0].mxu0
        %v660 = vadd.f32 0.0, %v659
        %v661 = vpop.f32.mrb[0].mxu0
        %662 = vdwg.mxu0
        %v663 = vadd.f32 %v620, %v657
        %v664 = vadd.f32 %v621, %v660
        %s665 = scalar_lea.vmem [#allocation4], 24
        %v666 = vld [vmem:[%s665] sm:$0xf]
        %v667 = vld [vmem:[%s665 + $0x4] sm:$0xf]
        %v670 = vunpack.c.l.b16 %v666
        %v671 = vunpack.c.l.b16 %v667
        %v672 = vpack.c.b16 %v671, %v670
        %674 = vmatprep.subr.bf16.mxu0 0
        %675 = vmatpush1.bf16.msra.mxu0 %v672
        %676 = vmatprep.subr.bf16.mxu0 0
        %677 = vmatpush1.bf16.msra.mxu0 0
        %678 = vmatprep.subr.bf16.mxu0 0
        %679 = vmatpush1.bf16.msra.mxu0 0
        %680 = vmatprep.subr.bf16.mxu0 0
        %681 = vmatpush1.bf16.msra.mxu0 0
        %682 = vmatprep.subr.bf16.mxu0 0
        %683 = vmatpush1.bf16.msra.mxu0 0
        %684 = vmatprep.subr.bf16.mxu0 0
        %685 = vmatpush1.bf16.msra.mxu0 0
        %686 = vmatprep.subr.bf16.mxu0 0
        %687 = vmatpush1.bf16.msra.mxu0 0
        %688 = vmatprep.subr.bf16.mxu0 0
        %689 = vmatpush1.bf16.msra.mxu0 0
        %690 = vmatprep.subr.bf16.mxu0 0
        %691 = vmatpush1.bf16.msra.mxu0 0
        %692 = vmatprep.subr.bf16.mxu0 0
        %693 = vmatpush1.bf16.msra.mxu0 0
        %694 = vmatprep.subr.bf16.mxu0 0
        %695 = vmatpush1.bf16.msra.mxu0 0
        %696 = vmatprep.subr.bf16.mxu0 0
        %697 = vmatpush1.bf16.msra.mxu0 0
        %698 = vmatprep.subr.bf16.mxu0 0
        %699 = vmatpush1.bf16.msra.mxu0 0
        %700 = vmatprep.subr.bf16.mxu0 0
        %701 = vmatpush1.bf16.msra.mxu0 0
        %702 = vmatprep.subr.bf16.mxu0 0
        %703 = vmatpush1.bf16.msra.mxu0 0
        %704 = vmatprep.subr.bf16.mxu0 0
        %705 = vmatpush1.bf16.msra.mxu0 0
        %706 = vmatprep.mubr.bf16.mxu0 0
        %707 = vmatmul.mubr.bf16.gmra.mrb[0].mxu0 %v300
        %v708 = vpop.f32.mrb[0].mxu0
        %v709 = vadd.f32 0.0, %v708
        %v710 = vpop.f32.mrb[0].mxu0
        %v711 = vpop.f32.mrb[0].mxu0
        %v712 = vadd.f32 0.0, %v711
        %v713 = vpop.f32.mrb[0].mxu0
        %714 = vdwg.mxu0
        %v715 = vadd.f32 %v663, %v709
        %v716 = vadd.f32 %v664, %v712
        %717 = vmatprep.subr.bf16.mxu0 0
        %718 = vmatpush1.bf16.msra.mxu0 %v672
        %719 = vmatprep.subr.bf16.mxu0 0
        %720 = vmatpush1.bf16.msra.mxu0 0
        %721 = vmatprep.subr.bf16.mxu0 0
        %722 = vmatpush1.bf16.msra.mxu0 0
        %723 = vmatprep.subr.bf16.mxu0 0
        %724 = vmatpush1.bf16.msra.mxu0 0
        %725 = vmatprep.subr.bf16.mxu0 0
        %726 = vmatpush1.bf16.msra.mxu0 0
        %727 = vmatprep.subr.bf16.mxu0 0
        %728 = vmatpush1.bf16.msra.mxu0 0
        %729 = vmatprep.subr.bf16.mxu0 0
        %730 = vmatpush1.bf16.msra.mxu0 0
        %731 = vmatprep.subr.bf16.mxu0 0
        %732 = vmatpush1.bf16.msra.mxu0 0
        %733 = vmatprep.subr.bf16.mxu0 0
        %734 = vmatpush1.bf16.msra.mxu0 0
        %735 = vmatprep.subr.bf16.mxu0 0
        %736 = vmatpush1.bf16.msra.mxu0 0
        %737 = vmatprep.subr.bf16.mxu0 0
        %738 = vmatpush1.bf16.msra.mxu0 0
        %739 = vmatprep.subr.bf16.mxu0 0
        %740 = vmatpush1.bf16.msra.mxu0 0
        %741 = vmatprep.subr.bf16.mxu0 0
        %742 = vmatpush1.bf16.msra.mxu0 0
        %743 = vmatprep.subr.bf16.mxu0 0
        %744 = vmatpush1.bf16.msra.mxu0 0
        %745 = vmatprep.subr.bf16.mxu0 0
        %746 = vmatpush1.bf16.msra.mxu0 0
        %747 = vmatprep.subr.bf16.mxu0 0
        %748 = vmatpush1.bf16.msra.mxu0 0
        %749 = vmatprep.mubr.bf16.mxu0 0
        %750 = vmatmul.mubr.bf16.gmra.mrb[0].mxu0 %v256
        %v751 = vpop.f32.mrb[0].mxu0
        %v752 = vadd.f32 0.0, %v751
        %v753 = vpop.f32.mrb[0].mxu0
        %v754 = vpop.f32.mrb[0].mxu0
        %v755 = vadd.f32 0.0, %v754
        %v756 = vpop.f32.mrb[0].mxu0
        %757 = vdwg.mxu0
        %v758 = vadd.f32 %v715, %v752
        %v759 = vadd.f32 %v716, %v755
        %760 = vmatprep.subr.bf16.mxu0 0
        %761 = vmatpush1.bf16.msra.mxu0 %v672
        %762 = vmatprep.subr.bf16.mxu0 0
        %763 = vmatpush1.bf16.msra.mxu0 0
        %764 = vmatprep.subr.bf16.mxu0 0
        %765 = vmatpush1.bf16.msra.mxu0 0
        %766 = vmatprep.subr.bf16.mxu0 0
        %767 = vmatpush1.bf16.msra.mxu0 0
        %768 = vmatprep.subr.bf16.mxu0 0
        %769 = vmatpush1.bf16.msra.mxu0 0
        %770 = vmatprep.subr.bf16.mxu0 0
        %771 = vmatpush1.bf16.msra.mxu0 0
        %772 = vmatprep.subr.bf16.mxu0 0
        %773 = vmatpush1.bf16.msra.mxu0 0
        %774 = vmatprep.subr.bf16.mxu0 0
        %775 = vmatpush1.bf16.msra.mxu0 0
        %776 = vmatprep.subr.bf16.mxu0 0
        %777 = vmatpush1.bf16.msra.mxu0 0
        %778 = vmatprep.subr.bf16.mxu0 0
        %779 = vmatpush1.bf16.msra.mxu0 0
        %780 = vmatprep.subr.bf16.mxu0 0
        %781 = vmatpush1.bf16.msra.mxu0 0
        %782 = vmatprep.subr.bf16.mxu0 0
        %783 = vmatpush1.bf16.msra.mxu0 0
        %784 = vmatprep.subr.bf16.mxu0 0
        %785 = vmatpush1.bf16.msra.mxu0 0
        %786 = vmatprep.subr.bf16.mxu0 0
        %787 = vmatpush1.bf16.msra.mxu0 0
        %788 = vmatprep.subr.bf16.mxu0 0
        %789 = vmatpush1.bf16.msra.mxu0 0
        %790 = vmatprep.subr.bf16.mxu0 0
        %791 = vmatpush1.bf16.msra.mxu0 0
        %792 = vmatprep.mubr.bf16.mxu0 0
        %793 = vmatmul.mubr.bf16.gmra.mrb[0].mxu0 %v344
        %v794 = vpop.f32.mrb[0].mxu0
        %v795 = vadd.f32 0.0, %v794
        %v796 = vpop.f32.mrb[0].mxu0
        %v797 = vpop.f32.mrb[0].mxu0
        %v798 = vadd.f32 0.0, %v797
        %v799 = vpop.f32.mrb[0].mxu0
        %800 = vdwg.mxu0
        %v801 = vadd.f32 %v758, %v795
        %v802 = vadd.f32 %v759, %v798
        %vm803 = vcmask 523264
        %804 = vst.msk [vmem:[%s229] sm:$0xff] %vm803, %v801
        %805 = vst.msk [vmem:[%s229 + $0x8] sm:$0xff] %vm803, %v802
        %s806 = scalar_lea.vmem %s206, 16 [#allocation2]
        %v807 = vld [vmem:[%s806] sm:$0xff]
        %v808 = vld [vmem:[%s806 + $0x8] sm:$0xff]
        %v809 = vpack.c.bf16 %v808, %v807
        %v810 = vunpack.c.l.bf16 %v809
        %v811 = vunpack.c.h.bf16 %v809
        %v812 = vsub.f32 %v807, %v810
        %v813 = vsub.f32 %v808, %v811
        %v814 = vpack.c.bf16 %v813, %v812
        %v815 = vunpack.c.l.bf16 %v814
        %v816 = vunpack.c.h.bf16 %v814
        %v817 = vsub.f32 %v812, %v815
        %v818 = vsub.f32 %v813, %v816
        %v819 = vpack.c.bf16 %v818, %v817
        %v820 = vld [vmem:[#allocation4] sm:$0xf]
        %v821 = vld [vmem:[#allocation4 + $0x4] sm:$0xf]
        %v824 = vunpack.c.l.b16 %v820
        %v825 = vunpack.c.l.b16 %v821
        %v826 = vpack.c.b16 %v825, %v824
        %v829 = vsel %vm254, %v814, 0
        %831 = vmatprep.subr.bf16.mxu0 0
        %832 = vmatpush1.bf16.msra.mxu0 %v826
        %833 = vmatprep.subr.bf16.mxu0 0
        %834 = vmatpush1.bf16.msra.mxu0 0
        %835 = vmatprep.subr.bf16.mxu0 0
        %836 = vmatpush1.bf16.msra.mxu0 0
        %837 = vmatprep.subr.bf16.mxu0 0
        %838 = vmatpush1.bf16.msra.mxu0 0
        %839 = vmatprep.subr.bf16.mxu0 0
        %840 = vmatpush1.bf16.msra.mxu0 0
        %841 = vmatprep.subr.bf16.mxu0 0
        %842 = vmatpush1.bf16.msra.mxu0 0
        %843 = vmatprep.subr.bf16.mxu0 0
        %844 = vmatpush1.bf16.msra.mxu0 0
        %845 = vmatprep.subr.bf16.mxu0 0
        %846 = vmatpush1.bf16.msra.mxu0 0
        %847 = vmatprep.subr.bf16.mxu0 0
        %848 = vmatpush1.bf16.msra.mxu0 0
        %849 = vmatprep.subr.bf16.mxu0 0
        %850 = vmatpush1.bf16.msra.mxu0 0
        %851 = vmatprep.subr.bf16.mxu0 0
        %852 = vmatpush1.bf16.msra.mxu0 0
        %853 = vmatprep.subr.bf16.mxu0 0
        %854 = vmatpush1.bf16.msra.mxu0 0
        %855 = vmatprep.subr.bf16.mxu0 0
        %856 = vmatpush1.bf16.msra.mxu0 0
        %857 = vmatprep.subr.bf16.mxu0 0
        %858 = vmatpush1.bf16.msra.mxu0 0
        %859 = vmatprep.subr.bf16.mxu0 0
        %860 = vmatpush1.bf16.msra.mxu0 0
        %861 = vmatprep.subr.bf16.mxu0 0
        %862 = vmatpush1.bf16.msra.mxu0 0
        %863 = vmatprep.mubr.bf16.mxu0 0
        %864 = vmatmul.mubr.bf16.gmra.mrb[0].mxu0 %v829
        %v865 = vpop.f32.mrb[0].mxu0
        %v866 = vadd.f32 0.0, %v865
        %v867 = vpop.f32.mrb[0].mxu0
        %v868 = vpop.f32.mrb[0].mxu0
        %v869 = vadd.f32 0.0, %v868
        %v870 = vpop.f32.mrb[0].mxu0
        %871 = vdwg.mxu0
        %v873 = vsel %vm254, %v809, 0
        %875 = vmatprep.subr.bf16.mxu0 0
        %876 = vmatpush1.bf16.msra.mxu0 %v826
        %877 = vmatprep.subr.bf16.mxu0 0
        %878 = vmatpush1.bf16.msra.mxu0 0
        %879 = vmatprep.subr.bf16.mxu0 0
        %880 = vmatpush1.bf16.msra.mxu0 0
        %881 = vmatprep.subr.bf16.mxu0 0
        %882 = vmatpush1.bf16.msra.mxu0 0
        %883 = vmatprep.subr.bf16.mxu0 0
        %884 = vmatpush1.bf16.msra.mxu0 0
        %885 = vmatprep.subr.bf16.mxu0 0
        %886 = vmatpush1.bf16.msra.mxu0 0
        %887 = vmatprep.subr.bf16.mxu0 0
        %888 = vmatpush1.bf16.msra.mxu0 0
        %889 = vmatprep.subr.bf16.mxu0 0
        %890 = vmatpush1.bf16.msra.mxu0 0
        %891 = vmatprep.subr.bf16.mxu0 0
        %892 = vmatpush1.bf16.msra.mxu0 0
        %893 = vmatprep.subr.bf16.mxu0 0
        %894 = vmatpush1.bf16.msra.mxu0 0
        %895 = vmatprep.subr.bf16.mxu0 0
        %896 = vmatpush1.bf16.msra.mxu0 0
        %897 = vmatprep.subr.bf16.mxu0 0
        %898 = vmatpush1.bf16.msra.mxu0 0
        %899 = vmatprep.subr.bf16.mxu0 0
        %900 = vmatpush1.bf16.msra.mxu0 0
        %901 = vmatprep.subr.bf16.mxu0 0
        %902 = vmatpush1.bf16.msra.mxu0 0
        %903 = vmatprep.subr.bf16.mxu0 0
        %904 = vmatpush1.bf16.msra.mxu0 0
        %905 = vmatprep.subr.bf16.mxu0 0
        %906 = vmatpush1.bf16.msra.mxu0 0
        %907 = vmatprep.mubr.bf16.mxu0 0
        %908 = vmatmul.mubr.bf16.gmra.mrb[0].mxu0 %v873
        %v909 = vpop.f32.mrb[0].mxu0
        %v910 = vadd.f32 %v866, %v909
        %v911 = vpop.f32.mrb[0].mxu0
        %v912 = vpop.f32.mrb[0].mxu0
        %v913 = vadd.f32 %v869, %v912
        %v914 = vpop.f32.mrb[0].mxu0
        %915 = vdwg.mxu0
        %v917 = vsel %vm254, %v819, 0
        %919 = vmatprep.subr.bf16.mxu0 0
        %920 = vmatpush1.bf16.msra.mxu0 %v826
        %921 = vmatprep.subr.bf16.mxu0 0
        %922 = vmatpush1.bf16.msra.mxu0 0
        %923 = vmatprep.subr.bf16.mxu0 0
        %924 = vmatpush1.bf16.msra.mxu0 0
        %925 = vmatprep.subr.bf16.mxu0 0
        %926 = vmatpush1.bf16.msra.mxu0 0
        %927 = vmatprep.subr.bf16.mxu0 0
        %928 = vmatpush1.bf16.msra.mxu0 0
        %929 = vmatprep.subr.bf16.mxu0 0
        %930 = vmatpush1.bf16.msra.mxu0 0
        %931 = vmatprep.subr.bf16.mxu0 0
        %932 = vmatpush1.bf16.msra.mxu0 0
        %933 = vmatprep.subr.bf16.mxu0 0
        %934 = vmatpush1.bf16.msra.mxu0 0
        %935 = vmatprep.subr.bf16.mxu0 0
        %936 = vmatpush1.bf16.msra.mxu0 0
        %937 = vmatprep.subr.bf16.mxu0 0
        %938 = vmatpush1.bf16.msra.mxu0 0
        %939 = vmatprep.subr.bf16.mxu0 0
        %940 = vmatpush1.bf16.msra.mxu0 0
        %941 = vmatprep.subr.bf16.mxu0 0
        %942 = vmatpush1.bf16.msra.mxu0 0
        %943 = vmatprep.subr.bf16.mxu0 0
        %944 = vmatpush1.bf16.msra.mxu0 0
        %945 = vmatprep.subr.bf16.mxu0 0
        %946 = vmatpush1.bf16.msra.mxu0 0
        %947 = vmatprep.subr.bf16.mxu0 0
        %948 = vmatpush1.bf16.msra.mxu0 0
        %949 = vmatprep.subr.bf16.mxu0 0
        %950 = vmatpush1.bf16.msra.mxu0 0
        %951 = vmatprep.mubr.bf16.mxu0 0
        %952 = vmatmul.mubr.bf16.gmra.mrb[0].mxu0 %v917
        %v953 = vpop.f32.mrb[0].mxu0
        %v954 = vadd.f32 0.0, %v953
        %v955 = vpop.f32.mrb[0].mxu0
        %v956 = vpop.f32.mrb[0].mxu0
        %v957 = vadd.f32 0.0, %v956
        %v958 = vpop.f32.mrb[0].mxu0
        %959 = vdwg.mxu0
        %v960 = vadd.f32 %v910, %v954
        %v961 = vadd.f32 %v913, %v957
        %v962 = vld [vmem:[%s389] sm:$0xf]
        %v963 = vld [vmem:[%s389 + $0x4] sm:$0xf]
        %v966 = vunpack.c.l.b16 %v962
        %v967 = vunpack.c.l.b16 %v963
        %v968 = vpack.c.b16 %v967, %v966
        %970 = vmatprep.subr.bf16.mxu0 0
        %971 = vmatpush1.bf16.msra.mxu0 %v968
        %972 = vmatprep.subr.bf16.mxu0 0
        %973 = vmatpush1.bf16.msra.mxu0 0
        %974 = vmatprep.subr.bf16.mxu0 0
        %975 = vmatpush1.bf16.msra.mxu0 0
        %976 = vmatprep.subr.bf16.mxu0 0
        %977 = vmatpush1.bf16.msra.mxu0 0
        %978 = vmatprep.subr.bf16.mxu0 0
        %979 = vmatpush1.bf16.msra.mxu0 0
        %980 = vmatprep.subr.bf16.mxu0 0
        %981 = vmatpush1.bf16.msra.mxu0 0
        %982 = vmatprep.subr.bf16.mxu0 0
        %983 = vmatpush1.bf16.msra.mxu0 0
        %984 = vmatprep.subr.bf16.mxu0 0
        %985 = vmatpush1.bf16.msra.mxu0 0
        %986 = vmatprep.subr.bf16.mxu0 0
        %987 = vmatpush1.bf16.msra.mxu0 0
        %988 = vmatprep.subr.bf16.mxu0 0
        %989 = vmatpush1.bf16.msra.mxu0 0
        %990 = vmatprep.subr.bf16.mxu0 0
        %991 = vmatpush1.bf16.msra.mxu0 0
        %992 = vmatprep.subr.bf16.mxu0 0
        %993 = vmatpush1.bf16.msra.mxu0 0
        %994 = vmatprep.subr.bf16.mxu0 0
        %995 = vmatpush1.bf16.msra.mxu0 0
        %996 = vmatprep.subr.bf16.mxu0 0
        %997 = vmatpush1.bf16.msra.mxu0 0
        %998 = vmatprep.subr.bf16.mxu0 0
        %999 = vmatpush1.bf16.msra.mxu0 0
        %1000 = vmatprep.subr.bf16.mxu0 0
        %1001 = vmatpush1.bf16.msra.mxu0 0
        %1002 = vmatprep.mubr.bf16.mxu0 0
        %1003 = vmatmul.mubr.bf16.gmra.mrb[0].mxu0 %v873
        %v1004 = vpop.f32.mrb[0].mxu0
        %v1005 = vadd.f32 0.0, %v1004
        %v1006 = vpop.f32.mrb[0].mxu0
        %v1007 = vpop.f32.mrb[0].mxu0
        %v1008 = vadd.f32 0.0, %v1007
        %v1009 = vpop.f32.mrb[0].mxu0
        %1010 = vdwg.mxu0
        %v1011 = vadd.f32 %v960, %v1005
        %v1012 = vadd.f32 %v961, %v1008
        %1013 = vmatprep.subr.bf16.mxu0 0
        %1014 = vmatpush1.bf16.msra.mxu0 %v968
        %1015 = vmatprep.subr.bf16.mxu0 0
        %1016 = vmatpush1.bf16.msra.mxu0 0
        %1017 = vmatprep.subr.bf16.mxu0 0
        %1018 = vmatpush1.bf16.msra.mxu0 0
        %1019 = vmatprep.subr.bf16.mxu0 0
        %1020 = vmatpush1.bf16.msra.mxu0 0
        %1021 = vmatprep.subr.bf16.mxu0 0
        %1022 = vmatpush1.bf16.msra.mxu0 0
        %1023 = vmatprep.subr.bf16.mxu0 0
        %1024 = vmatpush1.bf16.msra.mxu0 0
        %1025 = vmatprep.subr.bf16.mxu0 0
        %1026 = vmatpush1.bf16.msra.mxu0 0
        %1027 = vmatprep.subr.bf16.mxu0 0
        %1028 = vmatpush1.bf16.msra.mxu0 0
        %1029 = vmatprep.subr.bf16.mxu0 0
        %1030 = vmatpush1.bf16.msra.mxu0 0
        %1031 = vmatprep.subr.bf16.mxu0 0
        %1032 = vmatpush1.bf16.msra.mxu0 0
        %1033 = vmatprep.subr.bf16.mxu0 0
        %1034 = vmatpush1.bf16.msra.mxu0 0
        %1035 = vmatprep.subr.bf16.mxu0 0
        %1036 = vmatpush1.bf16.msra.mxu0 0
        %1037 = vmatprep.subr.bf16.mxu0 0
        %1038 = vmatpush1.bf16.msra.mxu0 0
        %1039 = vmatprep.subr.bf16.mxu0 0
        %1040 = vmatpush1.bf16.msra.mxu0 0
        %1041 = vmatprep.subr.bf16.mxu0 0
        %1042 = vmatpush1.bf16.msra.mxu0 0
        %1043 = vmatprep.subr.bf16.mxu0 0
        %1044 = vmatpush1.bf16.msra.mxu0 0
        %1045 = vmatprep.mubr.bf16.mxu0 0
        %1046 = vmatmul.mubr.bf16.gmra.mrb[0].mxu0 %v829
        %v1047 = vpop.f32.mrb[0].mxu0
        %v1048 = vadd.f32 0.0, %v1047
        %v1049 = vpop.f32.mrb[0].mxu0
        %v1050 = vpop.f32.mrb[0].mxu0
        %v1051 = vadd.f32 0.0, %v1050
        %v1052 = vpop.f32.mrb[0].mxu0
        %1053 = vdwg.mxu0
        %v1054 = vadd.f32 %v1011, %v1048
        %v1055 = vadd.f32 %v1012, %v1051
        %1056 = vmatprep.subr.bf16.mxu0 0
        %1057 = vmatpush1.bf16.msra.mxu0 %v968
        %1058 = vmatprep.subr.bf16.mxu0 0
        %1059 = vmatpush1.bf16.msra.mxu0 0
        %1060 = vmatprep.subr.bf16.mxu0 0
        %1061 = vmatpush1.bf16.msra.mxu0 0
        %1062 = vmatprep.subr.bf16.mxu0 0
        %1063 = vmatpush1.bf16.msra.mxu0 0
        %1064 = vmatprep.subr.bf16.mxu0 0
        %1065 = vmatpush1.bf16.msra.mxu0 0
        %1066 = vmatprep.subr.bf16.mxu0 0
        %1067 = vmatpush1.bf16.msra.mxu0 0
        %1068 = vmatprep.subr.bf16.mxu0 0
        %1069 = vmatpush1.bf16.msra.mxu0 0
        %1070 = vmatprep.subr.bf16.mxu0 0
        %1071 = vmatpush1.bf16.msra.mxu0 0
        %1072 = vmatprep.subr.bf16.mxu0 0
        %1073 = vmatpush1.bf16.msra.mxu0 0
        %1074 = vmatprep.subr.bf16.mxu0 0
        %1075 = vmatpush1.bf16.msra.mxu0 0
        %1076 = vmatprep.subr.bf16.mxu0 0
        %1077 = vmatpush1.bf16.msra.mxu0 0
        %1078 = vmatprep.subr.bf16.mxu0 0
        %1079 = vmatpush1.bf16.msra.mxu0 0
        %1080 = vmatprep.subr.bf16.mxu0 0
        %1081 = vmatpush1.bf16.msra.mxu0 0
        %1082 = vmatprep.subr.bf16.mxu0 0
        %1083 = vmatpush1.bf16.msra.mxu0 0
        %1084 = vmatprep.subr.bf16.mxu0 0
        %1085 = vmatpush1.bf16.msra.mxu0 0
        %1086 = vmatprep.subr.bf16.mxu0 0
        %1087 = vmatpush1.bf16.msra.mxu0 0
        %1088 = vmatprep.mubr.bf16.mxu0 0
        %1089 = vmatmul.mubr.bf16.gmra.mrb[0].mxu0 %v917
        %v1090 = vpop.f32.mrb[0].mxu0
        %v1091 = vadd.f32 0.0, %v1090
        %v1092 = vpop.f32.mrb[0].mxu0
        %v1093 = vpop.f32.mrb[0].mxu0
        %v1094 = vadd.f32 0.0, %v1093
        %v1095 = vpop.f32.mrb[0].mxu0
        %1096 = vdwg.mxu0
        %v1097 = vadd.f32 %v1054, %v1091
        %v1098 = vadd.f32 %v1055, %v1094
        %v1099 = vld [vmem:[%s527] sm:$0xf]
        %v1100 = vld [vmem:[%s527 + $0x4] sm:$0xf]
        %v1103 = vunpack.c.l.b16 %v1099
        %v1104 = vunpack.c.l.b16 %v1100
        %v1105 = vpack.c.b16 %v1104, %v1103
        %1107 = vmatprep.subr.bf16.mxu0 0
        %1108 = vmatpush1.bf16.msra.mxu0 %v1105
        %1109 = vmatprep.subr.bf16.mxu0 0
        %1110 = vmatpush1.bf16.msra.mxu0 0
        %1111 = vmatprep.subr.bf16.mxu0 0
        %1112 = vmatpush1.bf16.msra.mxu0 0
        %1113 = vmatprep.subr.bf16.mxu0 0
        %1114 = vmatpush1.bf16.msra.mxu0 0
        %1115 = vmatprep.subr.bf16.mxu0 0
        %1116 = vmatpush1.bf16.msra.mxu0 0
        %1117 = vmatprep.subr.bf16.mxu0 0
        %1118 = vmatpush1.bf16.msra.mxu0 0
        %1119 = vmatprep.subr.bf16.mxu0 0
        %1120 = vmatpush1.bf16.msra.mxu0 0
        %1121 = vmatprep.subr.bf16.mxu0 0
        %1122 = vmatpush1.bf16.msra.mxu0 0
        %1123 = vmatprep.subr.bf16.mxu0 0
        %1124 = vmatpush1.bf16.msra.mxu0 0
        %1125 = vmatprep.subr.bf16.mxu0 0
        %1126 = vmatpush1.bf16.msra.mxu0 0
        %1127 = vmatprep.subr.bf16.mxu0 0
        %1128 = vmatpush1.bf16.msra.mxu0 0
        %1129 = vmatprep.subr.bf16.mxu0 0
        %1130 = vmatpush1.bf16.msra.mxu0 0
        %1131 = vmatprep.subr.bf16.mxu0 0
        %1132 = vmatpush1.bf16.msra.mxu0 0
        %1133 = vmatprep.subr.bf16.mxu0 0
        %1134 = vmatpush1.bf16.msra.mxu0 0
        %1135 = vmatprep.subr.bf16.mxu0 0
        %1136 = vmatpush1.bf16.msra.mxu0 0
        %1137 = vmatprep.subr.bf16.mxu0 0
        %1138 = vmatpush1.bf16.msra.mxu0 0
        %1139 = vmatprep.mubr.bf16.mxu0 0
        %1140 = vmatmul.mubr.bf16.gmra.mrb[0].mxu0 %v873
        %v1141 = vpop.f32.mrb[0].mxu0
        %v1142 = vadd.f32 0.0, %v1141
        %v1143 = vpop.f32.mrb[0].mxu0
        %v1144 = vpop.f32.mrb[0].mxu0
        %v1145 = vadd.f32 0.0, %v1144
        %v1146 = vpop.f32.mrb[0].mxu0
        %1147 = vdwg.mxu0
        %v1148 = vadd.f32 %v1097, %v1142
        %v1149 = vadd.f32 %v1098, %v1145
        %1150 = vmatprep.subr.bf16.mxu0 0
        %1151 = vmatpush1.bf16.msra.mxu0 %v1105
        %1152 = vmatprep.subr.bf16.mxu0 0
        %1153 = vmatpush1.bf16.msra.mxu0 0
        %1154 = vmatprep.subr.bf16.mxu0 0
        %1155 = vmatpush1.bf16.msra.mxu0 0
        %1156 = vmatprep.subr.bf16.mxu0 0
        %1157 = vmatpush1.bf16.msra.mxu0 0
        %1158 = vmatprep.subr.bf16.mxu0 0
        %1159 = vmatpush1.bf16.msra.mxu0 0
        %1160 = vmatprep.subr.bf16.mxu0 0
        %1161 = vmatpush1.bf16.msra.mxu0 0
        %1162 = vmatprep.subr.bf16.mxu0 0
        %1163 = vmatpush1.bf16.msra.mxu0 0
        %1164 = vmatprep.subr.bf16.mxu0 0
        %1165 = vmatpush1.bf16.msra.mxu0 0
        %1166 = vmatprep.subr.bf16.mxu0 0
        %1167 = vmatpush1.bf16.msra.mxu0 0
        %1168 = vmatprep.subr.bf16.mxu0 0
        %1169 = vmatpush1.bf16.msra.mxu0 0
        %1170 = vmatprep.subr.bf16.mxu0 0
        %1171 = vmatpush1.bf16.msra.mxu0 0
        %1172 = vmatprep.subr.bf16.mxu0 0
        %1173 = vmatpush1.bf16.msra.mxu0 0
        %1174 = vmatprep.subr.bf16.mxu0 0
        %1175 = vmatpush1.bf16.msra.mxu0 0
        %1176 = vmatprep.subr.bf16.mxu0 0
        %1177 = vmatpush1.bf16.msra.mxu0 0
        %1178 = vmatprep.subr.bf16.mxu0 0
        %1179 = vmatpush1.bf16.msra.mxu0 0
        %1180 = vmatprep.subr.bf16.mxu0 0
        %1181 = vmatpush1.bf16.msra.mxu0 0
        %1182 = vmatprep.mubr.bf16.mxu0 0
        %1183 = vmatmul.mubr.bf16.gmra.mrb[0].mxu0 %v829
        %v1184 = vpop.f32.mrb[0].mxu0
        %v1185 = vadd.f32 0.0, %v1184
        %v1186 = vpop.f32.mrb[0].mxu0
        %v1187 = vpop.f32.mrb[0].mxu0
        %v1188 = vadd.f32 0.0, %v1187
        %v1189 = vpop.f32.mrb[0].mxu0
        %1190 = vdwg.mxu0
        %v1191 = vadd.f32 %v1148, %v1185
        %v1192 = vadd.f32 %v1149, %v1188
        %1193 = vmatprep.subr.bf16.mxu0 0
        %1194 = vmatpush1.bf16.msra.mxu0 %v1105
        %1195 = vmatprep.subr.bf16.mxu0 0
        %1196 = vmatpush1.bf16.msra.mxu0 0
        %1197 = vmatprep.subr.bf16.mxu0 0
        %1198 = vmatpush1.bf16.msra.mxu0 0
        %1199 = vmatprep.subr.bf16.mxu0 0
        %1200 = vmatpush1.bf16.msra.mxu0 0
        %1201 = vmatprep.subr.bf16.mxu0 0
        %1202 = vmatpush1.bf16.msra.mxu0 0
        %1203 = vmatprep.subr.bf16.mxu0 0
        %1204 = vmatpush1.bf16.msra.mxu0 0
        %1205 = vmatprep.subr.bf16.mxu0 0
        %1206 = vmatpush1.bf16.msra.mxu0 0
        %1207 = vmatprep.subr.bf16.mxu0 0
        %1208 = vmatpush1.bf16.msra.mxu0 0
        %1209 = vmatprep.subr.bf16.mxu0 0
        %1210 = vmatpush1.bf16.msra.mxu0 0
        %1211 = vmatprep.subr.bf16.mxu0 0
        %1212 = vmatpush1.bf16.msra.mxu0 0
        %1213 = vmatprep.subr.bf16.mxu0 0
        %1214 = vmatpush1.bf16.msra.mxu0 0
        %1215 = vmatprep.subr.bf16.mxu0 0
        %1216 = vmatpush1.bf16.msra.mxu0 0
        %1217 = vmatprep.subr.bf16.mxu0 0
        %1218 = vmatpush1.bf16.msra.mxu0 0
        %1219 = vmatprep.subr.bf16.mxu0 0
        %1220 = vmatpush1.bf16.msra.mxu0 0
        %1221 = vmatprep.subr.bf16.mxu0 0
        %1222 = vmatpush1.bf16.msra.mxu0 0
        %1223 = vmatprep.subr.bf16.mxu0 0
        %1224 = vmatpush1.bf16.msra.mxu0 0
        %1225 = vmatprep.mubr.bf16.mxu0 0
        %1226 = vmatmul.mubr.bf16.gmra.mrb[0].mxu0 %v917
        %v1227 = vpop.f32.mrb[0].mxu0
        %v1228 = vadd.f32 0.0, %v1227
        %v1229 = vpop.f32.mrb[0].mxu0
        %v1230 = vpop.f32.mrb[0].mxu0
        %v1231 = vadd.f32 0.0, %v1230
        %v1232 = vpop.f32.mrb[0].mxu0
        %1233 = vdwg.mxu0
        %v1234 = vadd.f32 %v1191, %v1228
        %v1235 = vadd.f32 %v1192, %v1231
        %v1236 = vld [vmem:[%s665] sm:$0xf]
        %v1237 = vld [vmem:[%s665 + $0x4] sm:$0xf]
        %v1240 = vunpack.c.l.b16 %v1236
        %v1241 = vunpack.c.l.b16 %v1237
        %v1242 = vpack.c.b16 %v1241, %v1240
        %1244 = vmatprep.subr.bf16.mxu0 0
        %1245 = vmatpush1.bf16.msra.mxu0 %v1242
        %1246 = vmatprep.subr.bf16.mxu0 0
        %1247 = vmatpush1.bf16.msra.mxu0 0
        %1248 = vmatprep.subr.bf16.mxu0 0
        %1249 = vmatpush1.bf16.msra.mxu0 0
        %1250 = vmatprep.subr.bf16.mxu0 0
        %1251 = vmatpush1.bf16.msra.mxu0 0
        %1252 = vmatprep.subr.bf16.mxu0 0
        %1253 = vmatpush1.bf16.msra.mxu0 0
        %1254 = vmatprep.subr.bf16.mxu0 0
        %1255 = vmatpush1.bf16.msra.mxu0 0
        %1256 = vmatprep.subr.bf16.mxu0 0
        %1257 = vmatpush1.bf16.msra.mxu0 0
        %1258 = vmatprep.subr.bf16.mxu0 0
        %1259 = vmatpush1.bf16.msra.mxu0 0
        %1260 = vmatprep.subr.bf16.mxu0 0
        %1261 = vmatpush1.bf16.msra.mxu0 0
        %1262 = vmatprep.subr.bf16.mxu0 0
        %1263 = vmatpush1.bf16.msra.mxu0 0
        %1264 = vmatprep.subr.bf16.mxu0 0
        %1265 = vmatpush1.bf16.msra.mxu0 0
        %1266 = vmatprep.subr.bf16.mxu0 0
        %1267 = vmatpush1.bf16.msra.mxu0 0
        %1268 = vmatprep.subr.bf16.mxu0 0
        %1269 = vmatpush1.bf16.msra.mxu0 0
        %1270 = vmatprep.subr.bf16.mxu0 0
        %1271 = vmatpush1.bf16.msra.mxu0 0
        %1272 = vmatprep.subr.bf16.mxu0 0
        %1273 = vmatpush1.bf16.msra.mxu0 0
        %1274 = vmatprep.subr.bf16.mxu0 0
        %1275 = vmatpush1.bf16.msra.mxu0 0
        %1276 = vmatprep.mubr.bf16.mxu0 0
        %1277 = vmatmul.mubr.bf16.gmra.mrb[0].mxu0 %v873
        %v1278 = vpop.f32.mrb[0].mxu0
        %v1279 = vadd.f32 0.0, %v1278
        %v1280 = vpop.f32.mrb[0].mxu0
        %v1281 = vpop.f32.mrb[0].mxu0
        %v1282 = vadd.f32 0.0, %v1281
        %v1283 = vpop.f32.mrb[0].mxu0
        %1284 = vdwg.mxu0
        %v1285 = vadd.f32 %v1234, %v1279
        %v1286 = vadd.f32 %v1235, %v1282
        %1287 = vmatprep.subr.bf16.mxu0 0
        %1288 = vmatpush1.bf16.msra.mxu0 %v1242
        %1289 = vmatprep.subr.bf16.mxu0 0
        %1290 = vmatpush1.bf16.msra.mxu0 0
        %1291 = vmatprep.subr.bf16.mxu0 0
        %1292 = vmatpush1.bf16.msra.mxu0 0
        %1293 = vmatprep.subr.bf16.mxu0 0
        %1294 = vmatpush1.bf16.msra.mxu0 0
        %1295 = vmatprep.subr.bf16.mxu0 0
        %1296 = vmatpush1.bf16.msra.mxu0 0
        %1297 = vmatprep.subr.bf16.mxu0 0
        %1298 = vmatpush1.bf16.msra.mxu0 0
        %1299 = vmatprep.subr.bf16.mxu0 0
        %1300 = vmatpush1.bf16.msra.mxu0 0
        %1301 = vmatprep.subr.bf16.mxu0 0
        %1302 = vmatpush1.bf16.msra.mxu0 0
        %1303 = vmatprep.subr.bf16.mxu0 0
        %1304 = vmatpush1.bf16.msra.mxu0 0
        %1305 = vmatprep.subr.bf16.mxu0 0
        %1306 = vmatpush1.bf16.msra.mxu0 0
        %1307 = vmatprep.subr.bf16.mxu0 0
        %1308 = vmatpush1.bf16.msra.mxu0 0
        %1309 = vmatprep.subr.bf16.mxu0 0
        %1310 = vmatpush1.bf16.msra.mxu0 0
        %1311 = vmatprep.subr.bf16.mxu0 0
        %1312 = vmatpush1.bf16.msra.mxu0 0
        %1313 = vmatprep.subr.bf16.mxu0 0
        %1314 = vmatpush1.bf16.msra.mxu0 0
        %1315 = vmatprep.subr.bf16.mxu0 0
        %1316 = vmatpush1.bf16.msra.mxu0 0
        %1317 = vmatprep.subr.bf16.mxu0 0
        %1318 = vmatpush1.bf16.msra.mxu0 0
        %1319 = vmatprep.mubr.bf16.mxu0 0
        %1320 = vmatmul.mubr.bf16.gmra.mrb[0].mxu0 %v829
        %v1321 = vpop.f32.mrb[0].mxu0
        %v1322 = vadd.f32 0.0, %v1321
        %v1323 = vpop.f32.mrb[0].mxu0
        %v1324 = vpop.f32.mrb[0].mxu0
        %v1325 = vadd.f32 0.0, %v1324
        %v1326 = vpop.f32.mrb[0].mxu0
        %1327 = vdwg.mxu0
        %v1328 = vadd.f32 %v1285, %v1322
        %v1329 = vadd.f32 %v1286, %v1325
        %1330 = vmatprep.subr.bf16.mxu0 0
        %1331 = vmatpush1.bf16.msra.mxu0 %v1242
        %1332 = vmatprep.subr.bf16.mxu0 0
        %1333 = vmatpush1.bf16.msra.mxu0 0
        %1334 = vmatprep.subr.bf16.mxu0 0
        %1335 = vmatpush1.bf16.msra.mxu0 0
        %1336 = vmatprep.subr.bf16.mxu0 0
        %1337 = vmatpush1.bf16.msra.mxu0 0
        %1338 = vmatprep.subr.bf16.mxu0 0
        %1339 = vmatpush1.bf16.msra.mxu0 0
        %1340 = vmatprep.subr.bf16.mxu0 0
        %1341 = vmatpush1.bf16.msra.mxu0 0
        %1342 = vmatprep.subr.bf16.mxu0 0
        %1343 = vmatpush1.bf16.msra.mxu0 0
        %1344 = vmatprep.subr.bf16.mxu0 0
        %1345 = vmatpush1.bf16.msra.mxu0 0
        %1346 = vmatprep.subr.bf16.mxu0 0
        %1347 = vmatpush1.bf16.msra.mxu0 0
        %1348 = vmatprep.subr.bf16.mxu0 0
        %1349 = vmatpush1.bf16.msra.mxu0 0
        %1350 = vmatprep.subr.bf16.mxu0 0
        %1351 = vmatpush1.bf16.msra.mxu0 0
        %1352 = vmatprep.subr.bf16.mxu0 0
        %1353 = vmatpush1.bf16.msra.mxu0 0
        %1354 = vmatprep.subr.bf16.mxu0 0
        %1355 = vmatpush1.bf16.msra.mxu0 0
        %1356 = vmatprep.subr.bf16.mxu0 0
        %1357 = vmatpush1.bf16.msra.mxu0 0
        %1358 = vmatprep.subr.bf16.mxu0 0
        %1359 = vmatpush1.bf16.msra.mxu0 0
        %1360 = vmatprep.subr.bf16.mxu0 0
        %1361 = vmatpush1.bf16.msra.mxu0 0
        %1362 = vmatprep.mubr.bf16.mxu0 0
        %1363 = vmatmul.mubr.bf16.gmra.mrb[0].mxu0 %v917
        %v1364 = vpop.f32.mrb[0].mxu0
        %v1365 = vadd.f32 0.0, %v1364
        %v1366 = vpop.f32.mrb[0].mxu0
        %v1367 = vpop.f32.mrb[0].mxu0
        %v1368 = vadd.f32 0.0, %v1367
        %v1369 = vpop.f32.mrb[0].mxu0
        %1370 = vdwg.mxu0
        %v1371 = vadd.f32 %v1328, %v1365
        %v1372 = vadd.f32 %v1329, %v1368
        %s1373 = scalar_lea.vmem %s229, 16 [#allocation6]
        %1374 = vst.msk [vmem:[%s1373] sm:$0xff] %vm803, %v1371
        %1375 = vst.msk [vmem:[%s1373 + $0x8] sm:$0xff] %vm803, %v1372
        %s1376 = scalar_lea.vmem %s206, 32 [#allocation2]
        %v1377 = vld [vmem:[%s1376] sm:$0xff]
        %v1378 = vld [vmem:[%s1376 + $0x8] sm:$0xff]
        %v1379 = vpack.c.bf16 %v1378, %v1377
        %v1380 = vunpack.c.l.bf16 %v1379
        %v1381 = vunpack.c.h.bf16 %v1379
        %v1382 = vsub.f32 %v1377, %v1380
        %v1383 = vsub.f32 %v1378, %v1381
        %v1384 = vpack.c.bf16 %v1383, %v1382
        %v1385 = vunpack.c.l.bf16 %v1384
        %v1386 = vunpack.c.h.bf16 %v1384
        %v1387 = vsub.f32 %v1382, %v1385
        %v1388 = vsub.f32 %v1383, %v1386
        %v1389 = vpack.c.bf16 %v1388, %v1387
        %v1390 = vld [vmem:[#allocation4] sm:$0xf]
        %v1391 = vld [vmem:[#allocation4 + $0x4] sm:$0xf]
        %v1394 = vunpack.c.l.b16 %v1390
        %v1395 = vunpack.c.l.b16 %v1391
        %v1396 = vpack.c.b16 %v1395, %v1394
        %v1399 = vsel %vm254, %v1384, 0
        %1401 = vmatprep.subr.bf16.mxu0 0
        %1402 = vmatpush1.bf16.msra.mxu0 %v1396
        %1403 = vmatprep.subr.bf16.mxu0 0
        %1404 = vmatpush1.bf16.msra.mxu0 0
        %1405 = vmatprep.subr.bf16.mxu0 0
        %1406 = vmatpush1.bf16.msra.mxu0 0
        %1407 = vmatprep.subr.bf16.mxu0 0
        %1408 = vmatpush1.bf16.msra.mxu0 0
        %1409 = vmatprep.subr.bf16.mxu0 0
        %1410 = vmatpush1.bf16.msra.mxu0 0
        %1411 = vmatprep.subr.bf16.mxu0 0
        %1412 = vmatpush1.bf16.msra.mxu0 0
        %1413 = vmatprep.subr.bf16.mxu0 0
        %1414 = vmatpush1.bf16.msra.mxu0 0
        %1415 = vmatprep.subr.bf16.mxu0 0
        %1416 = vmatpush1.bf16.msra.mxu0 0
        %1417 = vmatprep.subr.bf16.mxu0 0
        %1418 = vmatpush1.bf16.msra.mxu0 0
        %1419 = vmatprep.subr.bf16.mxu0 0
        %1420 = vmatpush1.bf16.msra.mxu0 0
        %1421 = vmatprep.subr.bf16.mxu0 0
        %1422 = vmatpush1.bf16.msra.mxu0 0
        %1423 = vmatprep.subr.bf16.mxu0 0
        %1424 = vmatpush1.bf16.msra.mxu0 0
        %1425 = vmatprep.subr.bf16.mxu0 0
        %1426 = vmatpush1.bf16.msra.mxu0 0
        %1427 = vmatprep.subr.bf16.mxu0 0
        %1428 = vmatpush1.bf16.msra.mxu0 0
        %1429 = vmatprep.subr.bf16.mxu0 0
        %1430 = vmatpush1.bf16.msra.mxu0 0
        %1431 = vmatprep.subr.bf16.mxu0 0
        %1432 = vmatpush1.bf16.msra.mxu0 0
        %1433 = vmatprep.mubr.bf16.mxu0 0
        %1434 = vmatmul.mubr.bf16.gmra.mrb[0].mxu0 %v1399
        %v1435 = vpop.f32.mrb[0].mxu0
        %v1436 = vadd.f32 0.0, %v1435
        %v1437 = vpop.f32.mrb[0].mxu0
        %v1438 = vpop.f32.mrb[0].mxu0
        %v1439 = vadd.f32 0.0, %v1438
        %v1440 = vpop.f32.mrb[0].mxu0
        %1441 = vdwg.mxu0
        %v1443 = vsel %vm254, %v1379, 0
        %1445 = vmatprep.subr.bf16.mxu0 0
        %1446 = vmatpush1.bf16.msra.mxu0 %v1396
        %1447 = vmatprep.subr.bf16.mxu0 0
        %1448 = vmatpush1.bf16.msra.mxu0 0
        %1449 = vmatprep.subr.bf16.mxu0 0
        %1450 = vmatpush1.bf16.msra.mxu0 0
        %1451 = vmatprep.subr.bf16.mxu0 0
        %1452 = vmatpush1.bf16.msra.mxu0 0
        %1453 = vmatprep.subr.bf16.mxu0 0
        %1454 = vmatpush1.bf16.msra.mxu0 0
        %1455 = vmatprep.subr.bf16.mxu0 0
        %1456 = vmatpush1.bf16.msra.mxu0 0
        %1457 = vmatprep.subr.bf16.mxu0 0
        %1458 = vmatpush1.bf16.msra.mxu0 0
        %1459 = vmatprep.subr.bf16.mxu0 0
        %1460 = vmatpush1.bf16.msra.mxu0 0
        %1461 = vmatprep.subr.bf16.mxu0 0
        %1462 = vmatpush1.bf16.msra.mxu0 0
        %1463 = vmatprep.subr.bf16.mxu0 0
        %1464 = vmatpush1.bf16.msra.mxu0 0
        %1465 = vmatprep.subr.bf16.mxu0 0
        %1466 = vmatpush1.bf16.msra.mxu0 0
        %1467 = vmatprep.subr.bf16.mxu0 0
        %1468 = vmatpush1.bf16.msra.mxu0 0
        %1469 = vmatprep.subr.bf16.mxu0 0
        %1470 = vmatpush1.bf16.msra.mxu0 0
        %1471 = vmatprep.subr.bf16.mxu0 0
        %1472 = vmatpush1.bf16.msra.mxu0 0
        %1473 = vmatprep.subr.bf16.mxu0 0
        %1474 = vmatpush1.bf16.msra.mxu0 0
        %1475 = vmatprep.subr.bf16.mxu0 0
        %1476 = vmatpush1.bf16.msra.mxu0 0
        %1477 = vmatprep.mubr.bf16.mxu0 0
        %1478 = vmatmul.mubr.bf16.gmra.mrb[0].mxu0 %v1443
        %v1479 = vpop.f32.mrb[0].mxu0
        %v1480 = vadd.f32 %v1436, %v1479
        %v1481 = vpop.f32.mrb[0].mxu0
        %v1482 = vpop.f32.mrb[0].mxu0
        %v1483 = vadd.f32 %v1439, %v1482
        %v1484 = vpop.f32.mrb[0].mxu0
        %1485 = vdwg.mxu0
        %v1487 = vsel %vm254, %v1389, 0
        %1489 = vmatprep.subr.bf16.mxu0 0
        %1490 = vmatpush1.bf16.msra.mxu0 %v1396
        %1491 = vmatprep.subr.bf16.mxu0 0
        %1492 = vmatpush1.bf16.msra.mxu0 0
        %1493 = vmatprep.subr.bf16.mxu0 0
        %1494 = vmatpush1.bf16.msra.mxu0 0
        %1495 = vmatprep.subr.bf16.mxu0 0
        %1496 = vmatpush1.bf16.msra.mxu0 0
        %1497 = vmatprep.subr.bf16.mxu0 0
        %1498 = vmatpush1.bf16.msra.mxu0 0
        %1499 = vmatprep.subr.bf16.mxu0 0
        %1500 = vmatpush1.bf16.msra.mxu0 0
        %1501 = vmatprep.subr.bf16.mxu0 0
        %1502 = vmatpush1.bf16.msra.mxu0 0
        %1503 = vmatprep.subr.bf16.mxu0 0
        %1504 = vmatpush1.bf16.msra.mxu0 0
        %1505 = vmatprep.subr.bf16.mxu0 0
        %1506 = vmatpush1.bf16.msra.mxu0 0
        %1507 = vmatprep.subr.bf16.mxu0 0
        %1508 = vmatpush1.bf16.msra.mxu0 0
        %1509 = vmatprep.subr.bf16.mxu0 0
        %1510 = vmatpush1.bf16.msra.mxu0 0
        %1511 = vmatprep.subr.bf16.mxu0 0
        %1512 = vmatpush1.bf16.msra.mxu0 0
        %1513 = vmatprep.subr.bf16.mxu0 0
        %1514 = vmatpush1.bf16.msra.mxu0 0
        %1515 = vmatprep.subr.bf16.mxu0 0
        %1516 = vmatpush1.bf16.msra.mxu0 0
        %1517 = vmatprep.subr.bf16.mxu0 0
        %1518 = vmatpush1.bf16.msra.mxu0 0
        %1519 = vmatprep.subr.bf16.mxu0 0
        %1520 = vmatpush1.bf16.msra.mxu0 0
        %1521 = vmatprep.mubr.bf16.mxu0 0
        %1522 = vmatmul.mubr.bf16.gmra.mrb[0].mxu0 %v1487
        %v1523 = vpop.f32.mrb[0].mxu0
        %v1524 = vadd.f32 0.0, %v1523
        %v1525 = vpop.f32.mrb[0].mxu0
        %v1526 = vpop.f32.mrb[0].mxu0
        %v1527 = vadd.f32 0.0, %v1526
        %v1528 = vpop.f32.mrb[0].mxu0
        %1529 = vdwg.mxu0
        %v1530 = vadd.f32 %v1480, %v1524
        %v1531 = vadd.f32 %v1483, %v1527
        %v1532 = vld [vmem:[%s389] sm:$0xf]
        %v1533 = vld [vmem:[%s389 + $0x4] sm:$0xf]
        %v1536 = vunpack.c.l.b16 %v1532
        %v1537 = vunpack.c.l.b16 %v1533
        %v1538 = vpack.c.b16 %v1537, %v1536
        %1540 = vmatprep.subr.bf16.mxu0 0
        %1541 = vmatpush1.bf16.msra.mxu0 %v1538
        %1542 = vmatprep.subr.bf16.mxu0 0
        %1543 = vmatpush1.bf16.msra.mxu0 0
        %1544 = vmatprep.subr.bf16.mxu0 0
        %1545 = vmatpush1.bf16.msra.mxu0 0
        %1546 = vmatprep.subr.bf16.mxu0 0
        %1547 = vmatpush1.bf16.msra.mxu0 0
        %1548 = vmatprep.subr.bf16.mxu0 0
        %1549 = vmatpush1.bf16.msra.mxu0 0
        %1550 = vmatprep.subr.bf16.mxu0 0
        %1551 = vmatpush1.bf16.msra.mxu0 0
        %1552 = vmatprep.subr.bf16.mxu0 0
        %1553 = vmatpush1.bf16.msra.mxu0 0
        %1554 = vmatprep.subr.bf16.mxu0 0
        %1555 = vmatpush1.bf16.msra.mxu0 0
        %1556 = vmatprep.subr.bf16.mxu0 0
        %1557 = vmatpush1.bf16.msra.mxu0 0
        %1558 = vmatprep.subr.bf16.mxu0 0
        %1559 = vmatpush1.bf16.msra.mxu0 0
        %1560 = vmatprep.subr.bf16.mxu0 0
        %1561 = vmatpush1.bf16.msra.mxu0 0
        %1562 = vmatprep.subr.bf16.mxu0 0
        %1563 = vmatpush1.bf16.msra.mxu0 0
        %1564 = vmatprep.subr.bf16.mxu0 0
        %1565 = vmatpush1.bf16.msra.mxu0 0
        %1566 = vmatprep.subr.bf16.mxu0 0
        %1567 = vmatpush1.bf16.msra.mxu0 0
        %1568 = vmatprep.subr.bf16.mxu0 0
        %1569 = vmatpush1.bf16.msra.mxu0 0
        %1570 = vmatprep.subr.bf16.mxu0 0
        %1571 = vmatpush1.bf16.msra.mxu0 0
        %1572 = vmatprep.mubr.bf16.mxu0 0
        %1573 = vmatmul.mubr.bf16.gmra.mrb[0].mxu0 %v1443
        %v1574 = vpop.f32.mrb[0].mxu0
        %v1575 = vadd.f32 0.0, %v1574
        %v1576 = vpop.f32.mrb[0].mxu0
        %v1577 = vpop.f32.mrb[0].mxu0
        %v1578 = vadd.f32 0.0, %v1577
        %v1579 = vpop.f32.mrb[0].mxu0
        %1580 = vdwg.mxu0
        %v1581 = vadd.f32 %v1530, %v1575
        %v1582 = vadd.f32 %v1531, %v1578
        %1583 = vmatprep.subr.bf16.mxu0 0
        %1584 = vmatpush1.bf16.msra.mxu0 %v1538
        %1585 = vmatprep.subr.bf16.mxu0 0
        %1586 = vmatpush1.bf16.msra.mxu0 0
        %1587 = vmatprep.subr.bf16.mxu0 0
        %1588 = vmatpush1.bf16.msra.mxu0 0
        %1589 = vmatprep.subr.bf16.mxu0 0
        %1590 = vmatpush1.bf16.msra.mxu0 0
        %1591 = vmatprep.subr.bf16.mxu0 0
        %1592 = vmatpush1.bf16.msra.mxu0 0
        %1593 = vmatprep.subr.bf16.mxu0 0
        %1594 = vmatpush1.bf16.msra.mxu0 0
        %1595 = vmatprep.subr.bf16.mxu0 0
        %1596 = vmatpush1.bf16.msra.mxu0 0
        %1597 = vmatprep.subr.bf16.mxu0 0
        %1598 = vmatpush1.bf16.msra.mxu0 0
        %1599 = vmatprep.subr.bf16.mxu0 0
        %1600 = vmatpush1.bf16.msra.mxu0 0
        %1601 = vmatprep.subr.bf16.mxu0 0
        %1602 = vmatpush1.bf16.msra.mxu0 0
        %1603 = vmatprep.subr.bf16.mxu0 0
        %1604 = vmatpush1.bf16.msra.mxu0 0
        %1605 = vmatprep.subr.bf16.mxu0 0
        %1606 = vmatpush1.bf16.msra.mxu0 0
        %1607 = vmatprep.subr.bf16.mxu0 0
        %1608 = vmatpush1.bf16.msra.mxu0 0
        %1609 = vmatprep.subr.bf16.mxu0 0
        %1610 = vmatpush1.bf16.msra.mxu0 0
        %1611 = vmatprep.subr.bf16.mxu0 0
        %1612 = vmatpush1.bf16.msra.mxu0 0
        %1613 = vmatprep.subr.bf16.mxu0 0
        %1614 = vmatpush1.bf16.msra.mxu0 0
        %1615 = vmatprep.mubr.bf16.mxu0 0
        %1616 = vmatmul.mubr.bf16.gmra.mrb[0].mxu0 %v1399
        %v1617 = vpop.f32.mrb[0].mxu0
        %v1618 = vadd.f32 0.0, %v1617
        %v1619 = vpop.f32.mrb[0].mxu0
        %v1620 = vpop.f32.mrb[0].mxu0
        %v1621 = vadd.f32 0.0, %v1620
        %v1622 = vpop.f32.mrb[0].mxu0
        %1623 = vdwg.mxu0
        %v1624 = vadd.f32 %v1581, %v1618
        %v1625 = vadd.f32 %v1582, %v1621
        %1626 = vmatprep.subr.bf16.mxu0 0
        %1627 = vmatpush1.bf16.msra.mxu0 %v1538
        %1628 = vmatprep.subr.bf16.mxu0 0
        %1629 = vmatpush1.bf16.msra.mxu0 0
        %1630 = vmatprep.subr.bf16.mxu0 0
        %1631 = vmatpush1.bf16.msra.mxu0 0
        %1632 = vmatprep.subr.bf16.mxu0 0
        %1633 = vmatpush1.bf16.msra.mxu0 0
        %1634 = vmatprep.subr.bf16.mxu0 0
        %1635 = vmatpush1.bf16.msra.mxu0 0
        %1636 = vmatprep.subr.bf16.mxu0 0
        %1637 = vmatpush1.bf16.msra.mxu0 0
        %1638 = vmatprep.subr.bf16.mxu0 0
        %1639 = vmatpush1.bf16.msra.mxu0 0
        %1640 = vmatprep.subr.bf16.mxu0 0
        %1641 = vmatpush1.bf16.msra.mxu0 0
        %1642 = vmatprep.subr.bf16.mxu0 0
        %1643 = vmatpush1.bf16.msra.mxu0 0
        %1644 = vmatprep.subr.bf16.mxu0 0
        %1645 = vmatpush1.bf16.msra.mxu0 0
        %1646 = vmatprep.subr.bf16.mxu0 0
        %1647 = vmatpush1.bf16.msra.mxu0 0
        %1648 = vmatprep.subr.bf16.mxu0 0
        %1649 = vmatpush1.bf16.msra.mxu0 0
        %1650 = vmatprep.subr.bf16.mxu0 0
        %1651 = vmatpush1.bf16.msra.mxu0 0
        %1652 = vmatprep.subr.bf16.mxu0 0
        %1653 = vmatpush1.bf16.msra.mxu0 0
        %1654 = vmatprep.subr.bf16.mxu0 0
        %1655 = vmatpush1.bf16.msra.mxu0 0
        %1656 = vmatprep.subr.bf16.mxu0 0
        %1657 = vmatpush1.bf16.msra.mxu0 0
        %1658 = vmatprep.mubr.bf16.mxu0 0
        %1659 = vmatmul.mubr.bf16.gmra.mrb[0].mxu0 %v1487
        %v1660 = vpop.f32.mrb[0].mxu0
        %v1661 = vadd.f32 0.0, %v1660
        %v1662 = vpop.f32.mrb[0].mxu0
        %v1663 = vpop.f32.mrb[0].mxu0
        %v1664 = vadd.f32 0.0, %v1663
        %v1665 = vpop.f32.mrb[0].mxu0
        %1666 = vdwg.mxu0
        %v1667 = vadd.f32 %v1624, %v1661
        %v1668 = vadd.f32 %v1625, %v1664
        %v1669 = vld [vmem:[%s527] sm:$0xf]
        %v1670 = vld [vmem:[%s527 + $0x4] sm:$0xf]
        %v1673 = vunpack.c.l.b16 %v1669
        %v1674 = vunpack.c.l.b16 %v1670
        %v1675 = vpack.c.b16 %v1674, %v1673
        %1677 = vmatprep.subr.bf16.mxu0 0
        %1678 = vmatpush1.bf16.msra.mxu0 %v1675
        %1679 = vmatprep.subr.bf16.mxu0 0
        %1680 = vmatpush1.bf16.msra.mxu0 0
        %1681 = vmatprep.subr.bf16.mxu0 0
        %1682 = vmatpush1.bf16.msra.mxu0 0
        %1683 = vmatprep.subr.bf16.mxu0 0
        %1684 = vmatpush1.bf16.msra.mxu0 0
        %1685 = vmatprep.subr.bf16.mxu0 0
        %1686 = vmatpush1.bf16.msra.mxu0 0
        %1687 = vmatprep.subr.bf16.mxu0 0
        %1688 = vmatpush1.bf16.msra.mxu0 0
        %1689 = vmatprep.subr.bf16.mxu0 0
        %1690 = vmatpush1.bf16.msra.mxu0 0
        %1691 = vmatprep.subr.bf16.mxu0 0
        %1692 = vmatpush1.bf16.msra.mxu0 0
        %1693 = vmatprep.subr.bf16.mxu0 0
        %1694 = vmatpush1.bf16.msra.mxu0 0
        %1695 = vmatprep.subr.bf16.mxu0 0
        %1696 = vmatpush1.bf16.msra.mxu0 0
        %1697 = vmatprep.subr.bf16.mxu0 0
        %1698 = vmatpush1.bf16.msra.mxu0 0
        %1699 = vmatprep.subr.bf16.mxu0 0
        %1700 = vmatpush1.bf16.msra.mxu0 0
        %1701 = vmatprep.subr.bf16.mxu0 0
        %1702 = vmatpush1.bf16.msra.mxu0 0
        %1703 = vmatprep.subr.bf16.mxu0 0
        %1704 = vmatpush1.bf16.msra.mxu0 0
        %1705 = vmatprep.subr.bf16.mxu0 0
        %1706 = vmatpush1.bf16.msra.mxu0 0
        %1707 = vmatprep.subr.bf16.mxu0 0
        %1708 = vmatpush1.bf16.msra.mxu0 0
        %1709 = vmatprep.mubr.bf16.mxu0 0
        %1710 = vmatmul.mubr.bf16.gmra.mrb[0].mxu0 %v1443
        %v1711 = vpop.f32.mrb[0].mxu0
        %v1712 = vadd.f32 0.0, %v1711
        %v1713 = vpop.f32.mrb[0].mxu0
        %v1714 = vpop.f32.mrb[0].mxu0
        %v1715 = vadd.f32 0.0, %v1714
        %v1716 = vpop.f32.mrb[0].mxu0
        %1717 = vdwg.mxu0
        %v1718 = vadd.f32 %v1667, %v1712
        %v1719 = vadd.f32 %v1668, %v1715
        %1720 = vmatprep.subr.bf16.mxu0 0
        %1721 = vmatpush1.bf16.msra.mxu0 %v1675
        %1722 = vmatprep.subr.bf16.mxu0 0
        %1723 = vmatpush1.bf16.msra.mxu0 0
        %1724 = vmatprep.subr.bf16.mxu0 0
        %1725 = vmatpush1.bf16.msra.mxu0 0
        %1726 = vmatprep.subr.bf16.mxu0 0
        %1727 = vmatpush1.bf16.msra.mxu0 0
        %1728 = vmatprep.subr.bf16.mxu0 0
        %1729 = vmatpush1.bf16.msra.mxu0 0
        %1730 = vmatprep.subr.bf16.mxu0 0
        %1731 = vmatpush1.bf16.msra.mxu0 0
        %1732 = vmatprep.subr.bf16.mxu0 0
        %1733 = vmatpush1.bf16.msra.mxu0 0
        %1734 = vmatprep.subr.bf16.mxu0 0
        %1735 = vmatpush1.bf16.msra.mxu0 0
        %1736 = vmatprep.subr.bf16.mxu0 0
        %1737 = vmatpush1.bf16.msra.mxu0 0
        %1738 = vmatprep.subr.bf16.mxu0 0
        %1739 = vmatpush1.bf16.msra.mxu0 0
        %1740 = vmatprep.subr.bf16.mxu0 0
        %1741 = vmatpush1.bf16.msra.mxu0 0
        %1742 = vmatprep.subr.bf16.mxu0 0
        %1743 = vmatpush1.bf16.msra.mxu0 0
        %1744 = vmatprep.subr.bf16.mxu0 0
        %1745 = vmatpush1.bf16.msra.mxu0 0
        %1746 = vmatprep.subr.bf16.mxu0 0
        %1747 = vmatpush1.bf16.msra.mxu0 0
        %1748 = vmatprep.subr.bf16.mxu0 0
        %1749 = vmatpush1.bf16.msra.mxu0 0
        %1750 = vmatprep.subr.bf16.mxu0 0
        %1751 = vmatpush1.bf16.msra.mxu0 0
        %1752 = vmatprep.mubr.bf16.mxu0 0
        %1753 = vmatmul.mubr.bf16.gmra.mrb[0].mxu0 %v1399
        %v1754 = vpop.f32.mrb[0].mxu0
        %v1755 = vadd.f32 0.0, %v1754
        %v1756 = vpop.f32.mrb[0].mxu0
        %v1757 = vpop.f32.mrb[0].mxu0
        %v1758 = vadd.f32 0.0, %v1757
        %v1759 = vpop.f32.mrb[0].mxu0
        %1760 = vdwg.mxu0
        %v1761 = vadd.f32 %v1718, %v1755
        %v1762 = vadd.f32 %v1719, %v1758
        %1763 = vmatprep.subr.bf16.mxu0 0
        %1764 = vmatpush1.bf16.msra.mxu0 %v1675
        %1765 = vmatprep.subr.bf16.mxu0 0
        %1766 = vmatpush1.bf16.msra.mxu0 0
        %1767 = vmatprep.subr.bf16.mxu0 0
        %1768 = vmatpush1.bf16.msra.mxu0 0
        %1769 = vmatprep.subr.bf16.mxu0 0
        %1770 = vmatpush1.bf16.msra.mxu0 0
        %1771 = vmatprep.subr.bf16.mxu0 0
        %1772 = vmatpush1.bf16.msra.mxu0 0
        %1773 = vmatprep.subr.bf16.mxu0 0
        %1774 = vmatpush1.bf16.msra.mxu0 0
        %1775 = vmatprep.subr.bf16.mxu0 0
        %1776 = vmatpush1.bf16.msra.mxu0 0
        %1777 = vmatprep.subr.bf16.mxu0 0
        %1778 = vmatpush1.bf16.msra.mxu0 0
        %1779 = vmatprep.subr.bf16.mxu0 0
        %1780 = vmatpush1.bf16.msra.mxu0 0
        %1781 = vmatprep.subr.bf16.mxu0 0
        %1782 = vmatpush1.bf16.msra.mxu0 0
        %1783 = vmatprep.subr.bf16.mxu0 0
        %1784 = vmatpush1.bf16.msra.mxu0 0
        %1785 = vmatprep.subr.bf16.mxu0 0
        %1786 = vmatpush1.bf16.msra.mxu0 0
        %1787 = vmatprep.subr.bf16.mxu0 0
        %1788 = vmatpush1.bf16.msra.mxu0 0
        %1789 = vmatprep.subr.bf16.mxu0 0
        %1790 = vmatpush1.bf16.msra.mxu0 0
        %1791 = vmatprep.subr.bf16.mxu0 0
        %1792 = vmatpush1.bf16.msra.mxu0 0
        %1793 = vmatprep.subr.bf16.mxu0 0
        %1794 = vmatpush1.bf16.msra.mxu0 0
        %1795 = vmatprep.mubr.bf16.mxu0 0
        %1796 = vmatmul.mubr.bf16.gmra.mrb[0].mxu0 %v1487
        %v1797 = vpop.f32.mrb[0].mxu0
        %v1798 = vadd.f32 0.0, %v1797
        %v1799 = vpop.f32.mrb[0].mxu0
        %v1800 = vpop.f32.mrb[0].mxu0
        %v1801 = vadd.f32 0.0, %v1800
        %v1802 = vpop.f32.mrb[0].mxu0
        %1803 = vdwg.mxu0
        %v1804 = vadd.f32 %v1761, %v1798
        %v1805 = vadd.f32 %v1762, %v1801
        %v1806 = vld [vmem:[%s665] sm:$0xf]
        %v1807 = vld [vmem:[%s665 + $0x4] sm:$0xf]
        %v1810 = vunpack.c.l.b16 %v1806
        %v1811 = vunpack.c.l.b16 %v1807
        %v1812 = vpack.c.b16 %v1811, %v1810
        %1814 = vmatprep.subr.bf16.mxu0 0
        %1815 = vmatpush1.bf16.msra.mxu0 %v1812
        %1816 = vmatprep.subr.bf16.mxu0 0
        %1817 = vmatpush1.bf16.msra.mxu0 0
        %1818 = vmatprep.subr.bf16.mxu0 0
        %1819 = vmatpush1.bf16.msra.mxu0 0
        %1820 = vmatprep.subr.bf16.mxu0 0
        %1821 = vmatpush1.bf16.msra.mxu0 0
        %1822 = vmatprep.subr.bf16.mxu0 0
        %1823 = vmatpush1.bf16.msra.mxu0 0
        %1824 = vmatprep.subr.bf16.mxu0 0
        %1825 = vmatpush1.bf16.msra.mxu0 0
        %1826 = vmatprep.subr.bf16.mxu0 0
        %1827 = vmatpush1.bf16.msra.mxu0 0
        %1828 = vmatprep.subr.bf16.mxu0 0
        %1829 = vmatpush1.bf16.msra.mxu0 0
        %1830 = vmatprep.subr.bf16.mxu0 0
        %1831 = vmatpush1.bf16.msra.mxu0 0
        %1832 = vmatprep.subr.bf16.mxu0 0
        %1833 = vmatpush1.bf16.msra.mxu0 0
        %1834 = vmatprep.subr.bf16.mxu0 0
        %1835 = vmatpush1.bf16.msra.mxu0 0
        %1836 = vmatprep.subr.bf16.mxu0 0
        %1837 = vmatpush1.bf16.msra.mxu0 0
        %1838 = vmatprep.subr.bf16.mxu0 0
        %1839 = vmatpush1.bf16.msra.mxu0 0
        %1840 = vmatprep.subr.bf16.mxu0 0
        %1841 = vmatpush1.bf16.msra.mxu0 0
        %1842 = vmatprep.subr.bf16.mxu0 0
        %1843 = vmatpush1.bf16.msra.mxu0 0
        %1844 = vmatprep.subr.bf16.mxu0 0
        %1845 = vmatpush1.bf16.msra.mxu0 0
        %1846 = vmatprep.mubr.bf16.mxu0 0
        %1847 = vmatmul.mubr.bf16.gmra.mrb[0].mxu0 %v1443
        %v1848 = vpop.f32.mrb[0].mxu0
        %v1849 = vadd.f32 0.0, %v1848
        %v1850 = vpop.f32.mrb[0].mxu0
        %v1851 = vpop.f32.mrb[0].mxu0
        %v1852 = vadd.f32 0.0, %v1851
        %v1853 = vpop.f32.mrb[0].mxu0
        %1854 = vdwg.mxu0
        %v1855 = vadd.f32 %v1804, %v1849
        %v1856 = vadd.f32 %v1805, %v1852
        %1857 = vmatprep.subr.bf16.mxu0 0
        %1858 = vmatpush1.bf16.msra.mxu0 %v1812
        %1859 = vmatprep.subr.bf16.mxu0 0
        %1860 = vmatpush1.bf16.msra.mxu0 0
        %1861 = vmatprep.subr.bf16.mxu0 0
        %1862 = vmatpush1.bf16.msra.mxu0 0
        %1863 = vmatprep.subr.bf16.mxu0 0
        %1864 = vmatpush1.bf16.msra.mxu0 0
        %1865 = vmatprep.subr.bf16.mxu0 0
        %1866 = vmatpush1.bf16.msra.mxu0 0
        %1867 = vmatprep.subr.bf16.mxu0 0
        %1868 = vmatpush1.bf16.msra.mxu0 0
        %1869 = vmatprep.subr.bf16.mxu0 0
        %1870 = vmatpush1.bf16.msra.mxu0 0
        %1871 = vmatprep.subr.bf16.mxu0 0
        %1872 = vmatpush1.bf16.msra.mxu0 0
        %1873 = vmatprep.subr.bf16.mxu0 0
        %1874 = vmatpush1.bf16.msra.mxu0 0
        %1875 = vmatprep.subr.bf16.mxu0 0
        %1876 = vmatpush1.bf16.msra.mxu0 0
        %1877 = vmatprep.subr.bf16.mxu0 0
        %1878 = vmatpush1.bf16.msra.mxu0 0
        %1879 = vmatprep.subr.bf16.mxu0 0
        %1880 = vmatpush1.bf16.msra.mxu0 0
        %1881 = vmatprep.subr.bf16.mxu0 0
        %1882 = vmatpush1.bf16.msra.mxu0 0
        %1883 = vmatprep.subr.bf16.mxu0 0
        %1884 = vmatpush1.bf16.msra.mxu0 0
        %1885 = vmatprep.subr.bf16.mxu0 0
        %1886 = vmatpush1.bf16.msra.mxu0 0
        %1887 = vmatprep.subr.bf16.mxu0 0
        %1888 = vmatpush1.bf16.msra.mxu0 0
        %1889 = vmatprep.mubr.bf16.mxu0 0
        %1890 = vmatmul.mubr.bf16.gmra.mrb[0].mxu0 %v1399
        %v1891 = vpop.f32.mrb[0].mxu0
        %v1892 = vadd.f32 0.0, %v1891
        %v1893 = vpop.f32.mrb[0].mxu0
        %v1894 = vpop.f32.mrb[0].mxu0
        %v1895 = vadd.f32 0.0, %v1894
        %v1896 = vpop.f32.mrb[0].mxu0
        %1897 = vdwg.mxu0
        %v1898 = vadd.f32 %v1855, %v1892
        %v1899 = vadd.f32 %v1856, %v1895
        %1900 = vmatprep.subr.bf16.mxu0 0
        %1901 = vmatpush1.bf16.msra.mxu0 %v1812
        %1902 = vmatprep.subr.bf16.mxu0 0
        %1903 = vmatpush1.bf16.msra.mxu0 0
        %1904 = vmatprep.subr.bf16.mxu0 0
        %1905 = vmatpush1.bf16.msra.mxu0 0
        %1906 = vmatprep.subr.bf16.mxu0 0
        %1907 = vmatpush1.bf16.msra.mxu0 0
        %1908 = vmatprep.subr.bf16.mxu0 0
        %1909 = vmatpush1.bf16.msra.mxu0 0
        %1910 = vmatprep.subr.bf16.mxu0 0
        %1911 = vmatpush1.bf16.msra.mxu0 0
        %1912 = vmatprep.subr.bf16.mxu0 0
        %1913 = vmatpush1.bf16.msra.mxu0 0
        %1914 = vmatprep.subr.bf16.mxu0 0
        %1915 = vmatpush1.bf16.msra.mxu0 0
        %1916 = vmatprep.subr.bf16.mxu0 0
        %1917 = vmatpush1.bf16.msra.mxu0 0
        %1918 = vmatprep.subr.bf16.mxu0 0
        %1919 = vmatpush1.bf16.msra.mxu0 0
        %1920 = vmatprep.subr.bf16.mxu0 0
        %1921 = vmatpush1.bf16.msra.mxu0 0
        %1922 = vmatprep.subr.bf16.mxu0 0
        %1923 = vmatpush1.bf16.msra.mxu0 0
        %1924 = vmatprep.subr.bf16.mxu0 0
        %1925 = vmatpush1.bf16.msra.mxu0 0
        %1926 = vmatprep.subr.bf16.mxu0 0
        %1927 = vmatpush1.bf16.msra.mxu0 0
        %1928 = vmatprep.subr.bf16.mxu0 0
        %1929 = vmatpush1.bf16.msra.mxu0 0
        %1930 = vmatprep.subr.bf16.mxu0 0
        %1931 = vmatpush1.bf16.msra.mxu0 0
        %1932 = vmatprep.mubr.bf16.mxu0 0
        %1933 = vmatmul.mubr.bf16.gmra.mrb[0].mxu0 %v1487
        %v1934 = vpop.f32.mrb[0].mxu0
        %v1935 = vadd.f32 0.0, %v1934
        %v1936 = vpop.f32.mrb[0].mxu0
        %v1937 = vpop.f32.mrb[0].mxu0
        %v1938 = vadd.f32 0.0, %v1937
        %v1939 = vpop.f32.mrb[0].mxu0
        %1940 = vdwg.mxu0
        %v1941 = vadd.f32 %v1898, %v1935
        %v1942 = vadd.f32 %v1899, %v1938
        %s1943 = scalar_lea.vmem %s229, 32 [#allocation6]
        %1944 = vst.msk [vmem:[%s1943] sm:$0xff] %vm803, %v1941
        %1945 = vst.msk [vmem:[%s1943 + $0x8] sm:$0xff] %vm803, %v1942
        %s1946 = scalar_lea.vmem %s206, 48 [#allocation2]
        %v1947 = vld [vmem:[%s1946] sm:$0xff]
        %v1948 = vld [vmem:[%s1946 + $0x8] sm:$0xff]
        %v1949 = vpack.c.bf16 %v1948, %v1947
        %v1950 = vunpack.c.l.bf16 %v1949
        %v1951 = vunpack.c.h.bf16 %v1949
        %v1952 = vsub.f32 %v1947, %v1950
        %v1953 = vsub.f32 %v1948, %v1951
        %v1954 = vpack.c.bf16 %v1953, %v1952
        %v1955 = vunpack.c.l.bf16 %v1954
        %v1956 = vunpack.c.h.bf16 %v1954
        %v1957 = vsub.f32 %v1952, %v1955
        %v1958 = vsub.f32 %v1953, %v1956
        %v1959 = vpack.c.bf16 %v1958, %v1957
        %v1960 = vld [vmem:[#allocation4] sm:$0xf]
        %v1961 = vld [vmem:[#allocation4 + $0x4] sm:$0xf]
        %v1964 = vunpack.c.l.b16 %v1960
        %v1965 = vunpack.c.l.b16 %v1961
        %v1966 = vpack.c.b16 %v1965, %v1964
        %v1969 = vsel %vm254, %v1954, 0
        %1971 = vmatprep.subr.bf16.mxu0 0
        %1972 = vmatpush1.bf16.msra.mxu0 %v1966
        %1973 = vmatprep.subr.bf16.mxu0 0
        %1974 = vmatpush1.bf16.msra.mxu0 0
        %1975 = vmatprep.subr.bf16.mxu0 0
        %1976 = vmatpush1.bf16.msra.mxu0 0
        %1977 = vmatprep.subr.bf16.mxu0 0
        %1978 = vmatpush1.bf16.msra.mxu0 0
        %1979 = vmatprep.subr.bf16.mxu0 0
        %1980 = vmatpush1.bf16.msra.mxu0 0
        %1981 = vmatprep.subr.bf16.mxu0 0
        %1982 = vmatpush1.bf16.msra.mxu0 0
        %1983 = vmatprep.subr.bf16.mxu0 0
        %1984 = vmatpush1.bf16.msra.mxu0 0
        %1985 = vmatprep.subr.bf16.mxu0 0
        %1986 = vmatpush1.bf16.msra.mxu0 0
        %1987 = vmatprep.subr.bf16.mxu0 0
        %1988 = vmatpush1.bf16.msra.mxu0 0
        %1989 = vmatprep.subr.bf16.mxu0 0
        %1990 = vmatpush1.bf16.msra.mxu0 0
        %1991 = vmatprep.subr.bf16.mxu0 0
        %1992 = vmatpush1.bf16.msra.mxu0 0
        %1993 = vmatprep.subr.bf16.mxu0 0
        %1994 = vmatpush1.bf16.msra.mxu0 0
        %1995 = vmatprep.subr.bf16.mxu0 0
        %1996 = vmatpush1.bf16.msra.mxu0 0
        %1997 = vmatprep.subr.bf16.mxu0 0
        %1998 = vmatpush1.bf16.msra.mxu0 0
        %1999 = vmatprep.subr.bf16.mxu0 0
        %2000 = vmatpush1.bf16.msra.mxu0 0
        %2001 = vmatprep.subr.bf16.mxu0 0
        %2002 = vmatpush1.bf16.msra.mxu0 0
        %2003 = vmatprep.mubr.bf16.mxu0 0
        %2004 = vmatmul.mubr.bf16.gmra.mrb[0].mxu0 %v1969
        %v2005 = vpop.f32.mrb[0].mxu0
        %v2006 = vadd.f32 0.0, %v2005
        %v2007 = vpop.f32.mrb[0].mxu0
        %v2008 = vpop.f32.mrb[0].mxu0
        %v2009 = vadd.f32 0.0, %v2008
        %v2010 = vpop.f32.mrb[0].mxu0
        %2011 = vdwg.mxu0
        %v2013 = vsel %vm254, %v1949, 0
        %2015 = vmatprep.subr.bf16.mxu0 0
        %2016 = vmatpush1.bf16.msra.mxu0 %v1966
        %2017 = vmatprep.subr.bf16.mxu0 0
        %2018 = vmatpush1.bf16.msra.mxu0 0
        %2019 = vmatprep.subr.bf16.mxu0 0
        %2020 = vmatpush1.bf16.msra.mxu0 0
        %2021 = vmatprep.subr.bf16.mxu0 0
        %2022 = vmatpush1.bf16.msra.mxu0 0
        %2023 = vmatprep.subr.bf16.mxu0 0
        %2024 = vmatpush1.bf16.msra.mxu0 0
        %2025 = vmatprep.subr.bf16.mxu0 0
        %2026 = vmatpush1.bf16.msra.mxu0 0
        %2027 = vmatprep.subr.bf16.mxu0 0
        %2028 = vmatpush1.bf16.msra.mxu0 0
        %2029 = vmatprep.subr.bf16.mxu0 0
        %2030 = vmatpush1.bf16.msra.mxu0 0
        %2031 = vmatprep.subr.bf16.mxu0 0
        %2032 = vmatpush1.bf16.msra.mxu0 0
        %2033 = vmatprep.subr.bf16.mxu0 0
        %2034 = vmatpush1.bf16.msra.mxu0 0
        %2035 = vmatprep.subr.bf16.mxu0 0
        %2036 = vmatpush1.bf16.msra.mxu0 0
        %2037 = vmatprep.subr.bf16.mxu0 0
        %2038 = vmatpush1.bf16.msra.mxu0 0
        %2039 = vmatprep.subr.bf16.mxu0 0
        %2040 = vmatpush1.bf16.msra.mxu0 0
        %2041 = vmatprep.subr.bf16.mxu0 0
        %2042 = vmatpush1.bf16.msra.mxu0 0
        %2043 = vmatprep.subr.bf16.mxu0 0
        %2044 = vmatpush1.bf16.msra.mxu0 0
        %2045 = vmatprep.subr.bf16.mxu0 0
        %2046 = vmatpush1.bf16.msra.mxu0 0
        %2047 = vmatprep.mubr.bf16.mxu0 0
        %2048 = vmatmul.mubr.bf16.gmra.mrb[0].mxu0 %v2013
        %v2049 = vpop.f32.mrb[0].mxu0
        %v2050 = vadd.f32 %v2006, %v2049
        %v2051 = vpop.f32.mrb[0].mxu0
        %v2052 = vpop.f32.mrb[0].mxu0
        %v2053 = vadd.f32 %v2009, %v2052
        %v2054 = vpop.f32.mrb[0].mxu0
        %2055 = vdwg.mxu0
        %v2057 = vsel %vm254, %v1959, 0
        %2059 = vmatprep.subr.bf16.mxu0 0
        %2060 = vmatpush1.bf16.msra.mxu0 %v1966
        %2061 = vmatprep.subr.bf16.mxu0 0
        %2062 = vmatpush1.bf16.msra.mxu0 0
        %2063 = vmatprep.subr.bf16.mxu0 0
        %2064 = vmatpush1.bf16.msra.mxu0 0
        %2065 = vmatprep.subr.bf16.mxu0 0
        %2066 = vmatpush1.bf16.msra.mxu0 0
        %2067 = vmatprep.subr.bf16.mxu0 0
        %2068 = vmatpush1.bf16.msra.mxu0 0
        %2069 = vmatprep.subr.bf16.mxu0 0
        %2070 = vmatpush1.bf16.msra.mxu0 0
        %2071 = vmatprep.subr.bf16.mxu0 0
        %2072 = vmatpush1.bf16.msra.mxu0 0
        %2073 = vmatprep.subr.bf16.mxu0 0
        %2074 = vmatpush1.bf16.msra.mxu0 0
        %2075 = vmatprep.subr.bf16.mxu0 0
        %2076 = vmatpush1.bf16.msra.mxu0 0
        %2077 = vmatprep.subr.bf16.mxu0 0
        %2078 = vmatpush1.bf16.msra.mxu0 0
        %2079 = vmatprep.subr.bf16.mxu0 0
        %2080 = vmatpush1.bf16.msra.mxu0 0
        %2081 = vmatprep.subr.bf16.mxu0 0
        %2082 = vmatpush1.bf16.msra.mxu0 0
        %2083 = vmatprep.subr.bf16.mxu0 0
        %2084 = vmatpush1.bf16.msra.mxu0 0
        %2085 = vmatprep.subr.bf16.mxu0 0
        %2086 = vmatpush1.bf16.msra.mxu0 0
        %2087 = vmatprep.subr.bf16.mxu0 0
        %2088 = vmatpush1.bf16.msra.mxu0 0
        %2089 = vmatprep.subr.bf16.mxu0 0
        %2090 = vmatpush1.bf16.msra.mxu0 0
        %2091 = vmatprep.mubr.bf16.mxu0 0
        %2092 = vmatmul.mubr.bf16.gmra.mrb[0].mxu0 %v2057
        %v2093 = vpop.f32.mrb[0].mxu0
        %v2094 = vadd.f32 0.0, %v2093
        %v2095 = vpop.f32.mrb[0].mxu0
        %v2096 = vpop.f32.mrb[0].mxu0
        %v2097 = vadd.f32 0.0, %v2096
        %v2098 = vpop.f32.mrb[0].mxu0
        %2099 = vdwg.mxu0
        %v2100 = vadd.f32 %v2050, %v2094
        %v2101 = vadd.f32 %v2053, %v2097
        %v2102 = vld [vmem:[%s389] sm:$0xf]
        %v2103 = vld [vmem:[%s389 + $0x4] sm:$0xf]
        %v2106 = vunpack.c.l.b16 %v2102
        %v2107 = vunpack.c.l.b16 %v2103
        %v2108 = vpack.c.b16 %v2107, %v2106
        %2110 = vmatprep.subr.bf16.mxu0 0
        %2111 = vmatpush1.bf16.msra.mxu0 %v2108
        %2112 = vmatprep.subr.bf16.mxu0 0
        %2113 = vmatpush1.bf16.msra.mxu0 0
        %2114 = vmatprep.subr.bf16.mxu0 0
        %2115 = vmatpush1.bf16.msra.mxu0 0
        %2116 = vmatprep.subr.bf16.mxu0 0
        %2117 = vmatpush1.bf16.msra.mxu0 0
        %2118 = vmatprep.subr.bf16.mxu0 0
        %2119 = vmatpush1.bf16.msra.mxu0 0
        %2120 = vmatprep.subr.bf16.mxu0 0
        %2121 = vmatpush1.bf16.msra.mxu0 0
        %2122 = vmatprep.subr.bf16.mxu0 0
        %2123 = vmatpush1.bf16.msra.mxu0 0
        %2124 = vmatprep.subr.bf16.mxu0 0
        %2125 = vmatpush1.bf16.msra.mxu0 0
        %2126 = vmatprep.subr.bf16.mxu0 0
        %2127 = vmatpush1.bf16.msra.mxu0 0
        %2128 = vmatprep.subr.bf16.mxu0 0
        %2129 = vmatpush1.bf16.msra.mxu0 0
        %2130 = vmatprep.subr.bf16.mxu0 0
        %2131 = vmatpush1.bf16.msra.mxu0 0
        %2132 = vmatprep.subr.bf16.mxu0 0
        %2133 = vmatpush1.bf16.msra.mxu0 0
        %2134 = vmatprep.subr.bf16.mxu0 0
        %2135 = vmatpush1.bf16.msra.mxu0 0
        %2136 = vmatprep.subr.bf16.mxu0 0
        %2137 = vmatpush1.bf16.msra.mxu0 0
        %2138 = vmatprep.subr.bf16.mxu0 0
        %2139 = vmatpush1.bf16.msra.mxu0 0
        %2140 = vmatprep.subr.bf16.mxu0 0
        %2141 = vmatpush1.bf16.msra.mxu0 0
        %2142 = vmatprep.mubr.bf16.mxu0 0
        %2143 = vmatmul.mubr.bf16.gmra.mrb[0].mxu0 %v2013
        %v2144 = vpop.f32.mrb[0].mxu0
        %v2145 = vadd.f32 0.0, %v2144
        %v2146 = vpop.f32.mrb[0].mxu0
        %v2147 = vpop.f32.mrb[0].mxu0
        %v2148 = vadd.f32 0.0, %v2147
        %v2149 = vpop.f32.mrb[0].mxu0
        %2150 = vdwg.mxu0
        %v2151 = vadd.f32 %v2100, %v2145
        %v2152 = vadd.f32 %v2101, %v2148
        %2153 = vmatprep.subr.bf16.mxu0 0
        %2154 = vmatpush1.bf16.msra.mxu0 %v2108
        %2155 = vmatprep.subr.bf16.mxu0 0
        %2156 = vmatpush1.bf16.msra.mxu0 0
        %2157 = vmatprep.subr.bf16.mxu0 0
        %2158 = vmatpush1.bf16.msra.mxu0 0
        %2159 = vmatprep.subr.bf16.mxu0 0
        %2160 = vmatpush1.bf16.msra.mxu0 0
        %2161 = vmatprep.subr.bf16.mxu0 0
        %2162 = vmatpush1.bf16.msra.mxu0 0
        %2163 = vmatprep.subr.bf16.mxu0 0
        %2164 = vmatpush1.bf16.msra.mxu0 0
        %2165 = vmatprep.subr.bf16.mxu0 0
        %2166 = vmatpush1.bf16.msra.mxu0 0
        %2167 = vmatprep.subr.bf16.mxu0 0
        %2168 = vmatpush1.bf16.msra.mxu0 0
        %2169 = vmatprep.subr.bf16.mxu0 0
        %2170 = vmatpush1.bf16.msra.mxu0 0
        %2171 = vmatprep.subr.bf16.mxu0 0
        %2172 = vmatpush1.bf16.msra.mxu0 0
        %2173 = vmatprep.subr.bf16.mxu0 0
        %2174 = vmatpush1.bf16.msra.mxu0 0
        %2175 = vmatprep.subr.bf16.mxu0 0
        %2176 = vmatpush1.bf16.msra.mxu0 0
        %2177 = vmatprep.subr.bf16.mxu0 0
        %2178 = vmatpush1.bf16.msra.mxu0 0
        %2179 = vmatprep.subr.bf16.mxu0 0
        %2180 = vmatpush1.bf16.msra.mxu0 0
        %2181 = vmatprep.subr.bf16.mxu0 0
        %2182 = vmatpush1.bf16.msra.mxu0 0
        %2183 = vmatprep.subr.bf16.mxu0 0
        %2184 = vmatpush1.bf16.msra.mxu0 0
        %2185 = vmatprep.mubr.bf16.mxu0 0
        %2186 = vmatmul.mubr.bf16.gmra.mrb[0].mxu0 %v1969
        %v2187 = vpop.f32.mrb[0].mxu0
        %v2188 = vadd.f32 0.0, %v2187
        %v2189 = vpop.f32.mrb[0].mxu0
        %v2190 = vpop.f32.mrb[0].mxu0
        %v2191 = vadd.f32 0.0, %v2190
        %v2192 = vpop.f32.mrb[0].mxu0
        %2193 = vdwg.mxu0
        %v2194 = vadd.f32 %v2151, %v2188
        %v2195 = vadd.f32 %v2152, %v2191
        %2196 = vmatprep.subr.bf16.mxu0 0
        %2197 = vmatpush1.bf16.msra.mxu0 %v2108
        %2198 = vmatprep.subr.bf16.mxu0 0
        %2199 = vmatpush1.bf16.msra.mxu0 0
        %2200 = vmatprep.subr.bf16.mxu0 0
        %2201 = vmatpush1.bf16.msra.mxu0 0
        %2202 = vmatprep.subr.bf16.mxu0 0
        %2203 = vmatpush1.bf16.msra.mxu0 0
        %2204 = vmatprep.subr.bf16.mxu0 0
        %2205 = vmatpush1.bf16.msra.mxu0 0
        %2206 = vmatprep.subr.bf16.mxu0 0
        %2207 = vmatpush1.bf16.msra.mxu0 0
        %2208 = vmatprep.subr.bf16.mxu0 0
        %2209 = vmatpush1.bf16.msra.mxu0 0
        %2210 = vmatprep.subr.bf16.mxu0 0
        %2211 = vmatpush1.bf16.msra.mxu0 0
        %2212 = vmatprep.subr.bf16.mxu0 0
        %2213 = vmatpush1.bf16.msra.mxu0 0
        %2214 = vmatprep.subr.bf16.mxu0 0
        %2215 = vmatpush1.bf16.msra.mxu0 0
        %2216 = vmatprep.subr.bf16.mxu0 0
        %2217 = vmatpush1.bf16.msra.mxu0 0
        %2218 = vmatprep.subr.bf16.mxu0 0
        %2219 = vmatpush1.bf16.msra.mxu0 0
        %2220 = vmatprep.subr.bf16.mxu0 0
        %2221 = vmatpush1.bf16.msra.mxu0 0
        %2222 = vmatprep.subr.bf16.mxu0 0
        %2223 = vmatpush1.bf16.msra.mxu0 0
        %2224 = vmatprep.subr.bf16.mxu0 0
        %2225 = vmatpush1.bf16.msra.mxu0 0
        %2226 = vmatprep.subr.bf16.mxu0 0
        %2227 = vmatpush1.bf16.msra.mxu0 0
        %2228 = vmatprep.mubr.bf16.mxu0 0
        %2229 = vmatmul.mubr.bf16.gmra.mrb[0].mxu0 %v2057
        %v2230 = vpop.f32.mrb[0].mxu0
        %v2231 = vadd.f32 0.0, %v2230
        %v2232 = vpop.f32.mrb[0].mxu0
        %v2233 = vpop.f32.mrb[0].mxu0
        %v2234 = vadd.f32 0.0, %v2233
        %v2235 = vpop.f32.mrb[0].mxu0
        %2236 = vdwg.mxu0
        %v2237 = vadd.f32 %v2194, %v2231
        %v2238 = vadd.f32 %v2195, %v2234
        %v2239 = vld [vmem:[%s527] sm:$0xf]
        %v2240 = vld [vmem:[%s527 + $0x4] sm:$0xf]
        %v2243 = vunpack.c.l.b16 %v2239
        %v2244 = vunpack.c.l.b16 %v2240
        %v2245 = vpack.c.b16 %v2244, %v2243
        %2247 = vmatprep.subr.bf16.mxu0 0
        %2248 = vmatpush1.bf16.msra.mxu0 %v2245
        %2249 = vmatprep.subr.bf16.mxu0 0
        %2250 = vmatpush1.bf16.msra.mxu0 0
        %2251 = vmatprep.subr.bf16.mxu0 0
        %2252 = vmatpush1.bf16.msra.mxu0 0
        %2253 = vmatprep.subr.bf16.mxu0 0
        %2254 = vmatpush1.bf16.msra.mxu0 0
        %2255 = vmatprep.subr.bf16.mxu0 0
        %2256 = vmatpush1.bf16.msra.mxu0 0
        %2257 = vmatprep.subr.bf16.mxu0 0
        %2258 = vmatpush1.bf16.msra.mxu0 0
        %2259 = vmatprep.subr.bf16.mxu0 0
        %2260 = vmatpush1.bf16.msra.mxu0 0
        %2261 = vmatprep.subr.bf16.mxu0 0
        %2262 = vmatpush1.bf16.msra.mxu0 0
        %2263 = vmatprep.subr.bf16.mxu0 0
        %2264 = vmatpush1.bf16.msra.mxu0 0
        %2265 = vmatprep.subr.bf16.mxu0 0
        %2266 = vmatpush1.bf16.msra.mxu0 0
        %2267 = vmatprep.subr.bf16.mxu0 0
        %2268 = vmatpush1.bf16.msra.mxu0 0
        %2269 = vmatprep.subr.bf16.mxu0 0
        %2270 = vmatpush1.bf16.msra.mxu0 0
        %2271 = vmatprep.subr.bf16.mxu0 0
        %2272 = vmatpush1.bf16.msra.mxu0 0
        %2273 = vmatprep.subr.bf16.mxu0 0
        %2274 = vmatpush1.bf16.msra.mxu0 0
        %2275 = vmatprep.subr.bf16.mxu0 0
        %2276 = vmatpush1.bf16.msra.mxu0 0
        %2277 = vmatprep.subr.bf16.mxu0 0
        %2278 = vmatpush1.bf16.msra.mxu0 0
        %2279 = vmatprep.mubr.bf16.mxu0 0
        %2280 = vmatmul.mubr.bf16.gmra.mrb[0].mxu0 %v2013
        %v2281 = vpop.f32.mrb[0].mxu0
        %v2282 = vadd.f32 0.0, %v2281
        %v2283 = vpop.f32.mrb[0].mxu0
        %v2284 = vpop.f32.mrb[0].mxu0
        %v2285 = vadd.f32 0.0, %v2284
        %v2286 = vpop.f32.mrb[0].mxu0
        %2287 = vdwg.mxu0
        %v2288 = vadd.f32 %v2237, %v2282
        %v2289 = vadd.f32 %v2238, %v2285
        %2290 = vmatprep.subr.bf16.mxu0 0
        %2291 = vmatpush1.bf16.msra.mxu0 %v2245
        %2292 = vmatprep.subr.bf16.mxu0 0
        %2293 = vmatpush1.bf16.msra.mxu0 0
        %2294 = vmatprep.subr.bf16.mxu0 0
        %2295 = vmatpush1.bf16.msra.mxu0 0
        %2296 = vmatprep.subr.bf16.mxu0 0
        %2297 = vmatpush1.bf16.msra.mxu0 0
        %2298 = vmatprep.subr.bf16.mxu0 0
        %2299 = vmatpush1.bf16.msra.mxu0 0
        %2300 = vmatprep.subr.bf16.mxu0 0
        %2301 = vmatpush1.bf16.msra.mxu0 0
        %2302 = vmatprep.subr.bf16.mxu0 0
        %2303 = vmatpush1.bf16.msra.mxu0 0
        %2304 = vmatprep.subr.bf16.mxu0 0
        %2305 = vmatpush1.bf16.msra.mxu0 0
        %2306 = vmatprep.subr.bf16.mxu0 0
        %2307 = vmatpush1.bf16.msra.mxu0 0
        %2308 = vmatprep.subr.bf16.mxu0 0
        %2309 = vmatpush1.bf16.msra.mxu0 0
        %2310 = vmatprep.subr.bf16.mxu0 0
        %2311 = vmatpush1.bf16.msra.mxu0 0
        %2312 = vmatprep.subr.bf16.mxu0 0
        %2313 = vmatpush1.bf16.msra.mxu0 0
        %2314 = vmatprep.subr.bf16.mxu0 0
        %2315 = vmatpush1.bf16.msra.mxu0 0
        %2316 = vmatprep.subr.bf16.mxu0 0
        %2317 = vmatpush1.bf16.msra.mxu0 0
        %2318 = vmatprep.subr.bf16.mxu0 0
        %2319 = vmatpush1.bf16.msra.mxu0 0
        %2320 = vmatprep.subr.bf16.mxu0 0
        %2321 = vmatpush1.bf16.msra.mxu0 0
        %2322 = vmatprep.mubr.bf16.mxu0 0
        %2323 = vmatmul.mubr.bf16.gmra.mrb[0].mxu0 %v1969
        %v2324 = vpop.f32.mrb[0].mxu0
        %v2325 = vadd.f32 0.0, %v2324
        %v2326 = vpop.f32.mrb[0].mxu0
        %v2327 = vpop.f32.mrb[0].mxu0
        %v2328 = vadd.f32 0.0, %v2327
        %v2329 = vpop.f32.mrb[0].mxu0
        %2330 = vdwg.mxu0
        %v2331 = vadd.f32 %v2288, %v2325
        %v2332 = vadd.f32 %v2289, %v2328
        %2333 = vmatprep.subr.bf16.mxu0 0
        %2334 = vmatpush1.bf16.msra.mxu0 %v2245
        %2335 = vmatprep.subr.bf16.mxu0 0
        %2336 = vmatpush1.bf16.msra.mxu0 0
        %2337 = vmatprep.subr.bf16.mxu0 0
        %2338 = vmatpush1.bf16.msra.mxu0 0
        %2339 = vmatprep.subr.bf16.mxu0 0
        %2340 = vmatpush1.bf16.msra.mxu0 0
        %2341 = vmatprep.subr.bf16.mxu0 0
        %2342 = vmatpush1.bf16.msra.mxu0 0
        %2343 = vmatprep.subr.bf16.mxu0 0
        %2344 = vmatpush1.bf16.msra.mxu0 0
        %2345 = vmatprep.subr.bf16.mxu0 0
        %2346 = vmatpush1.bf16.msra.mxu0 0
        %2347 = vmatprep.subr.bf16.mxu0 0
        %2348 = vmatpush1.bf16.msra.mxu0 0
        %2349 = vmatprep.subr.bf16.mxu0 0
        %2350 = vmatpush1.bf16.msra.mxu0 0
        %2351 = vmatprep.subr.bf16.mxu0 0
        %2352 = vmatpush1.bf16.msra.mxu0 0
        %2353 = vmatprep.subr.bf16.mxu0 0
        %2354 = vmatpush1.bf16.msra.mxu0 0
        %2355 = vmatprep.subr.bf16.mxu0 0
        %2356 = vmatpush1.bf16.msra.mxu0 0
        %2357 = vmatprep.subr.bf16.mxu0 0
        %2358 = vmatpush1.bf16.msra.mxu0 0
        %2359 = vmatprep.subr.bf16.mxu0 0
        %2360 = vmatpush1.bf16.msra.mxu0 0
        %2361 = vmatprep.subr.bf16.mxu0 0
        %2362 = vmatpush1.bf16.msra.mxu0 0
        %2363 = vmatprep.subr.bf16.mxu0 0
        %2364 = vmatpush1.bf16.msra.mxu0 0
        %2365 = vmatprep.mubr.bf16.mxu0 0
        %2366 = vmatmul.mubr.bf16.gmra.mrb[0].mxu0 %v2057
        %v2367 = vpop.f32.mrb[0].mxu0
        %v2368 = vadd.f32 0.0, %v2367
        %v2369 = vpop.f32.mrb[0].mxu0
        %v2370 = vpop.f32.mrb[0].mxu0
        %v2371 = vadd.f32 0.0, %v2370
        %v2372 = vpop.f32.mrb[0].mxu0
        %2373 = vdwg.mxu0
        %v2374 = vadd.f32 %v2331, %v2368
        %v2375 = vadd.f32 %v2332, %v2371
        %v2376 = vld [vmem:[%s665] sm:$0xf]
        %v2377 = vld [vmem:[%s665 + $0x4] sm:$0xf]
        %v2380 = vunpack.c.l.b16 %v2376
        %v2381 = vunpack.c.l.b16 %v2377
        %v2382 = vpack.c.b16 %v2381, %v2380
        %2384 = vmatprep.subr.bf16.mxu0 0
        %2385 = vmatpush1.bf16.msra.mxu0 %v2382
        %2386 = vmatprep.subr.bf16.mxu0 0
        %2387 = vmatpush1.bf16.msra.mxu0 0
        %2388 = vmatprep.subr.bf16.mxu0 0
        %2389 = vmatpush1.bf16.msra.mxu0 0
        %2390 = vmatprep.subr.bf16.mxu0 0
        %2391 = vmatpush1.bf16.msra.mxu0 0
        %2392 = vmatprep.subr.bf16.mxu0 0
        %2393 = vmatpush1.bf16.msra.mxu0 0
        %2394 = vmatprep.subr.bf16.mxu0 0
        %2395 = vmatpush1.bf16.msra.mxu0 0
        %2396 = vmatprep.subr.bf16.mxu0 0
        %2397 = vmatpush1.bf16.msra.mxu0 0
        %2398 = vmatprep.subr.bf16.mxu0 0
        %2399 = vmatpush1.bf16.msra.mxu0 0
        %2400 = vmatprep.subr.bf16.mxu0 0
        %2401 = vmatpush1.bf16.msra.mxu0 0
        %2402 = vmatprep.subr.bf16.mxu0 0
        %2403 = vmatpush1.bf16.msra.mxu0 0
        %2404 = vmatprep.subr.bf16.mxu0 0
        %2405 = vmatpush1.bf16.msra.mxu0 0
        %2406 = vmatprep.subr.bf16.mxu0 0
        %2407 = vmatpush1.bf16.msra.mxu0 0
        %2408 = vmatprep.subr.bf16.mxu0 0
        %2409 = vmatpush1.bf16.msra.mxu0 0
        %2410 = vmatprep.subr.bf16.mxu0 0
        %2411 = vmatpush1.bf16.msra.mxu0 0
        %2412 = vmatprep.subr.bf16.mxu0 0
        %2413 = vmatpush1.bf16.msra.mxu0 0
        %2414 = vmatprep.subr.bf16.mxu0 0
        %2415 = vmatpush1.bf16.msra.mxu0 0
        %2416 = vmatprep.mubr.bf16.mxu0 0
        %2417 = vmatmul.mubr.bf16.gmra.mrb[0].mxu0 %v2013
        %v2418 = vpop.f32.mrb[0].mxu0
        %v2419 = vadd.f32 0.0, %v2418
        %v2420 = vpop.f32.mrb[0].mxu0
        %v2421 = vpop.f32.mrb[0].mxu0
        %v2422 = vadd.f32 0.0, %v2421
        %v2423 = vpop.f32.mrb[0].mxu0
        %2424 = vdwg.mxu0
        %v2425 = vadd.f32 %v2374, %v2419
        %v2426 = vadd.f32 %v2375, %v2422
        %2427 = vmatprep.subr.bf16.mxu0 0
        %2428 = vmatpush1.bf16.msra.mxu0 %v2382
        %2429 = vmatprep.subr.bf16.mxu0 0
        %2430 = vmatpush1.bf16.msra.mxu0 0
        %2431 = vmatprep.subr.bf16.mxu0 0
        %2432 = vmatpush1.bf16.msra.mxu0 0
        %2433 = vmatprep.subr.bf16.mxu0 0
        %2434 = vmatpush1.bf16.msra.mxu0 0
        %2435 = vmatprep.subr.bf16.mxu0 0
        %2436 = vmatpush1.bf16.msra.mxu0 0
        %2437 = vmatprep.subr.bf16.mxu0 0
        %2438 = vmatpush1.bf16.msra.mxu0 0
        %2439 = vmatprep.subr.bf16.mxu0 0
        %2440 = vmatpush1.bf16.msra.mxu0 0
        %2441 = vmatprep.subr.bf16.mxu0 0
        %2442 = vmatpush1.bf16.msra.mxu0 0
        %2443 = vmatprep.subr.bf16.mxu0 0
        %2444 = vmatpush1.bf16.msra.mxu0 0
        %2445 = vmatprep.subr.bf16.mxu0 0
        %2446 = vmatpush1.bf16.msra.mxu0 0
        %2447 = vmatprep.subr.bf16.mxu0 0
        %2448 = vmatpush1.bf16.msra.mxu0 0
        %2449 = vmatprep.subr.bf16.mxu0 0
        %2450 = vmatpush1.bf16.msra.mxu0 0
        %2451 = vmatprep.subr.bf16.mxu0 0
        %2452 = vmatpush1.bf16.msra.mxu0 0
        %2453 = vmatprep.subr.bf16.mxu0 0
        %2454 = vmatpush1.bf16.msra.mxu0 0
        %2455 = vmatprep.subr.bf16.mxu0 0
        %2456 = vmatpush1.bf16.msra.mxu0 0
        %2457 = vmatprep.subr.bf16.mxu0 0
        %2458 = vmatpush1.bf16.msra.mxu0 0
        %2459 = vmatprep.mubr.bf16.mxu0 0
        %2460 = vmatmul.mubr.bf16.gmra.mrb[0].mxu0 %v1969
        %v2461 = vpop.f32.mrb[0].mxu0
        %v2462 = vadd.f32 0.0, %v2461
        %v2463 = vpop.f32.mrb[0].mxu0
        %v2464 = vpop.f32.mrb[0].mxu0
        %v2465 = vadd.f32 0.0, %v2464
        %v2466 = vpop.f32.mrb[0].mxu0
        %2467 = vdwg.mxu0
        %v2468 = vadd.f32 %v2425, %v2462
        %v2469 = vadd.f32 %v2426, %v2465
        %2470 = vmatprep.subr.bf16.mxu0 0
        %2471 = vmatpush1.bf16.msra.mxu0 %v2382
        %2472 = vmatprep.subr.bf16.mxu0 0
        %2473 = vmatpush1.bf16.msra.mxu0 0
        %2474 = vmatprep.subr.bf16.mxu0 0
        %2475 = vmatpush1.bf16.msra.mxu0 0
        %2476 = vmatprep.subr.bf16.mxu0 0
        %2477 = vmatpush1.bf16.msra.mxu0 0
        %2478 = vmatprep.subr.bf16.mxu0 0
        %2479 = vmatpush1.bf16.msra.mxu0 0
        %2480 = vmatprep.subr.bf16.mxu0 0
        %2481 = vmatpush1.bf16.msra.mxu0 0
        %2482 = vmatprep.subr.bf16.mxu0 0
        %2483 = vmatpush1.bf16.msra.mxu0 0
        %2484 = vmatprep.subr.bf16.mxu0 0
        %2485 = vmatpush1.bf16.msra.mxu0 0
        %2486 = vmatprep.subr.bf16.mxu0 0
        %2487 = vmatpush1.bf16.msra.mxu0 0
        %2488 = vmatprep.subr.bf16.mxu0 0
        %2489 = vmatpush1.bf16.msra.mxu0 0
        %2490 = vmatprep.subr.bf16.mxu0 0
        %2491 = vmatpush1.bf16.msra.mxu0 0
        %2492 = vmatprep.subr.bf16.mxu0 0
        %2493 = vmatpush1.bf16.msra.mxu0 0
        %2494 = vmatprep.subr.bf16.mxu0 0
        %2495 = vmatpush1.bf16.msra.mxu0 0
        %2496 = vmatprep.subr.bf16.mxu0 0
        %2497 = vmatpush1.bf16.msra.mxu0 0
        %2498 = vmatprep.subr.bf16.mxu0 0
        %2499 = vmatpush1.bf16.msra.mxu0 0
        %2500 = vmatprep.subr.bf16.mxu0 0
        %2501 = vmatpush1.bf16.msra.mxu0 0
        %2502 = vmatprep.mubr.bf16.mxu0 0
        %2503 = vmatmul.mubr.bf16.gmra.mrb[0].mxu0 %v2057
        %v2504 = vpop.f32.mrb[0].mxu0
        %v2505 = vadd.f32 0.0, %v2504
        %v2506 = vpop.f32.mrb[0].mxu0
        %v2507 = vpop.f32.mrb[0].mxu0
        %v2508 = vadd.f32 0.0, %v2507
        %v2509 = vpop.f32.mrb[0].mxu0
        %2510 = vdwg.mxu0
        %v2511 = vadd.f32 %v2468, %v2505
        %v2512 = vadd.f32 %v2469, %v2508
        %s2513 = scalar_lea.vmem %s229, 48 [#allocation6]
        %2514 = vst.msk [vmem:[%s2513] sm:$0xff] %vm803, %v2511
        %2515 = vst.msk [vmem:[%s2513 + $0x8] sm:$0xff] %vm803, %v2512
        %s2516 = scalar_lea.vmem %s206, 64 [#allocation2]
        %v2517 = vld [vmem:[%s2516] sm:$0xff]
        %v2518 = vld [vmem:[%s2516 + $0x8] sm:$0xff]
        %v2519 = vpack.c.bf16 %v2518, %v2517
        %v2520 = vunpack.c.l.bf16 %v2519
        %v2521 = vunpack.c.h.bf16 %v2519
        %v2522 = vsub.f32 %v2517, %v2520
        %v2523 = vsub.f32 %v2518, %v2521
        %v2524 = vpack.c.bf16 %v2523, %v2522
        %v2525 = vunpack.c.l.bf16 %v2524
        %v2526 = vunpack.c.h.bf16 %v2524
        %v2527 = vsub.f32 %v2522, %v2525
        %v2528 = vsub.f32 %v2523, %v2526
        %v2529 = vpack.c.bf16 %v2528, %v2527
        %v2530 = vld [vmem:[#allocation4] sm:$0xf]
        %v2531 = vld [vmem:[#allocation4 + $0x4] sm:$0xf]
        %v2534 = vunpack.c.l.b16 %v2530
        %v2535 = vunpack.c.l.b16 %v2531
        %v2536 = vpack.c.b16 %v2535, %v2534
        %v2539 = vsel %vm254, %v2524, 0
        %2541 = vmatprep.subr.bf16.mxu0 0
        %2542 = vmatpush1.bf16.msra.mxu0 %v2536
        %2543 = vmatprep.subr.bf16.mxu0 0
        %2544 = vmatpush1.bf16.msra.mxu0 0
        %2545 = vmatprep.subr.bf16.mxu0 0
        %2546 = vmatpush1.bf16.msra.mxu0 0
        %2547 = vmatprep.subr.bf16.mxu0 0
        %2548 = vmatpush1.bf16.msra.mxu0 0
        %2549 = vmatprep.subr.bf16.mxu0 0
        %2550 = vmatpush1.bf16.msra.mxu0 0
        %2551 = vmatprep.subr.bf16.mxu0 0
        %2552 = vmatpush1.bf16.msra.mxu0 0
        %2553 = vmatprep.subr.bf16.mxu0 0
        %2554 = vmatpush1.bf16.msra.mxu0 0
        %2555 = vmatprep.subr.bf16.mxu0 0
        %2556 = vmatpush1.bf16.msra.mxu0 0
        %2557 = vmatprep.subr.bf16.mxu0 0
        %2558 = vmatpush1.bf16.msra.mxu0 0
        %2559 = vmatprep.subr.bf16.mxu0 0
        %2560 = vmatpush1.bf16.msra.mxu0 0
        %2561 = vmatprep.subr.bf16.mxu0 0
        %2562 = vmatpush1.bf16.msra.mxu0 0
        %2563 = vmatprep.subr.bf16.mxu0 0
        %2564 = vmatpush1.bf16.msra.mxu0 0
        %2565 = vmatprep.subr.bf16.mxu0 0
        %2566 = vmatpush1.bf16.msra.mxu0 0
        %2567 = vmatprep.subr.bf16.mxu0 0
        %2568 = vmatpush1.bf16.msra.mxu0 0
        %2569 = vmatprep.subr.bf16.mxu0 0
        %2570 = vmatpush1.bf16.msra.mxu0 0
        %2571 = vmatprep.subr.bf16.mxu0 0
        %2572 = vmatpush1.bf16.msra.mxu0 0
        %2573 = vmatprep.mubr.bf16.mxu0 0
        %2574 = vmatmul.mubr.bf16.gmra.mrb[0].mxu0 %v2539
        %v2575 = vpop.f32.mrb[0].mxu0
        %v2576 = vadd.f32 0.0, %v2575
        %v2577 = vpop.f32.mrb[0].mxu0
        %v2578 = vpop.f32.mrb[0].mxu0
        %v2579 = vadd.f32 0.0, %v2578
        %v2580 = vpop.f32.mrb[0].mxu0
        %2581 = vdwg.mxu0
        %v2583 = vsel %vm254, %v2519, 0
        %2585 = vmatprep.subr.bf16.mxu0 0
        %2586 = vmatpush1.bf16.msra.mxu0 %v2536
        %2587 = vmatprep.subr.bf16.mxu0 0
        %2588 = vmatpush1.bf16.msra.mxu0 0
        %2589 = vmatprep.subr.bf16.mxu0 0
        %2590 = vmatpush1.bf16.msra.mxu0 0
        %2591 = vmatprep.subr.bf16.mxu0 0
        %2592 = vmatpush1.bf16.msra.mxu0 0
        %2593 = vmatprep.subr.bf16.mxu0 0
        %2594 = vmatpush1.bf16.msra.mxu0 0
        %2595 = vmatprep.subr.bf16.mxu0 0
        %2596 = vmatpush1.bf16.msra.mxu0 0
        %2597 = vmatprep.subr.bf16.mxu0 0
        %2598 = vmatpush1.bf16.msra.mxu0 0
        %2599 = vmatprep.subr.bf16.mxu0 0
        %2600 = vmatpush1.bf16.msra.mxu0 0
        %2601 = vmatprep.subr.bf16.mxu0 0
        %2602 = vmatpush1.bf16.msra.mxu0 0
        %2603 = vmatprep.subr.bf16.mxu0 0
        %2604 = vmatpush1.bf16.msra.mxu0 0
        %2605 = vmatprep.subr.bf16.mxu0 0
        %2606 = vmatpush1.bf16.msra.mxu0 0
        %2607 = vmatprep.subr.bf16.mxu0 0
        %2608 = vmatpush1.bf16.msra.mxu0 0
        %2609 = vmatprep.subr.bf16.mxu0 0
        %2610 = vmatpush1.bf16.msra.mxu0 0
        %2611 = vmatprep.subr.bf16.mxu0 0
        %2612 = vmatpush1.bf16.msra.mxu0 0
        %2613 = vmatprep.subr.bf16.mxu0 0
        %2614 = vmatpush1.bf16.msra.mxu0 0
        %2615 = vmatprep.subr.bf16.mxu0 0
        %2616 = vmatpush1.bf16.msra.mxu0 0
        %2617 = vmatprep.mubr.bf16.mxu0 0
        %2618 = vmatmul.mubr.bf16.gmra.mrb[0].mxu0 %v2583
        %v2619 = vpop.f32.mrb[0].mxu0
        %v2620 = vadd.f32 %v2576, %v2619
        %v2621 = vpop.f32.mrb[0].mxu0
        %v2622 = vpop.f32.mrb[0].mxu0
        %v2623 = vadd.f32 %v2579, %v2622
        %v2624 = vpop.f32.mrb[0].mxu0
        %2625 = vdwg.mxu0
        %v2627 = vsel %vm254, %v2529, 0
        %2629 = vmatprep.subr.bf16.mxu0 0
        %2630 = vmatpush1.bf16.msra.mxu0 %v2536
        %2631 = vmatprep.subr.bf16.mxu0 0
        %2632 = vmatpush1.bf16.msra.mxu0 0
        %2633 = vmatprep.subr.bf16.mxu0 0
        %2634 = vmatpush1.bf16.msra.mxu0 0
        %2635 = vmatprep.subr.bf16.mxu0 0
        %2636 = vmatpush1.bf16.msra.mxu0 0
        %2637 = vmatprep.subr.bf16.mxu0 0
        %2638 = vmatpush1.bf16.msra.mxu0 0
        %2639 = vmatprep.subr.bf16.mxu0 0
        %2640 = vmatpush1.bf16.msra.mxu0 0
        %2641 = vmatprep.subr.bf16.mxu0 0
        %2642 = vmatpush1.bf16.msra.mxu0 0
        %2643 = vmatprep.subr.bf16.mxu0 0
        %2644 = vmatpush1.bf16.msra.mxu0 0
        %2645 = vmatprep.subr.bf16.mxu0 0
        %2646 = vmatpush1.bf16.msra.mxu0 0
        %2647 = vmatprep.subr.bf16.mxu0 0
        %2648 = vmatpush1.bf16.msra.mxu0 0
        %2649 = vmatprep.subr.bf16.mxu0 0
        %2650 = vmatpush1.bf16.msra.mxu0 0
        %2651 = vmatprep.subr.bf16.mxu0 0
        %2652 = vmatpush1.bf16.msra.mxu0 0
        %2653 = vmatprep.subr.bf16.mxu0 0
        %2654 = vmatpush1.bf16.msra.mxu0 0
        %2655 = vmatprep.subr.bf16.mxu0 0
        %2656 = vmatpush1.bf16.msra.mxu0 0
        %2657 = vmatprep.subr.bf16.mxu0 0
        %2658 = vmatpush1.bf16.msra.mxu0 0
        %2659 = vmatprep.subr.bf16.mxu0 0
        %2660 = vmatpush1.bf16.msra.mxu0 0
        %2661 = vmatprep.mubr.bf16.mxu0 0
        %2662 = vmatmul.mubr.bf16.gmra.mrb[0].mxu0 %v2627
        %v2663 = vpop.f32.mrb[0].mxu0
        %v2664 = vadd.f32 0.0, %v2663
        %v2665 = vpop.f32.mrb[0].mxu0
        %v2666 = vpop.f32.mrb[0].mxu0
        %v2667 = vadd.f32 0.0, %v2666
        %v2668 = vpop.f32.mrb[0].mxu0
        %2669 = vdwg.mxu0
        %v2670 = vadd.f32 %v2620, %v2664
        %v2671 = vadd.f32 %v2623, %v2667
        %v2672 = vld [vmem:[%s389] sm:$0xf]
        %v2673 = vld [vmem:[%s389 + $0x4] sm:$0xf]
        %v2676 = vunpack.c.l.b16 %v2672
        %v2677 = vunpack.c.l.b16 %v2673
        %v2678 = vpack.c.b16 %v2677, %v2676
        %2680 = vmatprep.subr.bf16.mxu0 0
        %2681 = vmatpush1.bf16.msra.mxu0 %v2678
        %2682 = vmatprep.subr.bf16.mxu0 0
        %2683 = vmatpush1.bf16.msra.mxu0 0
        %2684 = vmatprep.subr.bf16.mxu0 0
        %2685 = vmatpush1.bf16.msra.mxu0 0
        %2686 = vmatprep.subr.bf16.mxu0 0
        %2687 = vmatpush1.bf16.msra.mxu0 0
        %2688 = vmatprep.subr.bf16.mxu0 0
        %2689 = vmatpush1.bf16.msra.mxu0 0
        %2690 = vmatprep.subr.bf16.mxu0 0
        %2691 = vmatpush1.bf16.msra.mxu0 0
        %2692 = vmatprep.subr.bf16.mxu0 0
        %2693 = vmatpush1.bf16.msra.mxu0 0
        %2694 = vmatprep.subr.bf16.mxu0 0
        %2695 = vmatpush1.bf16.msra.mxu0 0
        %2696 = vmatprep.subr.bf16.mxu0 0
        %2697 = vmatpush1.bf16.msra.mxu0 0
        %2698 = vmatprep.subr.bf16.mxu0 0
        %2699 = vmatpush1.bf16.msra.mxu0 0
        %2700 = vmatprep.subr.bf16.mxu0 0
        %2701 = vmatpush1.bf16.msra.mxu0 0
        %2702 = vmatprep.subr.bf16.mxu0 0
        %2703 = vmatpush1.bf16.msra.mxu0 0
        %2704 = vmatprep.subr.bf16.mxu0 0
        %2705 = vmatpush1.bf16.msra.mxu0 0
        %2706 = vmatprep.subr.bf16.mxu0 0
        %2707 = vmatpush1.bf16.msra.mxu0 0
        %2708 = vmatprep.subr.bf16.mxu0 0
        %2709 = vmatpush1.bf16.msra.mxu0 0
        %2710 = vmatprep.subr.bf16.mxu0 0
        %2711 = vmatpush1.bf16.msra.mxu0 0
        %2712 = vmatprep.mubr.bf16.mxu0 0
        %2713 = vmatmul.mubr.bf16.gmra.mrb[0].mxu0 %v2583
        %v2714 = vpop.f32.mrb[0].mxu0
        %v2715 = vadd.f32 0.0, %v2714
        %v2716 = vpop.f32.mrb[0].mxu0
        %v2717 = vpop.f32.mrb[0].mxu0
        %v2718 = vadd.f32 0.0, %v2717
        %v2719 = vpop.f32.mrb[0].mxu0
        %2720 = vdwg.mxu0
        %v2721 = vadd.f32 %v2670, %v2715
        %v2722 = vadd.f32 %v2671, %v2718
        %2723 = vmatprep.subr.bf16.mxu0 0
        %2724 = vmatpush1.bf16.msra.mxu0 %v2678
        %2725 = vmatprep.subr.bf16.mxu0 0
        %2726 = vmatpush1.bf16.msra.mxu0 0
        %2727 = vmatprep.subr.bf16.mxu0 0
        %2728 = vmatpush1.bf16.msra.mxu0 0
        %2729 = vmatprep.subr.bf16.mxu0 0
        %2730 = vmatpush1.bf16.msra.mxu0 0
        %2731 = vmatprep.subr.bf16.mxu0 0
        %2732 = vmatpush1.bf16.msra.mxu0 0
        %2733 = vmatprep.subr.bf16.mxu0 0
        %2734 = vmatpush1.bf16.msra.mxu0 0
        %2735 = vmatprep.subr.bf16.mxu0 0
        %2736 = vmatpush1.bf16.msra.mxu0 0
        %2737 = vmatprep.subr.bf16.mxu0 0
        %2738 = vmatpush1.bf16.msra.mxu0 0
        %2739 = vmatprep.subr.bf16.mxu0 0
        %2740 = vmatpush1.bf16.msra.mxu0 0
        %2741 = vmatprep.subr.bf16.mxu0 0
        %2742 = vmatpush1.bf16.msra.mxu0 0
        %2743 = vmatprep.subr.bf16.mxu0 0
        %2744 = vmatpush1.bf16.msra.mxu0 0
        %2745 = vmatprep.subr.bf16.mxu0 0
        %2746 = vmatpush1.bf16.msra.mxu0 0
        %2747 = vmatprep.subr.bf16.mxu0 0
        %2748 = vmatpush1.bf16.msra.mxu0 0
        %2749 = vmatprep.subr.bf16.mxu0 0
        %2750 = vmatpush1.bf16.msra.mxu0 0
        %2751 = vmatprep.subr.bf16.mxu0 0
        %2752 = vmatpush1.bf16.msra.mxu0 0
        %2753 = vmatprep.subr.bf16.mxu0 0
        %2754 = vmatpush1.bf16.msra.mxu0 0
        %2755 = vmatprep.mubr.bf16.mxu0 0
        %2756 = vmatmul.mubr.bf16.gmra.mrb[0].mxu0 %v2539
        %v2757 = vpop.f32.mrb[0].mxu0
        %v2758 = vadd.f32 0.0, %v2757
        %v2759 = vpop.f32.mrb[0].mxu0
        %v2760 = vpop.f32.mrb[0].mxu0
        %v2761 = vadd.f32 0.0, %v2760
        %v2762 = vpop.f32.mrb[0].mxu0
        %2763 = vdwg.mxu0
        %v2764 = vadd.f32 %v2721, %v2758
        %v2765 = vadd.f32 %v2722, %v2761
        %2766 = vmatprep.subr.bf16.mxu0 0
        %2767 = vmatpush1.bf16.msra.mxu0 %v2678
        %2768 = vmatprep.subr.bf16.mxu0 0
        %2769 = vmatpush1.bf16.msra.mxu0 0
        %2770 = vmatprep.subr.bf16.mxu0 0
        %2771 = vmatpush1.bf16.msra.mxu0 0
        %2772 = vmatprep.subr.bf16.mxu0 0
        %2773 = vmatpush1.bf16.msra.mxu0 0
        %2774 = vmatprep.subr.bf16.mxu0 0
        %2775 = vmatpush1.bf16.msra.mxu0 0
        %2776 = vmatprep.subr.bf16.mxu0 0
        %2777 = vmatpush1.bf16.msra.mxu0 0
        %2778 = vmatprep.subr.bf16.mxu0 0
        %2779 = vmatpush1.bf16.msra.mxu0 0
        %2780 = vmatprep.subr.bf16.mxu0 0
        %2781 = vmatpush1.bf16.msra.mxu0 0
        %2782 = vmatprep.subr.bf16.mxu0 0
        %2783 = vmatpush1.bf16.msra.mxu0 0
        %2784 = vmatprep.subr.bf16.mxu0 0
        %2785 = vmatpush1.bf16.msra.mxu0 0
        %2786 = vmatprep.subr.bf16.mxu0 0
        %2787 = vmatpush1.bf16.msra.mxu0 0
        %2788 = vmatprep.subr.bf16.mxu0 0
        %2789 = vmatpush1.bf16.msra.mxu0 0
        %2790 = vmatprep.subr.bf16.mxu0 0
        %2791 = vmatpush1.bf16.msra.mxu0 0
        %2792 = vmatprep.subr.bf16.mxu0 0
        %2793 = vmatpush1.bf16.msra.mxu0 0
        %2794 = vmatprep.subr.bf16.mxu0 0
        %2795 = vmatpush1.bf16.msra.mxu0 0
        %2796 = vmatprep.subr.bf16.mxu0 0
        %2797 = vmatpush1.bf16.msra.mxu0 0
        %2798 = vmatprep.mubr.bf16.mxu0 0
        %2799 = vmatmul.mubr.bf16.gmra.mrb[0].mxu0 %v2627
        %v2800 = vpop.f32.mrb[0].mxu0
        %v2801 = vadd.f32 0.0, %v2800
        %v2802 = vpop.f32.mrb[0].mxu0
        %v2803 = vpop.f32.mrb[0].mxu0
        %v2804 = vadd.f32 0.0, %v2803
        %v2805 = vpop.f32.mrb[0].mxu0
        %2806 = vdwg.mxu0
        %v2807 = vadd.f32 %v2764, %v2801
        %v2808 = vadd.f32 %v2765, %v2804
        %v2809 = vld [vmem:[%s527] sm:$0xf]
        %v2810 = vld [vmem:[%s527 + $0x4] sm:$0xf]
        %v2813 = vunpack.c.l.b16 %v2809
        %v2814 = vunpack.c.l.b16 %v2810
        %v2815 = vpack.c.b16 %v2814, %v2813
        %2817 = vmatprep.subr.bf16.mxu0 0
        %2818 = vmatpush1.bf16.msra.mxu0 %v2815
        %2819 = vmatprep.subr.bf16.mxu0 0
        %2820 = vmatpush1.bf16.msra.mxu0 0
        %2821 = vmatprep.subr.bf16.mxu0 0
        %2822 = vmatpush1.bf16.msra.mxu0 0
        %2823 = vmatprep.subr.bf16.mxu0 0
        %2824 = vmatpush1.bf16.msra.mxu0 0
        %2825 = vmatprep.subr.bf16.mxu0 0
        %2826 = vmatpush1.bf16.msra.mxu0 0
        %2827 = vmatprep.subr.bf16.mxu0 0
        %2828 = vmatpush1.bf16.msra.mxu0 0
        %2829 = vmatprep.subr.bf16.mxu0 0
        %2830 = vmatpush1.bf16.msra.mxu0 0
        %2831 = vmatprep.subr.bf16.mxu0 0
        %2832 = vmatpush1.bf16.msra.mxu0 0
        %2833 = vmatprep.subr.bf16.mxu0 0
        %2834 = vmatpush1.bf16.msra.mxu0 0
        %2835 = vmatprep.subr.bf16.mxu0 0
        %2836 = vmatpush1.bf16.msra.mxu0 0
        %2837 = vmatprep.subr.bf16.mxu0 0
        %2838 = vmatpush1.bf16.msra.mxu0 0
        %2839 = vmatprep.subr.bf16.mxu0 0
        %2840 = vmatpush1.bf16.msra.mxu0 0
        %2841 = vmatprep.subr.bf16.mxu0 0
        %2842 = vmatpush1.bf16.msra.mxu0 0
        %2843 = vmatprep.subr.bf16.mxu0 0
        %2844 = vmatpush1.bf16.msra.mxu0 0
        %2845 = vmatprep.subr.bf16.mxu0 0
        %2846 = vmatpush1.bf16.msra.mxu0 0
        %2847 = vmatprep.subr.bf16.mxu0 0
        %2848 = vmatpush1.bf16.msra.mxu0 0
        %2849 = vmatprep.mubr.bf16.mxu0 0
        %2850 = vmatmul.mubr.bf16.gmra.mrb[0].mxu0 %v2583
        %v2851 = vpop.f32.mrb[0].mxu0
        %v2852 = vadd.f32 0.0, %v2851
        %v2853 = vpop.f32.mrb[0].mxu0
        %v2854 = vpop.f32.mrb[0].mxu0
        %v2855 = vadd.f32 0.0, %v2854
        %v2856 = vpop.f32.mrb[0].mxu0
        %2857 = vdwg.mxu0
        %v2858 = vadd.f32 %v2807, %v2852
        %v2859 = vadd.f32 %v2808, %v2855
        %2860 = vmatprep.subr.bf16.mxu0 0
        %2861 = vmatpush1.bf16.msra.mxu0 %v2815
        %2862 = vmatprep.subr.bf16.mxu0 0
        %2863 = vmatpush1.bf16.msra.mxu0 0
        %2864 = vmatprep.subr.bf16.mxu0 0
        %2865 = vmatpush1.bf16.msra.mxu0 0
        %2866 = vmatprep.subr.bf16.mxu0 0
        %2867 = vmatpush1.bf16.msra.mxu0 0
        %2868 = vmatprep.subr.bf16.mxu0 0
        %2869 = vmatpush1.bf16.msra.mxu0 0
        %2870 = vmatprep.subr.bf16.mxu0 0
        %2871 = vmatpush1.bf16.msra.mxu0 0
        %2872 = vmatprep.subr.bf16.mxu0 0
        %2873 = vmatpush1.bf16.msra.mxu0 0
        %2874 = vmatprep.subr.bf16.mxu0 0
        %2875 = vmatpush1.bf16.msra.mxu0 0
        %2876 = vmatprep.subr.bf16.mxu0 0
        %2877 = vmatpush1.bf16.msra.mxu0 0
        %2878 = vmatprep.subr.bf16.mxu0 0
        %2879 = vmatpush1.bf16.msra.mxu0 0
        %2880 = vmatprep.subr.bf16.mxu0 0
        %2881 = vmatpush1.bf16.msra.mxu0 0
        %2882 = vmatprep.subr.bf16.mxu0 0
        %2883 = vmatpush1.bf16.msra.mxu0 0
        %2884 = vmatprep.subr.bf16.mxu0 0
        %2885 = vmatpush1.bf16.msra.mxu0 0
        %2886 = vmatprep.subr.bf16.mxu0 0
        %2887 = vmatpush1.bf16.msra.mxu0 0
        %2888 = vmatprep.subr.bf16.mxu0 0
        %2889 = vmatpush1.bf16.msra.mxu0 0
        %2890 = vmatprep.subr.bf16.mxu0 0
        %2891 = vmatpush1.bf16.msra.mxu0 0
        %2892 = vmatprep.mubr.bf16.mxu0 0
        %2893 = vmatmul.mubr.bf16.gmra.mrb[0].mxu0 %v2539
        %v2894 = vpop.f32.mrb[0].mxu0
        %v2895 = vadd.f32 0.0, %v2894
        %v2896 = vpop.f32.mrb[0].mxu0
        %v2897 = vpop.f32.mrb[0].mxu0
        %v2898 = vadd.f32 0.0, %v2897
        %v2899 = vpop.f32.mrb[0].mxu0
        %2900 = vdwg.mxu0
        %v2901 = vadd.f32 %v2858, %v2895
        %v2902 = vadd.f32 %v2859, %v2898
        %2903 = vmatprep.subr.bf16.mxu0 0
        %2904 = vmatpush1.bf16.msra.mxu0 %v2815
        %2905 = vmatprep.subr.bf16.mxu0 0
        %2906 = vmatpush1.bf16.msra.mxu0 0
        %2907 = vmatprep.subr.bf16.mxu0 0
        %2908 = vmatpush1.bf16.msra.mxu0 0
        %2909 = vmatprep.subr.bf16.mxu0 0
        %2910 = vmatpush1.bf16.msra.mxu0 0
        %2911 = vmatprep.subr.bf16.mxu0 0
        %2912 = vmatpush1.bf16.msra.mxu0 0
        %2913 = vmatprep.subr.bf16.mxu0 0
        %2914 = vmatpush1.bf16.msra.mxu0 0
        %2915 = vmatprep.subr.bf16.mxu0 0
        %2916 = vmatpush1.bf16.msra.mxu0 0
        %2917 = vmatprep.subr.bf16.mxu0 0
        %2918 = vmatpush1.bf16.msra.mxu0 0
        %2919 = vmatprep.subr.bf16.mxu0 0
        %2920 = vmatpush1.bf16.msra.mxu0 0
        %2921 = vmatprep.subr.bf16.mxu0 0
        %2922 = vmatpush1.bf16.msra.mxu0 0
        %2923 = vmatprep.subr.bf16.mxu0 0
        %2924 = vmatpush1.bf16.msra.mxu0 0
        %2925 = vmatprep.subr.bf16.mxu0 0
        %2926 = vmatpush1.bf16.msra.mxu0 0
        %2927 = vmatprep.subr.bf16.mxu0 0
        %2928 = vmatpush1.bf16.msra.mxu0 0
        %2929 = vmatprep.subr.bf16.mxu0 0
        %2930 = vmatpush1.bf16.msra.mxu0 0
        %2931 = vmatprep.subr.bf16.mxu0 0
        %2932 = vmatpush1.bf16.msra.mxu0 0
        %2933 = vmatprep.subr.bf16.mxu0 0
        %2934 = vmatpush1.bf16.msra.mxu0 0
        %2935 = vmatprep.mubr.bf16.mxu0 0
        %2936 = vmatmul.mubr.bf16.gmra.mrb[0].mxu0 %v2627
        %v2937 = vpop.f32.mrb[0].mxu0
        %v2938 = vadd.f32 0.0, %v2937
        %v2939 = vpop.f32.mrb[0].mxu0
        %v2940 = vpop.f32.mrb[0].mxu0
        %v2941 = vadd.f32 0.0, %v2940
        %v2942 = vpop.f32.mrb[0].mxu0
        %2943 = vdwg.mxu0
        %v2944 = vadd.f32 %v2901, %v2938
        %v2945 = vadd.f32 %v2902, %v2941
        %v2946 = vld [vmem:[%s665] sm:$0xf]
        %v2947 = vld [vmem:[%s665 + $0x4] sm:$0xf]
        %v2950 = vunpack.c.l.b16 %v2946
        %v2951 = vunpack.c.l.b16 %v2947
        %v2952 = vpack.c.b16 %v2951, %v2950
        %2954 = vmatprep.subr.bf16.mxu0 0
        %2955 = vmatpush1.bf16.msra.mxu0 %v2952
        %2956 = vmatprep.subr.bf16.mxu0 0
        %2957 = vmatpush1.bf16.msra.mxu0 0
        %2958 = vmatprep.subr.bf16.mxu0 0
        %2959 = vmatpush1.bf16.msra.mxu0 0
        %2960 = vmatprep.subr.bf16.mxu0 0
        %2961 = vmatpush1.bf16.msra.mxu0 0
        %2962 = vmatprep.subr.bf16.mxu0 0
        %2963 = vmatpush1.bf16.msra.mxu0 0
        %2964 = vmatprep.subr.bf16.mxu0 0
        %2965 = vmatpush1.bf16.msra.mxu0 0
        %2966 = vmatprep.subr.bf16.mxu0 0
        %2967 = vmatpush1.bf16.msra.mxu0 0
        %2968 = vmatprep.subr.bf16.mxu0 0
        %2969 = vmatpush1.bf16.msra.mxu0 0
        %2970 = vmatprep.subr.bf16.mxu0 0
        %2971 = vmatpush1.bf16.msra.mxu0 0
        %2972 = vmatprep.subr.bf16.mxu0 0
        %2973 = vmatpush1.bf16.msra.mxu0 0
        %2974 = vmatprep.subr.bf16.mxu0 0
        %2975 = vmatpush1.bf16.msra.mxu0 0
        %2976 = vmatprep.subr.bf16.mxu0 0
        %2977 = vmatpush1.bf16.msra.mxu0 0
        %2978 = vmatprep.subr.bf16.mxu0 0
        %2979 = vmatpush1.bf16.msra.mxu0 0
        %2980 = vmatprep.subr.bf16.mxu0 0
        %2981 = vmatpush1.bf16.msra.mxu0 0
        %2982 = vmatprep.subr.bf16.mxu0 0
        %2983 = vmatpush1.bf16.msra.mxu0 0
        %2984 = vmatprep.subr.bf16.mxu0 0
        %2985 = vmatpush1.bf16.msra.mxu0 0
        %2986 = vmatprep.mubr.bf16.mxu0 0
        %2987 = vmatmul.mubr.bf16.gmra.mrb[0].mxu0 %v2583
        %v2988 = vpop.f32.mrb[0].mxu0
        %v2989 = vadd.f32 0.0, %v2988
        %v2990 = vpop.f32.mrb[0].mxu0
        %v2991 = vpop.f32.mrb[0].mxu0
        %v2992 = vadd.f32 0.0, %v2991
        %v2993 = vpop.f32.mrb[0].mxu0
        %2994 = vdwg.mxu0
        %v2995 = vadd.f32 %v2944, %v2989
        %v2996 = vadd.f32 %v2945, %v2992
        %2997 = vmatprep.subr.bf16.mxu0 0
        %2998 = vmatpush1.bf16.msra.mxu0 %v2952
        %2999 = vmatprep.subr.bf16.mxu0 0
        %3000 = vmatpush1.bf16.msra.mxu0 0
        %3001 = vmatprep.subr.bf16.mxu0 0
        %3002 = vmatpush1.bf16.msra.mxu0 0
        %3003 = vmatprep.subr.bf16.mxu0 0
        %3004 = vmatpush1.bf16.msra.mxu0 0
        %3005 = vmatprep.subr.bf16.mxu0 0
        %3006 = vmatpush1.bf16.msra.mxu0 0
        %3007 = vmatprep.subr.bf16.mxu0 0
        %3008 = vmatpush1.bf16.msra.mxu0 0
        %3009 = vmatprep.subr.bf16.mxu0 0
        %3010 = vmatpush1.bf16.msra.mxu0 0
        %3011 = vmatprep.subr.bf16.mxu0 0
        %3012 = vmatpush1.bf16.msra.mxu0 0
        %3013 = vmatprep.subr.bf16.mxu0 0
        %3014 = vmatpush1.bf16.msra.mxu0 0
        %3015 = vmatprep.subr.bf16.mxu0 0
        %3016 = vmatpush1.bf16.msra.mxu0 0
        %3017 = vmatprep.subr.bf16.mxu0 0
        %3018 = vmatpush1.bf16.msra.mxu0 0
        %3019 = vmatprep.subr.bf16.mxu0 0
        %3020 = vmatpush1.bf16.msra.mxu0 0
        %3021 = vmatprep.subr.bf16.mxu0 0
        %3022 = vmatpush1.bf16.msra.mxu0 0
        %3023 = vmatprep.subr.bf16.mxu0 0
        %3024 = vmatpush1.bf16.msra.mxu0 0
        %3025 = vmatprep.subr.bf16.mxu0 0
        %3026 = vmatpush1.bf16.msra.mxu0 0
        %3027 = vmatprep.subr.bf16.mxu0 0
        %3028 = vmatpush1.bf16.msra.mxu0 0
        %3029 = vmatprep.mubr.bf16.mxu0 0
        %3030 = vmatmul.mubr.bf16.gmra.mrb[0].mxu0 %v2539
        %v3031 = vpop.f32.mrb[0].mxu0
        %v3032 = vadd.f32 0.0, %v3031
        %v3033 = vpop.f32.mrb[0].mxu0
        %v3034 = vpop.f32.mrb[0].mxu0
        %v3035 = vadd.f32 0.0, %v3034
        %v3036 = vpop.f32.mrb[0].mxu0
        %3037 = vdwg.mxu0
        %v3038 = vadd.f32 %v2995, %v3032
        %v3039 = vadd.f32 %v2996, %v3035
        %3040 = vmatprep.subr.bf16.mxu0 0
        %3041 = vmatpush1.bf16.msra.mxu0 %v2952
        %3042 = vmatprep.subr.bf16.mxu0 0
        %3043 = vmatpush1.bf16.msra.mxu0 0
        %3044 = vmatprep.subr.bf16.mxu0 0
        %3045 = vmatpush1.bf16.msra.mxu0 0
        %3046 = vmatprep.subr.bf16.mxu0 0
        %3047 = vmatpush1.bf16.msra.mxu0 0
        %3048 = vmatprep.subr.bf16.mxu0 0
        %3049 = vmatpush1.bf16.msra.mxu0 0
        %3050 = vmatprep.subr.bf16.mxu0 0
        %3051 = vmatpush1.bf16.msra.mxu0 0
        %3052 = vmatprep.subr.bf16.mxu0 0
        %3053 = vmatpush1.bf16.msra.mxu0 0
        %3054 = vmatprep.subr.bf16.mxu0 0
        %3055 = vmatpush1.bf16.msra.mxu0 0
        %3056 = vmatprep.subr.bf16.mxu0 0
        %3057 = vmatpush1.bf16.msra.mxu0 0
        %3058 = vmatprep.subr.bf16.mxu0 0
        %3059 = vmatpush1.bf16.msra.mxu0 0
        %3060 = vmatprep.subr.bf16.mxu0 0
        %3061 = vmatpush1.bf16.msra.mxu0 0
        %3062 = vmatprep.subr.bf16.mxu0 0
        %3063 = vmatpush1.bf16.msra.mxu0 0
        %3064 = vmatprep.subr.bf16.mxu0 0
        %3065 = vmatpush1.bf16.msra.mxu0 0
        %3066 = vmatprep.subr.bf16.mxu0 0
        %3067 = vmatpush1.bf16.msra.mxu0 0
        %3068 = vmatprep.subr.bf16.mxu0 0
        %3069 = vmatpush1.bf16.msra.mxu0 0
        %3070 = vmatprep.subr.bf16.mxu0 0
        %3071 = vmatpush1.bf16.msra.mxu0 0
        %3072 = vmatprep.mubr.bf16.mxu0 0
        %3073 = vmatmul.mubr.bf16.gmra.mrb[0].mxu0 %v2627
        %v3074 = vpop.f32.mrb[0].mxu0
        %v3075 = vadd.f32 0.0, %v3074
        %v3076 = vpop.f32.mrb[0].mxu0
        %v3077 = vpop.f32.mrb[0].mxu0
        %v3078 = vadd.f32 0.0, %v3077
        %v3079 = vpop.f32.mrb[0].mxu0
        %3080 = vdwg.mxu0
        %v3081 = vadd.f32 %v3038, %v3075
        %v3082 = vadd.f32 %v3039, %v3078
        %s3083 = scalar_lea.vmem %s229, 64 [#allocation6]
        %3084 = vst.msk [vmem:[%s3083] sm:$0xff] %vm803, %v3081
        %3085 = vst.msk [vmem:[%s3083 + $0x8] sm:$0xff] %vm803, %v3082
        %s3086 = scalar_lea.vmem %s206, 80 [#allocation2]
        %v3087 = vld [vmem:[%s3086] sm:$0xff]
        %v3088 = vld [vmem:[%s3086 + $0x8] sm:$0xff]
        %v3089 = vpack.c.bf16 %v3088, %v3087
        %v3090 = vunpack.c.l.bf16 %v3089
        %v3091 = vunpack.c.h.bf16 %v3089
        %v3092 = vsub.f32 %v3087, %v3090
        %v3093 = vsub.f32 %v3088, %v3091
        %v3094 = vpack.c.bf16 %v3093, %v3092
        %v3095 = vunpack.c.l.bf16 %v3094
        %v3096 = vunpack.c.h.bf16 %v3094
        %v3097 = vsub.f32 %v3092, %v3095
        %v3098 = vsub.f32 %v3093, %v3096
        %v3099 = vpack.c.bf16 %v3098, %v3097
        %v3100 = vld [vmem:[#allocation4] sm:$0xf]
        %v3101 = vld [vmem:[#allocation4 + $0x4] sm:$0xf]
        %v3104 = vunpack.c.l.b16 %v3100
        %v3105 = vunpack.c.l.b16 %v3101
        %v3106 = vpack.c.b16 %v3105, %v3104
        %v3109 = vsel %vm254, %v3094, 0
        %3111 = vmatprep.subr.bf16.mxu0 0
        %3112 = vmatpush1.bf16.msra.mxu0 %v3106
        %3113 = vmatprep.subr.bf16.mxu0 0
        %3114 = vmatpush1.bf16.msra.mxu0 0
        %3115 = vmatprep.subr.bf16.mxu0 0
        %3116 = vmatpush1.bf16.msra.mxu0 0
        %3117 = vmatprep.subr.bf16.mxu0 0
        %3118 = vmatpush1.bf16.msra.mxu0 0
        %3119 = vmatprep.subr.bf16.mxu0 0
        %3120 = vmatpush1.bf16.msra.mxu0 0
        %3121 = vmatprep.subr.bf16.mxu0 0
        %3122 = vmatpush1.bf16.msra.mxu0 0
        %3123 = vmatprep.subr.bf16.mxu0 0
        %3124 = vmatpush1.bf16.msra.mxu0 0
        %3125 = vmatprep.subr.bf16.mxu0 0
        %3126 = vmatpush1.bf16.msra.mxu0 0
        %3127 = vmatprep.subr.bf16.mxu0 0
        %3128 = vmatpush1.bf16.msra.mxu0 0
        %3129 = vmatprep.subr.bf16.mxu0 0
        %3130 = vmatpush1.bf16.msra.mxu0 0
        %3131 = vmatprep.subr.bf16.mxu0 0
        %3132 = vmatpush1.bf16.msra.mxu0 0
        %3133 = vmatprep.subr.bf16.mxu0 0
        %3134 = vmatpush1.bf16.msra.mxu0 0
        %3135 = vmatprep.subr.bf16.mxu0 0
        %3136 = vmatpush1.bf16.msra.mxu0 0
        %3137 = vmatprep.subr.bf16.mxu0 0
        %3138 = vmatpush1.bf16.msra.mxu0 0
        %3139 = vmatprep.subr.bf16.mxu0 0
        %3140 = vmatpush1.bf16.msra.mxu0 0
        %3141 = vmatprep.subr.bf16.mxu0 0
        %3142 = vmatpush1.bf16.msra.mxu0 0
        %3143 = vmatprep.mubr.bf16.mxu0 0
        %3144 = vmatmul.mubr.bf16.gmra.mrb[0].mxu0 %v3109
        %v3145 = vpop.f32.mrb[0].mxu0
        %v3146 = vadd.f32 0.0, %v3145
        %v3147 = vpop.f32.mrb[0].mxu0
        %v3148 = vpop.f32.mrb[0].mxu0
        %v3149 = vadd.f32 0.0, %v3148
        %v3150 = vpop.f32.mrb[0].mxu0
        %3151 = vdwg.mxu0
        %v3153 = vsel %vm254, %v3089, 0
        %3155 = vmatprep.subr.bf16.mxu0 0
        %3156 = vmatpush1.bf16.msra.mxu0 %v3106
        %3157 = vmatprep.subr.bf16.mxu0 0
        %3158 = vmatpush1.bf16.msra.mxu0 0
        %3159 = vmatprep.subr.bf16.mxu0 0
        %3160 = vmatpush1.bf16.msra.mxu0 0
        %3161 = vmatprep.subr.bf16.mxu0 0
        %3162 = vmatpush1.bf16.msra.mxu0 0
        %3163 = vmatprep.subr.bf16.mxu0 0
        %3164 = vmatpush1.bf16.msra.mxu0 0
        %3165 = vmatprep.subr.bf16.mxu0 0
        %3166 = vmatpush1.bf16.msra.mxu0 0
        %3167 = vmatprep.subr.bf16.mxu0 0
        %3168 = vmatpush1.bf16.msra.mxu0 0
        %3169 = vmatprep.subr.bf16.mxu0 0
        %3170 = vmatpush1.bf16.msra.mxu0 0
        %3171 = vmatprep.subr.bf16.mxu0 0
        %3172 = vmatpush1.bf16.msra.mxu0 0
        %3173 = vmatprep.subr.bf16.mxu0 0
        %3174 = vmatpush1.bf16.msra.mxu0 0
        %3175 = vmatprep.subr.bf16.mxu0 0
        %3176 = vmatpush1.bf16.msra.mxu0 0
        %3177 = vmatprep.subr.bf16.mxu0 0
        %3178 = vmatpush1.bf16.msra.mxu0 0
        %3179 = vmatprep.subr.bf16.mxu0 0
        %3180 = vmatpush1.bf16.msra.mxu0 0
        %3181 = vmatprep.subr.bf16.mxu0 0
        %3182 = vmatpush1.bf16.msra.mxu0 0
        %3183 = vmatprep.subr.bf16.mxu0 0
        %3184 = vmatpush1.bf16.msra.mxu0 0
        %3185 = vmatprep.subr.bf16.mxu0 0
        %3186 = vmatpush1.bf16.msra.mxu0 0
        %3187 = vmatprep.mubr.bf16.mxu0 0
        %3188 = vmatmul.mubr.bf16.gmra.mrb[0].mxu0 %v3153
        %v3189 = vpop.f32.mrb[0].mxu0
        %v3190 = vadd.f32 %v3146, %v3189
        %v3191 = vpop.f32.mrb[0].mxu0
        %v3192 = vpop.f32.mrb[0].mxu0
        %v3193 = vadd.f32 %v3149, %v3192
        %v3194 = vpop.f32.mrb[0].mxu0
        %3195 = vdwg.mxu0
        %v3197 = vsel %vm254, %v3099, 0
        %3199 = vmatprep.subr.bf16.mxu0 0
        %3200 = vmatpush1.bf16.msra.mxu0 %v3106
        %3201 = vmatprep.subr.bf16.mxu0 0
        %3202 = vmatpush1.bf16.msra.mxu0 0
        %3203 = vmatprep.subr.bf16.mxu0 0
        %3204 = vmatpush1.bf16.msra.mxu0 0
        %3205 = vmatprep.subr.bf16.mxu0 0
        %3206 = vmatpush1.bf16.msra.mxu0 0
        %3207 = vmatprep.subr.bf16.mxu0 0
        %3208 = vmatpush1.bf16.msra.mxu0 0
        %3209 = vmatprep.subr.bf16.mxu0 0
        %3210 = vmatpush1.bf16.msra.mxu0 0
        %3211 = vmatprep.subr.bf16.mxu0 0
        %3212 = vmatpush1.bf16.msra.mxu0 0
        %3213 = vmatprep.subr.bf16.mxu0 0
        %3214 = vmatpush1.bf16.msra.mxu0 0
        %3215 = vmatprep.subr.bf16.mxu0 0
        %3216 = vmatpush1.bf16.msra.mxu0 0
        %3217 = vmatprep.subr.bf16.mxu0 0
        %3218 = vmatpush1.bf16.msra.mxu0 0
        %3219 = vmatprep.subr.bf16.mxu0 0
        %3220 = vmatpush1.bf16.msra.mxu0 0
        %3221 = vmatprep.subr.bf16.mxu0 0
        %3222 = vmatpush1.bf16.msra.mxu0 0
        %3223 = vmatprep.subr.bf16.mxu0 0
        %3224 = vmatpush1.bf16.msra.mxu0 0
        %3225 = vmatprep.subr.bf16.mxu0 0
        %3226 = vmatpush1.bf16.msra.mxu0 0
        %3227 = vmatprep.subr.bf16.mxu0 0
        %3228 = vmatpush1.bf16.msra.mxu0 0
        %3229 = vmatprep.subr.bf16.mxu0 0
        %3230 = vmatpush1.bf16.msra.mxu0 0
        %3231 = vmatprep.mubr.bf16.mxu0 0
        %3232 = vmatmul.mubr.bf16.gmra.mrb[0].mxu0 %v3197
        %v3233 = vpop.f32.mrb[0].mxu0
        %v3234 = vadd.f32 0.0, %v3233
        %v3235 = vpop.f32.mrb[0].mxu0
        %v3236 = vpop.f32.mrb[0].mxu0
        %v3237 = vadd.f32 0.0, %v3236
        %v3238 = vpop.f32.mrb[0].mxu0
        %3239 = vdwg.mxu0
        %v3240 = vadd.f32 %v3190, %v3234
        %v3241 = vadd.f32 %v3193, %v3237
        %v3242 = vld [vmem:[%s389] sm:$0xf]
        %v3243 = vld [vmem:[%s389 + $0x4] sm:$0xf]
        %v3246 = vunpack.c.l.b16 %v3242
        %v3247 = vunpack.c.l.b16 %v3243
        %v3248 = vpack.c.b16 %v3247, %v3246
        %3250 = vmatprep.subr.bf16.mxu0 0
        %3251 = vmatpush1.bf16.msra.mxu0 %v3248
        %3252 = vmatprep.subr.bf16.mxu0 0
        %3253 = vmatpush1.bf16.msra.mxu0 0
        %3254 = vmatprep.subr.bf16.mxu0 0
        %3255 = vmatpush1.bf16.msra.mxu0 0
        %3256 = vmatprep.subr.bf16.mxu0 0
        %3257 = vmatpush1.bf16.msra.mxu0 0
        %3258 = vmatprep.subr.bf16.mxu0 0
        %3259 = vmatpush1.bf16.msra.mxu0 0
        %3260 = vmatprep.subr.bf16.mxu0 0
        %3261 = vmatpush1.bf16.msra.mxu0 0
        %3262 = vmatprep.subr.bf16.mxu0 0
        %3263 = vmatpush1.bf16.msra.mxu0 0
        %3264 = vmatprep.subr.bf16.mxu0 0
        %3265 = vmatpush1.bf16.msra.mxu0 0
        %3266 = vmatprep.subr.bf16.mxu0 0
        %3267 = vmatpush1.bf16.msra.mxu0 0
        %3268 = vmatprep.subr.bf16.mxu0 0
        %3269 = vmatpush1.bf16.msra.mxu0 0
        %3270 = vmatprep.subr.bf16.mxu0 0
        %3271 = vmatpush1.bf16.msra.mxu0 0
        %3272 = vmatprep.subr.bf16.mxu0 0
        %3273 = vmatpush1.bf16.msra.mxu0 0
        %3274 = vmatprep.subr.bf16.mxu0 0
        %3275 = vmatpush1.bf16.msra.mxu0 0
        %3276 = vmatprep.subr.bf16.mxu0 0
        %3277 = vmatpush1.bf16.msra.mxu0 0
        %3278 = vmatprep.subr.bf16.mxu0 0
        %3279 = vmatpush1.bf16.msra.mxu0 0
        %3280 = vmatprep.subr.bf16.mxu0 0
        %3281 = vmatpush1.bf16.msra.mxu0 0
        %3282 = vmatprep.mubr.bf16.mxu0 0
        %3283 = vmatmul.mubr.bf16.gmra.mrb[0].mxu0 %v3153
        %v3284 = vpop.f32.mrb[0].mxu0
        %v3285 = vadd.f32 0.0, %v3284
        %v3286 = vpop.f32.mrb[0].mxu0
        %v3287 = vpop.f32.mrb[0].mxu0
        %v3288 = vadd.f32 0.0, %v3287
        %v3289 = vpop.f32.mrb[0].mxu0
        %3290 = vdwg.mxu0
        %v3291 = vadd.f32 %v3240, %v3285
        %v3292 = vadd.f32 %v3241, %v3288
        %3293 = vmatprep.subr.bf16.mxu0 0
        %3294 = vmatpush1.bf16.msra.mxu0 %v3248
        %3295 = vmatprep.subr.bf16.mxu0 0
        %3296 = vmatpush1.bf16.msra.mxu0 0
        %3297 = vmatprep.subr.bf16.mxu0 0
        %3298 = vmatpush1.bf16.msra.mxu0 0
        %3299 = vmatprep.subr.bf16.mxu0 0
        %3300 = vmatpush1.bf16.msra.mxu0 0
        %3301 = vmatprep.subr.bf16.mxu0 0
        %3302 = vmatpush1.bf16.msra.mxu0 0
        %3303 = vmatprep.subr.bf16.mxu0 0
        %3304 = vmatpush1.bf16.msra.mxu0 0
        %3305 = vmatprep.subr.bf16.mxu0 0
        %3306 = vmatpush1.bf16.msra.mxu0 0
        %3307 = vmatprep.subr.bf16.mxu0 0
        %3308 = vmatpush1.bf16.msra.mxu0 0
        %3309 = vmatprep.subr.bf16.mxu0 0
        %3310 = vmatpush1.bf16.msra.mxu0 0
        %3311 = vmatprep.subr.bf16.mxu0 0
        %3312 = vmatpush1.bf16.msra.mxu0 0
        %3313 = vmatprep.subr.bf16.mxu0 0
        %3314 = vmatpush1.bf16.msra.mxu0 0
        %3315 = vmatprep.subr.bf16.mxu0 0
        %3316 = vmatpush1.bf16.msra.mxu0 0
        %3317 = vmatprep.subr.bf16.mxu0 0
        %3318 = vmatpush1.bf16.msra.mxu0 0
        %3319 = vmatprep.subr.bf16.mxu0 0
        %3320 = vmatpush1.bf16.msra.mxu0 0
        %3321 = vmatprep.subr.bf16.mxu0 0
        %3322 = vmatpush1.bf16.msra.mxu0 0
        %3323 = vmatprep.subr.bf16.mxu0 0
        %3324 = vmatpush1.bf16.msra.mxu0 0
        %3325 = vmatprep.mubr.bf16.mxu0 0
        %3326 = vmatmul.mubr.bf16.gmra.mrb[0].mxu0 %v3109
        %v3327 = vpop.f32.mrb[0].mxu0
        %v3328 = vadd.f32 0.0, %v3327
        %v3329 = vpop.f32.mrb[0].mxu0
        %v3330 = vpop.f32.mrb[0].mxu0
        %v3331 = vadd.f32 0.0, %v3330
        %v3332 = vpop.f32.mrb[0].mxu0
        %3333 = vdwg.mxu0
        %v3334 = vadd.f32 %v3291, %v3328
        %v3335 = vadd.f32 %v3292, %v3331
        %3336 = vmatprep.subr.bf16.mxu0 0
        %3337 = vmatpush1.bf16.msra.mxu0 %v3248
        %3338 = vmatprep.subr.bf16.mxu0 0
        %3339 = vmatpush1.bf16.msra.mxu0 0
        %3340 = vmatprep.subr.bf16.mxu0 0
        %3341 = vmatpush1.bf16.msra.mxu0 0
        %3342 = vmatprep.subr.bf16.mxu0 0
        %3343 = vmatpush1.bf16.msra.mxu0 0
        %3344 = vmatprep.subr.bf16.mxu0 0
        %3345 = vmatpush1.bf16.msra.mxu0 0
        %3346 = vmatprep.subr.bf16.mxu0 0
        %3347 = vmatpush1.bf16.msra.mxu0 0
        %3348 = vmatprep.subr.bf16.mxu0 0
        %3349 = vmatpush1.bf16.msra.mxu0 0
        %3350 = vmatprep.subr.bf16.mxu0 0
        %3351 = vmatpush1.bf16.msra.mxu0 0
        %3352 = vmatprep.subr.bf16.mxu0 0
        %3353 = vmatpush1.bf16.msra.mxu0 0
        %3354 = vmatprep.subr.bf16.mxu0 0
        %3355 = vmatpush1.bf16.msra.mxu0 0
        %3356 = vmatprep.subr.bf16.mxu0 0
        %3357 = vmatpush1.bf16.msra.mxu0 0
        %3358 = vmatprep.subr.bf16.mxu0 0
        %3359 = vmatpush1.bf16.msra.mxu0 0
        %3360 = vmatprep.subr.bf16.mxu0 0
        %3361 = vmatpush1.bf16.msra.mxu0 0
        %3362 = vmatprep.subr.bf16.mxu0 0
        %3363 = vmatpush1.bf16.msra.mxu0 0
        %3364 = vmatprep.subr.bf16.mxu0 0
        %3365 = vmatpush1.bf16.msra.mxu0 0
        %3366 = vmatprep.subr.bf16.mxu0 0
        %3367 = vmatpush1.bf16.msra.mxu0 0
        %3368 = vmatprep.mubr.bf16.mxu0 0
        %3369 = vmatmul.mubr.bf16.gmra.mrb[0].mxu0 %v3197
        %v3370 = vpop.f32.mrb[0].mxu0
        %v3371 = vadd.f32 0.0, %v3370
        %v3372 = vpop.f32.mrb[0].mxu0
        %v3373 = vpop.f32.mrb[0].mxu0
        %v3374 = vadd.f32 0.0, %v3373
        %v3375 = vpop.f32.mrb[0].mxu0
        %3376 = vdwg.mxu0
        %v3377 = vadd.f32 %v3334, %v3371
        %v3378 = vadd.f32 %v3335, %v3374
        %v3379 = vld [vmem:[%s527] sm:$0xf]
        %v3380 = vld [vmem:[%s527 + $0x4] sm:$0xf]
        %v3383 = vunpack.c.l.b16 %v3379
        %v3384 = vunpack.c.l.b16 %v3380
        %v3385 = vpack.c.b16 %v3384, %v3383
        %3387 = vmatprep.subr.bf16.mxu0 0
        %3388 = vmatpush1.bf16.msra.mxu0 %v3385
        %3389 = vmatprep.subr.bf16.mxu0 0
        %3390 = vmatpush1.bf16.msra.mxu0 0
        %3391 = vmatprep.subr.bf16.mxu0 0
        %3392 = vmatpush1.bf16.msra.mxu0 0
        %3393 = vmatprep.subr.bf16.mxu0 0
        %3394 = vmatpush1.bf16.msra.mxu0 0
        %3395 = vmatprep.subr.bf16.mxu0 0
        %3396 = vmatpush1.bf16.msra.mxu0 0
        %3397 = vmatprep.subr.bf16.mxu0 0
        %3398 = vmatpush1.bf16.msra.mxu0 0
        %3399 = vmatprep.subr.bf16.mxu0 0
        %3400 = vmatpush1.bf16.msra.mxu0 0
        %3401 = vmatprep.subr.bf16.mxu0 0
        %3402 = vmatpush1.bf16.msra.mxu0 0
        %3403 = vmatprep.subr.bf16.mxu0 0
        %3404 = vmatpush1.bf16.msra.mxu0 0
        %3405 = vmatprep.subr.bf16.mxu0 0
        %3406 = vmatpush1.bf16.msra.mxu0 0
        %3407 = vmatprep.subr.bf16.mxu0 0
        %3408 = vmatpush1.bf16.msra.mxu0 0
        %3409 = vmatprep.subr.bf16.mxu0 0
        %3410 = vmatpush1.bf16.msra.mxu0 0
        %3411 = vmatprep.subr.bf16.mxu0 0
        %3412 = vmatpush1.bf16.msra.mxu0 0
        %3413 = vmatprep.subr.bf16.mxu0 0
        %3414 = vmatpush1.bf16.msra.mxu0 0
        %3415 = vmatprep.subr.bf16.mxu0 0
        %3416 = vmatpush1.bf16.msra.mxu0 0
        %3417 = vmatprep.subr.bf16.mxu0 0
        %3418 = vmatpush1.bf16.msra.mxu0 0
        %3419 = vmatprep.mubr.bf16.mxu0 0
        %3420 = vmatmul.mubr.bf16.gmra.mrb[0].mxu0 %v3153
        %v3421 = vpop.f32.mrb[0].mxu0
        %v3422 = vadd.f32 0.0, %v3421
        %v3423 = vpop.f32.mrb[0].mxu0
        %v3424 = vpop.f32.mrb[0].mxu0
        %v3425 = vadd.f32 0.0, %v3424
        %v3426 = vpop.f32.mrb[0].mxu0
        %3427 = vdwg.mxu0
        %v3428 = vadd.f32 %v3377, %v3422
        %v3429 = vadd.f32 %v3378, %v3425
        %3430 = vmatprep.subr.bf16.mxu0 0
        %3431 = vmatpush1.bf16.msra.mxu0 %v3385
        %3432 = vmatprep.subr.bf16.mxu0 0
        %3433 = vmatpush1.bf16.msra.mxu0 0
        %3434 = vmatprep.subr.bf16.mxu0 0
        %3435 = vmatpush1.bf16.msra.mxu0 0
        %3436 = vmatprep.subr.bf16.mxu0 0
        %3437 = vmatpush1.bf16.msra.mxu0 0
        %3438 = vmatprep.subr.bf16.mxu0 0
        %3439 = vmatpush1.bf16.msra.mxu0 0
        %3440 = vmatprep.subr.bf16.mxu0 0
        %3441 = vmatpush1.bf16.msra.mxu0 0
        %3442 = vmatprep.subr.bf16.mxu0 0
        %3443 = vmatpush1.bf16.msra.mxu0 0
        %3444 = vmatprep.subr.bf16.mxu0 0
        %3445 = vmatpush1.bf16.msra.mxu0 0
        %3446 = vmatprep.subr.bf16.mxu0 0
        %3447 = vmatpush1.bf16.msra.mxu0 0
        %3448 = vmatprep.subr.bf16.mxu0 0
        %3449 = vmatpush1.bf16.msra.mxu0 0
        %3450 = vmatprep.subr.bf16.mxu0 0
        %3451 = vmatpush1.bf16.msra.mxu0 0
        %3452 = vmatprep.subr.bf16.mxu0 0
        %3453 = vmatpush1.bf16.msra.mxu0 0
        %3454 = vmatprep.subr.bf16.mxu0 0
        %3455 = vmatpush1.bf16.msra.mxu0 0
        %3456 = vmatprep.subr.bf16.mxu0 0
        %3457 = vmatpush1.bf16.msra.mxu0 0
        %3458 = vmatprep.subr.bf16.mxu0 0
        %3459 = vmatpush1.bf16.msra.mxu0 0
        %3460 = vmatprep.subr.bf16.mxu0 0
        %3461 = vmatpush1.bf16.msra.mxu0 0
        %3462 = vmatprep.mubr.bf16.mxu0 0
        %3463 = vmatmul.mubr.bf16.gmra.mrb[0].mxu0 %v3109
        %v3464 = vpop.f32.mrb[0].mxu0
        %v3465 = vadd.f32 0.0, %v3464
        %v3466 = vpop.f32.mrb[0].mxu0
        %v3467 = vpop.f32.mrb[0].mxu0
        %v3468 = vadd.f32 0.0, %v3467
        %v3469 = vpop.f32.mrb[0].mxu0
        %3470 = vdwg.mxu0
        %v3471 = vadd.f32 %v3428, %v3465
        %v3472 = vadd.f32 %v3429, %v3468
        %3473 = vmatprep.subr.bf16.mxu0 0
        %3474 = vmatpush1.bf16.msra.mxu0 %v3385
        %3475 = vmatprep.subr.bf16.mxu0 0
        %3476 = vmatpush1.bf16.msra.mxu0 0
        %3477 = vmatprep.subr.bf16.mxu0 0
        %3478 = vmatpush1.bf16.msra.mxu0 0
        %3479 = vmatprep.subr.bf16.mxu0 0
        %3480 = vmatpush1.bf16.msra.mxu0 0
        %3481 = vmatprep.subr.bf16.mxu0 0
        %3482 = vmatpush1.bf16.msra.mxu0 0
        %3483 = vmatprep.subr.bf16.mxu0 0
        %3484 = vmatpush1.bf16.msra.mxu0 0
        %3485 = vmatprep.subr.bf16.mxu0 0
        %3486 = vmatpush1.bf16.msra.mxu0 0
        %3487 = vmatprep.subr.bf16.mxu0 0
        %3488 = vmatpush1.bf16.msra.mxu0 0
        %3489 = vmatprep.subr.bf16.mxu0 0
        %3490 = vmatpush1.bf16.msra.mxu0 0
        %3491 = vmatprep.subr.bf16.mxu0 0
        %3492 = vmatpush1.bf16.msra.mxu0 0
        %3493 = vmatprep.subr.bf16.mxu0 0
        %3494 = vmatpush1.bf16.msra.mxu0 0
        %3495 = vmatprep.subr.bf16.mxu0 0
        %3496 = vmatpush1.bf16.msra.mxu0 0
        %3497 = vmatprep.subr.bf16.mxu0 0
        %3498 = vmatpush1.bf16.msra.mxu0 0
        %3499 = vmatprep.subr.bf16.mxu0 0
        %3500 = vmatpush1.bf16.msra.mxu0 0
        %3501 = vmatprep.subr.bf16.mxu0 0
        %3502 = vmatpush1.bf16.msra.mxu0 0
        %3503 = vmatprep.subr.bf16.mxu0 0
        %3504 = vmatpush1.bf16.msra.mxu0 0
        %3505 = vmatprep.mubr.bf16.mxu0 0
        %3506 = vmatmul.mubr.bf16.gmra.mrb[0].mxu0 %v3197
        %v3507 = vpop.f32.mrb[0].mxu0
        %v3508 = vadd.f32 0.0, %v3507
        %v3509 = vpop.f32.mrb[0].mxu0
        %v3510 = vpop.f32.mrb[0].mxu0
        %v3511 = vadd.f32 0.0, %v3510
        %v3512 = vpop.f32.mrb[0].mxu0
        %3513 = vdwg.mxu0
        %v3514 = vadd.f32 %v3471, %v3508
        %v3515 = vadd.f32 %v3472, %v3511
        %v3516 = vld [vmem:[%s665] sm:$0xf]
        %v3517 = vld [vmem:[%s665 + $0x4] sm:$0xf]
        %v3520 = vunpack.c.l.b16 %v3516
        %v3521 = vunpack.c.l.b16 %v3517
        %v3522 = vpack.c.b16 %v3521, %v3520
        %3524 = vmatprep.subr.bf16.mxu0 0
        %3525 = vmatpush1.bf16.msra.mxu0 %v3522
        %3526 = vmatprep.subr.bf16.mxu0 0
        %3527 = vmatpush1.bf16.msra.mxu0 0
        %3528 = vmatprep.subr.bf16.mxu0 0
        %3529 = vmatpush1.bf16.msra.mxu0 0
        %3530 = vmatprep.subr.bf16.mxu0 0
        %3531 = vmatpush1.bf16.msra.mxu0 0
        %3532 = vmatprep.subr.bf16.mxu0 0
        %3533 = vmatpush1.bf16.msra.mxu0 0
        %3534 = vmatprep.subr.bf16.mxu0 0
        %3535 = vmatpush1.bf16.msra.mxu0 0
        %3536 = vmatprep.subr.bf16.mxu0 0
        %3537 = vmatpush1.bf16.msra.mxu0 0
        %3538 = vmatprep.subr.bf16.mxu0 0
        %3539 = vmatpush1.bf16.msra.mxu0 0
        %3540 = vmatprep.subr.bf16.mxu0 0
        %3541 = vmatpush1.bf16.msra.mxu0 0
        %3542 = vmatprep.subr.bf16.mxu0 0
        %3543 = vmatpush1.bf16.msra.mxu0 0
        %3544 = vmatprep.subr.bf16.mxu0 0
        %3545 = vmatpush1.bf16.msra.mxu0 0
        %3546 = vmatprep.subr.bf16.mxu0 0
        %3547 = vmatpush1.bf16.msra.mxu0 0
        %3548 = vmatprep.subr.bf16.mxu0 0
        %3549 = vmatpush1.bf16.msra.mxu0 0
        %3550 = vmatprep.subr.bf16.mxu0 0
        %3551 = vmatpush1.bf16.msra.mxu0 0
        %3552 = vmatprep.subr.bf16.mxu0 0
        %3553 = vmatpush1.bf16.msra.mxu0 0
        %3554 = vmatprep.subr.bf16.mxu0 0
        %3555 = vmatpush1.bf16.msra.mxu0 0
        %3556 = vmatprep.mubr.bf16.mxu0 0
        %3557 = vmatmul.mubr.bf16.gmra.mrb[0].mxu0 %v3153
        %v3558 = vpop.f32.mrb[0].mxu0
        %v3559 = vadd.f32 0.0, %v3558
        %v3560 = vpop.f32.mrb[0].mxu0
        %v3561 = vpop.f32.mrb[0].mxu0
        %v3562 = vadd.f32 0.0, %v3561
        %v3563 = vpop.f32.mrb[0].mxu0
        %3564 = vdwg.mxu0
        %v3565 = vadd.f32 %v3514, %v3559
        %v3566 = vadd.f32 %v3515, %v3562
        %3567 = vmatprep.subr.bf16.mxu0 0
        %3568 = vmatpush1.bf16.msra.mxu0 %v3522
        %3569 = vmatprep.subr.bf16.mxu0 0
        %3570 = vmatpush1.bf16.msra.mxu0 0
        %3571 = vmatprep.subr.bf16.mxu0 0
        %3572 = vmatpush1.bf16.msra.mxu0 0
        %3573 = vmatprep.subr.bf16.mxu0 0
        %3574 = vmatpush1.bf16.msra.mxu0 0
        %3575 = vmatprep.subr.bf16.mxu0 0
        %3576 = vmatpush1.bf16.msra.mxu0 0
        %3577 = vmatprep.subr.bf16.mxu0 0
        %3578 = vmatpush1.bf16.msra.mxu0 0
        %3579 = vmatprep.subr.bf16.mxu0 0
        %3580 = vmatpush1.bf16.msra.mxu0 0
        %3581 = vmatprep.subr.bf16.mxu0 0
        %3582 = vmatpush1.bf16.msra.mxu0 0
        %3583 = vmatprep.subr.bf16.mxu0 0
        %3584 = vmatpush1.bf16.msra.mxu0 0
        %3585 = vmatprep.subr.bf16.mxu0 0
        %3586 = vmatpush1.bf16.msra.mxu0 0
        %3587 = vmatprep.subr.bf16.mxu0 0
        %3588 = vmatpush1.bf16.msra.mxu0 0
        %3589 = vmatprep.subr.bf16.mxu0 0
        %3590 = vmatpush1.bf16.msra.mxu0 0
        %3591 = vmatprep.subr.bf16.mxu0 0
        %3592 = vmatpush1.bf16.msra.mxu0 0
        %3593 = vmatprep.subr.bf16.mxu0 0
        %3594 = vmatpush1.bf16.msra.mxu0 0
        %3595 = vmatprep.subr.bf16.mxu0 0
        %3596 = vmatpush1.bf16.msra.mxu0 0
        %3597 = vmatprep.subr.bf16.mxu0 0
        %3598 = vmatpush1.bf16.msra.mxu0 0
        %3599 = vmatprep.mubr.bf16.mxu0 0
        %3600 = vmatmul.mubr.bf16.gmra.mrb[0].mxu0 %v3109
        %v3601 = vpop.f32.mrb[0].mxu0
        %v3602 = vadd.f32 0.0, %v3601
        %v3603 = vpop.f32.mrb[0].mxu0
        %v3604 = vpop.f32.mrb[0].mxu0
        %v3605 = vadd.f32 0.0, %v3604
        %v3606 = vpop.f32.mrb[0].mxu0
        %3607 = vdwg.mxu0
        %v3608 = vadd.f32 %v3565, %v3602
        %v3609 = vadd.f32 %v3566, %v3605
        %3610 = vmatprep.subr.bf16.mxu0 0
        %3611 = vmatpush1.bf16.msra.mxu0 %v3522
        %3612 = vmatprep.subr.bf16.mxu0 0
        %3613 = vmatpush1.bf16.msra.mxu0 0
        %3614 = vmatprep.subr.bf16.mxu0 0
        %3615 = vmatpush1.bf16.msra.mxu0 0
        %3616 = vmatprep.subr.bf16.mxu0 0
        %3617 = vmatpush1.bf16.msra.mxu0 0
        %3618 = vmatprep.subr.bf16.mxu0 0
        %3619 = vmatpush1.bf16.msra.mxu0 0
        %3620 = vmatprep.subr.bf16.mxu0 0
        %3621 = vmatpush1.bf16.msra.mxu0 0
        %3622 = vmatprep.subr.bf16.mxu0 0
        %3623 = vmatpush1.bf16.msra.mxu0 0
        %3624 = vmatprep.subr.bf16.mxu0 0
        %3625 = vmatpush1.bf16.msra.mxu0 0
        %3626 = vmatprep.subr.bf16.mxu0 0
        %3627 = vmatpush1.bf16.msra.mxu0 0
        %3628 = vmatprep.subr.bf16.mxu0 0
        %3629 = vmatpush1.bf16.msra.mxu0 0
        %3630 = vmatprep.subr.bf16.mxu0 0
        %3631 = vmatpush1.bf16.msra.mxu0 0
        %3632 = vmatprep.subr.bf16.mxu0 0
        %3633 = vmatpush1.bf16.msra.mxu0 0
        %3634 = vmatprep.subr.bf16.mxu0 0
        %3635 = vmatpush1.bf16.msra.mxu0 0
        %3636 = vmatprep.subr.bf16.mxu0 0
        %3637 = vmatpush1.bf16.msra.mxu0 0
        %3638 = vmatprep.subr.bf16.mxu0 0
        %3639 = vmatpush1.bf16.msra.mxu0 0
        %3640 = vmatprep.subr.bf16.mxu0 0
        %3641 = vmatpush1.bf16.msra.mxu0 0
        %3642 = vmatprep.mubr.bf16.mxu0 0
        %3643 = vmatmul.mubr.bf16.gmra.mrb[0].mxu0 %v3197
        %v3644 = vpop.f32.mrb[0].mxu0
        %v3645 = vadd.f32 0.0, %v3644
        %v3646 = vpop.f32.mrb[0].mxu0
        %v3647 = vpop.f32.mrb[0].mxu0
        %v3648 = vadd.f32 0.0, %v3647
        %v3649 = vpop.f32.mrb[0].mxu0
        %3650 = vdwg.mxu0
        %v3651 = vadd.f32 %v3608, %v3645
        %v3652 = vadd.f32 %v3609, %v3648
        %s3653 = scalar_lea.vmem %s229, 80 [#allocation6]
        %3654 = vst.msk [vmem:[%s3653] sm:$0xff] %vm803, %v3651
        %3655 = vst.msk [vmem:[%s3653 + $0x8] sm:$0xff] %vm803, %v3652
        %s3656 = scalar_lea.vmem %s206, 96 [#allocation2]
        %v3657 = vld [vmem:[%s3656] sm:$0xff]
        %v3658 = vld [vmem:[%s3656 + $0x8] sm:$0xff]
        %v3659 = vpack.c.bf16 %v3658, %v3657
        %v3660 = vunpack.c.l.bf16 %v3659
        %v3661 = vunpack.c.h.bf16 %v3659
        %v3662 = vsub.f32 %v3657, %v3660
        %v3663 = vsub.f32 %v3658, %v3661
        %v3664 = vpack.c.bf16 %v3663, %v3662
        %v3665 = vunpack.c.l.bf16 %v3664
        %v3666 = vunpack.c.h.bf16 %v3664
        %v3667 = vsub.f32 %v3662, %v3665
        %v3668 = vsub.f32 %v3663, %v3666
        %v3669 = vpack.c.bf16 %v3668, %v3667
        %v3670 = vld [vmem:[#allocation4] sm:$0xf]
        %v3671 = vld [vmem:[#allocation4 + $0x4] sm:$0xf]
        %v3674 = vunpack.c.l.b16 %v3670
        %v3675 = vunpack.c.l.b16 %v3671
        %v3676 = vpack.c.b16 %v3675, %v3674
        %v3679 = vsel %vm254, %v3664, 0
        %3681 = vmatprep.subr.bf16.mxu0 0
        %3682 = vmatpush1.bf16.msra.mxu0 %v3676
        %3683 = vmatprep.subr.bf16.mxu0 0
        %3684 = vmatpush1.bf16.msra.mxu0 0
        %3685 = vmatprep.subr.bf16.mxu0 0
        %3686 = vmatpush1.bf16.msra.mxu0 0
        %3687 = vmatprep.subr.bf16.mxu0 0
        %3688 = vmatpush1.bf16.msra.mxu0 0
        %3689 = vmatprep.subr.bf16.mxu0 0
        %3690 = vmatpush1.bf16.msra.mxu0 0
        %3691 = vmatprep.subr.bf16.mxu0 0
        %3692 = vmatpush1.bf16.msra.mxu0 0
        %3693 = vmatprep.subr.bf16.mxu0 0
        %3694 = vmatpush1.bf16.msra.mxu0 0
        %3695 = vmatprep.subr.bf16.mxu0 0
        %3696 = vmatpush1.bf16.msra.mxu0 0
        %3697 = vmatprep.subr.bf16.mxu0 0
        %3698 = vmatpush1.bf16.msra.mxu0 0
        %3699 = vmatprep.subr.bf16.mxu0 0
        %3700 = vmatpush1.bf16.msra.mxu0 0
        %3701 = vmatprep.subr.bf16.mxu0 0
        %3702 = vmatpush1.bf16.msra.mxu0 0
        %3703 = vmatprep.subr.bf16.mxu0 0
        %3704 = vmatpush1.bf16.msra.mxu0 0
        %3705 = vmatprep.subr.bf16.mxu0 0
        %3706 = vmatpush1.bf16.msra.mxu0 0
        %3707 = vmatprep.subr.bf16.mxu0 0
        %3708 = vmatpush1.bf16.msra.mxu0 0
        %3709 = vmatprep.subr.bf16.mxu0 0
        %3710 = vmatpush1.bf16.msra.mxu0 0
        %3711 = vmatprep.subr.bf16.mxu0 0
        %3712 = vmatpush1.bf16.msra.mxu0 0
        %3713 = vmatprep.mubr.bf16.mxu0 0
        %3714 = vmatmul.mubr.bf16.gmra.mrb[0].mxu0 %v3679
        %v3715 = vpop.f32.mrb[0].mxu0
        %v3716 = vadd.f32 0.0, %v3715
        %v3717 = vpop.f32.mrb[0].mxu0
        %v3718 = vpop.f32.mrb[0].mxu0
        %v3719 = vadd.f32 0.0, %v3718
        %v3720 = vpop.f32.mrb[0].mxu0
        %3721 = vdwg.mxu0
        %v3723 = vsel %vm254, %v3659, 0
        %3725 = vmatprep.subr.bf16.mxu0 0
        %3726 = vmatpush1.bf16.msra.mxu0 %v3676
        %3727 = vmatprep.subr.bf16.mxu0 0
        %3728 = vmatpush1.bf16.msra.mxu0 0
        %3729 = vmatprep.subr.bf16.mxu0 0
        %3730 = vmatpush1.bf16.msra.mxu0 0
        %3731 = vmatprep.subr.bf16.mxu0 0
        %3732 = vmatpush1.bf16.msra.mxu0 0
        %3733 = vmatprep.subr.bf16.mxu0 0
        %3734 = vmatpush1.bf16.msra.mxu0 0
        %3735 = vmatprep.subr.bf16.mxu0 0
        %3736 = vmatpush1.bf16.msra.mxu0 0
        %3737 = vmatprep.subr.bf16.mxu0 0
        %3738 = vmatpush1.bf16.msra.mxu0 0
        %3739 = vmatprep.subr.bf16.mxu0 0
        %3740 = vmatpush1.bf16.msra.mxu0 0
        %3741 = vmatprep.subr.bf16.mxu0 0
        %3742 = vmatpush1.bf16.msra.mxu0 0
        %3743 = vmatprep.subr.bf16.mxu0 0
        %3744 = vmatpush1.bf16.msra.mxu0 0
        %3745 = vmatprep.subr.bf16.mxu0 0
        %3746 = vmatpush1.bf16.msra.mxu0 0
        %3747 = vmatprep.subr.bf16.mxu0 0
        %3748 = vmatpush1.bf16.msra.mxu0 0
        %3749 = vmatprep.subr.bf16.mxu0 0
        %3750 = vmatpush1.bf16.msra.mxu0 0
        %3751 = vmatprep.subr.bf16.mxu0 0
        %3752 = vmatpush1.bf16.msra.mxu0 0
        %3753 = vmatprep.subr.bf16.mxu0 0
        %3754 = vmatpush1.bf16.msra.mxu0 0
        %3755 = vmatprep.subr.bf16.mxu0 0
        %3756 = vmatpush1.bf16.msra.mxu0 0
        %3757 = vmatprep.mubr.bf16.mxu0 0
        %3758 = vmatmul.mubr.bf16.gmra.mrb[0].mxu0 %v3723
        %v3759 = vpop.f32.mrb[0].mxu0
        %v3760 = vadd.f32 %v3716, %v3759
        %v3761 = vpop.f32.mrb[0].mxu0
        %v3762 = vpop.f32.mrb[0].mxu0
        %v3763 = vadd.f32 %v3719, %v3762
        %v3764 = vpop.f32.mrb[0].mxu0
        %3765 = vdwg.mxu0
        %v3767 = vsel %vm254, %v3669, 0
        %3769 = vmatprep.subr.bf16.mxu0 0
        %3770 = vmatpush1.bf16.msra.mxu0 %v3676
        %3771 = vmatprep.subr.bf16.mxu0 0
        %3772 = vmatpush1.bf16.msra.mxu0 0
        %3773 = vmatprep.subr.bf16.mxu0 0
        %3774 = vmatpush1.bf16.msra.mxu0 0
        %3775 = vmatprep.subr.bf16.mxu0 0
        %3776 = vmatpush1.bf16.msra.mxu0 0
        %3777 = vmatprep.subr.bf16.mxu0 0
        %3778 = vmatpush1.bf16.msra.mxu0 0
        %3779 = vmatprep.subr.bf16.mxu0 0
        %3780 = vmatpush1.bf16.msra.mxu0 0
        %3781 = vmatprep.subr.bf16.mxu0 0
        %3782 = vmatpush1.bf16.msra.mxu0 0
        %3783 = vmatprep.subr.bf16.mxu0 0
        %3784 = vmatpush1.bf16.msra.mxu0 0
        %3785 = vmatprep.subr.bf16.mxu0 0
        %3786 = vmatpush1.bf16.msra.mxu0 0
        %3787 = vmatprep.subr.bf16.mxu0 0
        %3788 = vmatpush1.bf16.msra.mxu0 0
        %3789 = vmatprep.subr.bf16.mxu0 0
        %3790 = vmatpush1.bf16.msra.mxu0 0
        %3791 = vmatprep.subr.bf16.mxu0 0
        %3792 = vmatpush1.bf16.msra.mxu0 0
        %3793 = vmatprep.subr.bf16.mxu0 0
        %3794 = vmatpush1.bf16.msra.mxu0 0
        %3795 = vmatprep.subr.bf16.mxu0 0
        %3796 = vmatpush1.bf16.msra.mxu0 0
        %3797 = vmatprep.subr.bf16.mxu0 0
        %3798 = vmatpush1.bf16.msra.mxu0 0
        %3799 = vmatprep.subr.bf16.mxu0 0
        %3800 = vmatpush1.bf16.msra.mxu0 0
        %3801 = vmatprep.mubr.bf16.mxu0 0
        %3802 = vmatmul.mubr.bf16.gmra.mrb[0].mxu0 %v3767
        %v3803 = vpop.f32.mrb[0].mxu0
        %v3804 = vadd.f32 0.0, %v3803
        %v3805 = vpop.f32.mrb[0].mxu0
        %v3806 = vpop.f32.mrb[0].mxu0
        %v3807 = vadd.f32 0.0, %v3806
        %v3808 = vpop.f32.mrb[0].mxu0
        %3809 = vdwg.mxu0
        %v3810 = vadd.f32 %v3760, %v3804
        %v3811 = vadd.f32 %v3763, %v3807
        %v3812 = vld [vmem:[%s389] sm:$0xf]
        %v3813 = vld [vmem:[%s389 + $0x4] sm:$0xf]
        %v3816 = vunpack.c.l.b16 %v3812
        %v3817 = vunpack.c.l.b16 %v3813
        %v3818 = vpack.c.b16 %v3817, %v3816
        %3820 = vmatprep.subr.bf16.mxu0 0
        %3821 = vmatpush1.bf16.msra.mxu0 %v3818
        %3822 = vmatprep.subr.bf16.mxu0 0
        %3823 = vmatpush1.bf16.msra.mxu0 0
        %3824 = vmatprep.subr.bf16.mxu0 0
        %3825 = vmatpush1.bf16.msra.mxu0 0
        %3826 = vmatprep.subr.bf16.mxu0 0
        %3827 = vmatpush1.bf16.msra.mxu0 0
        %3828 = vmatprep.subr.bf16.mxu0 0
        %3829 = vmatpush1.bf16.msra.mxu0 0
        %3830 = vmatprep.subr.bf16.mxu0 0
        %3831 = vmatpush1.bf16.msra.mxu0 0
        %3832 = vmatprep.subr.bf16.mxu0 0
        %3833 = vmatpush1.bf16.msra.mxu0 0
        %3834 = vmatprep.subr.bf16.mxu0 0
        %3835 = vmatpush1.bf16.msra.mxu0 0
        %3836 = vmatprep.subr.bf16.mxu0 0
        %3837 = vmatpush1.bf16.msra.mxu0 0
        %3838 = vmatprep.subr.bf16.mxu0 0
        %3839 = vmatpush1.bf16.msra.mxu0 0
        %3840 = vmatprep.subr.bf16.mxu0 0
        %3841 = vmatpush1.bf16.msra.mxu0 0
        %3842 = vmatprep.subr.bf16.mxu0 0
        %3843 = vmatpush1.bf16.msra.mxu0 0
        %3844 = vmatprep.subr.bf16.mxu0 0
        %3845 = vmatpush1.bf16.msra.mxu0 0
        %3846 = vmatprep.subr.bf16.mxu0 0
        %3847 = vmatpush1.bf16.msra.mxu0 0
        %3848 = vmatprep.subr.bf16.mxu0 0
        %3849 = vmatpush1.bf16.msra.mxu0 0
        %3850 = vmatprep.subr.bf16.mxu0 0
        %3851 = vmatpush1.bf16.msra.mxu0 0
        %3852 = vmatprep.mubr.bf16.mxu0 0
        %3853 = vmatmul.mubr.bf16.gmra.mrb[0].mxu0 %v3723
        %v3854 = vpop.f32.mrb[0].mxu0
        %v3855 = vadd.f32 0.0, %v3854
        %v3856 = vpop.f32.mrb[0].mxu0
        %v3857 = vpop.f32.mrb[0].mxu0
        %v3858 = vadd.f32 0.0, %v3857
        %v3859 = vpop.f32.mrb[0].mxu0
        %3860 = vdwg.mxu0
        %v3861 = vadd.f32 %v3810, %v3855
        %v3862 = vadd.f32 %v3811, %v3858
        %3863 = vmatprep.subr.bf16.mxu0 0
        %3864 = vmatpush1.bf16.msra.mxu0 %v3818
        %3865 = vmatprep.subr.bf16.mxu0 0
        %3866 = vmatpush1.bf16.msra.mxu0 0
        %3867 = vmatprep.subr.bf16.mxu0 0
        %3868 = vmatpush1.bf16.msra.mxu0 0
        %3869 = vmatprep.subr.bf16.mxu0 0
        %3870 = vmatpush1.bf16.msra.mxu0 0
        %3871 = vmatprep.subr.bf16.mxu0 0
        %3872 = vmatpush1.bf16.msra.mxu0 0
        %3873 = vmatprep.subr.bf16.mxu0 0
        %3874 = vmatpush1.bf16.msra.mxu0 0
        %3875 = vmatprep.subr.bf16.mxu0 0
        %3876 = vmatpush1.bf16.msra.mxu0 0
        %3877 = vmatprep.subr.bf16.mxu0 0
        %3878 = vmatpush1.bf16.msra.mxu0 0
        %3879 = vmatprep.subr.bf16.mxu0 0
        %3880 = vmatpush1.bf16.msra.mxu0 0
        %3881 = vmatprep.subr.bf16.mxu0 0
        %3882 = vmatpush1.bf16.msra.mxu0 0
        %3883 = vmatprep.subr.bf16.mxu0 0
        %3884 = vmatpush1.bf16.msra.mxu0 0
        %3885 = vmatprep.subr.bf16.mxu0 0
        %3886 = vmatpush1.bf16.msra.mxu0 0
        %3887 = vmatprep.subr.bf16.mxu0 0
        %3888 = vmatpush1.bf16.msra.mxu0 0
        %3889 = vmatprep.subr.bf16.mxu0 0
        %3890 = vmatpush1.bf16.msra.mxu0 0
        %3891 = vmatprep.subr.bf16.mxu0 0
        %3892 = vmatpush1.bf16.msra.mxu0 0
        %3893 = vmatprep.subr.bf16.mxu0 0
        %3894 = vmatpush1.bf16.msra.mxu0 0
        %3895 = vmatprep.mubr.bf16.mxu0 0
        %3896 = vmatmul.mubr.bf16.gmra.mrb[0].mxu0 %v3679
        %v3897 = vpop.f32.mrb[0].mxu0
        %v3898 = vadd.f32 0.0, %v3897
        %v3899 = vpop.f32.mrb[0].mxu0
        %v3900 = vpop.f32.mrb[0].mxu0
        %v3901 = vadd.f32 0.0, %v3900
        %v3902 = vpop.f32.mrb[0].mxu0
        %3903 = vdwg.mxu0
        %v3904 = vadd.f32 %v3861, %v3898
        %v3905 = vadd.f32 %v3862, %v3901
        %3906 = vmatprep.subr.bf16.mxu0 0
        %3907 = vmatpush1.bf16.msra.mxu0 %v3818
        %3908 = vmatprep.subr.bf16.mxu0 0
        %3909 = vmatpush1.bf16.msra.mxu0 0
        %3910 = vmatprep.subr.bf16.mxu0 0
        %3911 = vmatpush1.bf16.msra.mxu0 0
        %3912 = vmatprep.subr.bf16.mxu0 0
        %3913 = vmatpush1.bf16.msra.mxu0 0
        %3914 = vmatprep.subr.bf16.mxu0 0
        %3915 = vmatpush1.bf16.msra.mxu0 0
        %3916 = vmatprep.subr.bf16.mxu0 0
        %3917 = vmatpush1.bf16.msra.mxu0 0
        %3918 = vmatprep.subr.bf16.mxu0 0
        %3919 = vmatpush1.bf16.msra.mxu0 0
        %3920 = vmatprep.subr.bf16.mxu0 0
        %3921 = vmatpush1.bf16.msra.mxu0 0
        %3922 = vmatprep.subr.bf16.mxu0 0
        %3923 = vmatpush1.bf16.msra.mxu0 0
        %3924 = vmatprep.subr.bf16.mxu0 0
        %3925 = vmatpush1.bf16.msra.mxu0 0
        %3926 = vmatprep.subr.bf16.mxu0 0
        %3927 = vmatpush1.bf16.msra.mxu0 0
        %3928 = vmatprep.subr.bf16.mxu0 0
        %3929 = vmatpush1.bf16.msra.mxu0 0
        %3930 = vmatprep.subr.bf16.mxu0 0
        %3931 = vmatpush1.bf16.msra.mxu0 0
        %3932 = vmatprep.subr.bf16.mxu0 0
        %3933 = vmatpush1.bf16.msra.mxu0 0
        %3934 = vmatprep.subr.bf16.mxu0 0
        %3935 = vmatpush1.bf16.msra.mxu0 0
        %3936 = vmatprep.subr.bf16.mxu0 0
        %3937 = vmatpush1.bf16.msra.mxu0 0
        %3938 = vmatprep.mubr.bf16.mxu0 0
        %3939 = vmatmul.mubr.bf16.gmra.mrb[0].mxu0 %v3767
        %v3940 = vpop.f32.mrb[0].mxu0
        %v3941 = vadd.f32 0.0, %v3940
        %v3942 = vpop.f32.mrb[0].mxu0
        %v3943 = vpop.f32.mrb[0].mxu0
        %v3944 = vadd.f32 0.0, %v3943
        %v3945 = vpop.f32.mrb[0].mxu0
        %3946 = vdwg.mxu0
        %v3947 = vadd.f32 %v3904, %v3941
        %v3948 = vadd.f32 %v3905, %v3944
        %v3949 = vld [vmem:[%s527] sm:$0xf]
        %v3950 = vld [vmem:[%s527 + $0x4] sm:$0xf]
        %v3953 = vunpack.c.l.b16 %v3949
        %v3954 = vunpack.c.l.b16 %v3950
        %v3955 = vpack.c.b16 %v3954, %v3953
        %3957 = vmatprep.subr.bf16.mxu0 0
        %3958 = vmatpush1.bf16.msra.mxu0 %v3955
        %3959 = vmatprep.subr.bf16.mxu0 0
        %3960 = vmatpush1.bf16.msra.mxu0 0
        %3961 = vmatprep.subr.bf16.mxu0 0
        %3962 = vmatpush1.bf16.msra.mxu0 0
        %3963 = vmatprep.subr.bf16.mxu0 0
        %3964 = vmatpush1.bf16.msra.mxu0 0
        %3965 = vmatprep.subr.bf16.mxu0 0
        %3966 = vmatpush1.bf16.msra.mxu0 0
        %3967 = vmatprep.subr.bf16.mxu0 0
        %3968 = vmatpush1.bf16.msra.mxu0 0
        %3969 = vmatprep.subr.bf16.mxu0 0
        %3970 = vmatpush1.bf16.msra.mxu0 0
        %3971 = vmatprep.subr.bf16.mxu0 0
        %3972 = vmatpush1.bf16.msra.mxu0 0
        %3973 = vmatprep.subr.bf16.mxu0 0
        %3974 = vmatpush1.bf16.msra.mxu0 0
        %3975 = vmatprep.subr.bf16.mxu0 0
        %3976 = vmatpush1.bf16.msra.mxu0 0
        %3977 = vmatprep.subr.bf16.mxu0 0
        %3978 = vmatpush1.bf16.msra.mxu0 0
        %3979 = vmatprep.subr.bf16.mxu0 0
        %3980 = vmatpush1.bf16.msra.mxu0 0
        %3981 = vmatprep.subr.bf16.mxu0 0
        %3982 = vmatpush1.bf16.msra.mxu0 0
        %3983 = vmatprep.subr.bf16.mxu0 0
        %3984 = vmatpush1.bf16.msra.mxu0 0
        %3985 = vmatprep.subr.bf16.mxu0 0
        %3986 = vmatpush1.bf16.msra.mxu0 0
        %3987 = vmatprep.subr.bf16.mxu0 0
        %3988 = vmatpush1.bf16.msra.mxu0 0
        %3989 = vmatprep.mubr.bf16.mxu0 0
        %3990 = vmatmul.mubr.bf16.gmra.mrb[0].mxu0 %v3723
        %v3991 = vpop.f32.mrb[0].mxu0
        %v3992 = vadd.f32 0.0, %v3991
        %v3993 = vpop.f32.mrb[0].mxu0
        %v3994 = vpop.f32.mrb[0].mxu0
        %v3995 = vadd.f32 0.0, %v3994
        %v3996 = vpop.f32.mrb[0].mxu0
        %3997 = vdwg.mxu0
        %v3998 = vadd.f32 %v3947, %v3992
        %v3999 = vadd.f32 %v3948, %v3995
        %4000 = vmatprep.subr.bf16.mxu0 0
        %4001 = vmatpush1.bf16.msra.mxu0 %v3955
        %4002 = vmatprep.subr.bf16.mxu0 0
        %4003 = vmatpush1.bf16.msra.mxu0 0
        %4004 = vmatprep.subr.bf16.mxu0 0
        %4005 = vmatpush1.bf16.msra.mxu0 0
        %4006 = vmatprep.subr.bf16.mxu0 0
        %4007 = vmatpush1.bf16.msra.mxu0 0
        %4008 = vmatprep.subr.bf16.mxu0 0
        %4009 = vmatpush1.bf16.msra.mxu0 0
        %4010 = vmatprep.subr.bf16.mxu0 0
        %4011 = vmatpush1.bf16.msra.mxu0 0
        %4012 = vmatprep.subr.bf16.mxu0 0
        %4013 = vmatpush1.bf16.msra.mxu0 0
        %4014 = vmatprep.subr.bf16.mxu0 0
        %4015 = vmatpush1.bf16.msra.mxu0 0
        %4016 = vmatprep.subr.bf16.mxu0 0
        %4017 = vmatpush1.bf16.msra.mxu0 0
        %4018 = vmatprep.subr.bf16.mxu0 0
        %4019 = vmatpush1.bf16.msra.mxu0 0
        %4020 = vmatprep.subr.bf16.mxu0 0
        %4021 = vmatpush1.bf16.msra.mxu0 0
        %4022 = vmatprep.subr.bf16.mxu0 0
        %4023 = vmatpush1.bf16.msra.mxu0 0
        %4024 = vmatprep.subr.bf16.mxu0 0
        %4025 = vmatpush1.bf16.msra.mxu0 0
        %4026 = vmatprep.subr.bf16.mxu0 0
        %4027 = vmatpush1.bf16.msra.mxu0 0
        %4028 = vmatprep.subr.bf16.mxu0 0
        %4029 = vmatpush1.bf16.msra.mxu0 0
        %4030 = vmatprep.subr.bf16.mxu0 0
        %4031 = vmatpush1.bf16.msra.mxu0 0
        %4032 = vmatprep.mubr.bf16.mxu0 0
        %4033 = vmatmul.mubr.bf16.gmra.mrb[0].mxu0 %v3679
        %v4034 = vpop.f32.mrb[0].mxu0
        %v4035 = vadd.f32 0.0, %v4034
        %v4036 = vpop.f32.mrb[0].mxu0
        %v4037 = vpop.f32.mrb[0].mxu0
        %v4038 = vadd.f32 0.0, %v4037
        %v4039 = vpop.f32.mrb[0].mxu0
        %4040 = vdwg.mxu0
        %v4041 = vadd.f32 %v3998, %v4035
        %v4042 = vadd.f32 %v3999, %v4038
        %4043 = vmatprep.subr.bf16.mxu0 0
        %4044 = vmatpush1.bf16.msra.mxu0 %v3955
        %4045 = vmatprep.subr.bf16.mxu0 0
        %4046 = vmatpush1.bf16.msra.mxu0 0
        %4047 = vmatprep.subr.bf16.mxu0 0
        %4048 = vmatpush1.bf16.msra.mxu0 0
        %4049 = vmatprep.subr.bf16.mxu0 0
        %4050 = vmatpush1.bf16.msra.mxu0 0
        %4051 = vmatprep.subr.bf16.mxu0 0
        %4052 = vmatpush1.bf16.msra.mxu0 0
        %4053 = vmatprep.subr.bf16.mxu0 0
        %4054 = vmatpush1.bf16.msra.mxu0 0
        %4055 = vmatprep.subr.bf16.mxu0 0
        %4056 = vmatpush1.bf16.msra.mxu0 0
        %4057 = vmatprep.subr.bf16.mxu0 0
        %4058 = vmatpush1.bf16.msra.mxu0 0
        %4059 = vmatprep.subr.bf16.mxu0 0
        %4060 = vmatpush1.bf16.msra.mxu0 0
        %4061 = vmatprep.subr.bf16.mxu0 0
        %4062 = vmatpush1.bf16.msra.mxu0 0
        %4063 = vmatprep.subr.bf16.mxu0 0
        %4064 = vmatpush1.bf16.msra.mxu0 0
        %4065 = vmatprep.subr.bf16.mxu0 0
        %4066 = vmatpush1.bf16.msra.mxu0 0
        %4067 = vmatprep.subr.bf16.mxu0 0
        %4068 = vmatpush1.bf16.msra.mxu0 0
        %4069 = vmatprep.subr.bf16.mxu0 0
        %4070 = vmatpush1.bf16.msra.mxu0 0
        %4071 = vmatprep.subr.bf16.mxu0 0
        %4072 = vmatpush1.bf16.msra.mxu0 0
        %4073 = vmatprep.subr.bf16.mxu0 0
        %4074 = vmatpush1.bf16.msra.mxu0 0
        %4075 = vmatprep.mubr.bf16.mxu0 0
        %4076 = vmatmul.mubr.bf16.gmra.mrb[0].mxu0 %v3767
        %v4077 = vpop.f32.mrb[0].mxu0
        %v4078 = vadd.f32 0.0, %v4077
        %v4079 = vpop.f32.mrb[0].mxu0
        %v4080 = vpop.f32.mrb[0].mxu0
        %v4081 = vadd.f32 0.0, %v4080
        %v4082 = vpop.f32.mrb[0].mxu0
        %4083 = vdwg.mxu0
        %v4084 = vadd.f32 %v4041, %v4078
        %v4085 = vadd.f32 %v4042, %v4081
        %v4086 = vld [vmem:[%s665] sm:$0xf]
        %v4087 = vld [vmem:[%s665 + $0x4] sm:$0xf]
        %v4090 = vunpack.c.l.b16 %v4086
        %v4091 = vunpack.c.l.b16 %v4087
        %v4092 = vpack.c.b16 %v4091, %v4090
        %4094 = vmatprep.subr.bf16.mxu0 0
        %4095 = vmatpush1.bf16.msra.mxu0 %v4092
        %4096 = vmatprep.subr.bf16.mxu0 0
        %4097 = vmatpush1.bf16.msra.mxu0 0
        %4098 = vmatprep.subr.bf16.mxu0 0
        %4099 = vmatpush1.bf16.msra.mxu0 0
        %4100 = vmatprep.subr.bf16.mxu0 0
        %4101 = vmatpush1.bf16.msra.mxu0 0
        %4102 = vmatprep.subr.bf16.mxu0 0
        %4103 = vmatpush1.bf16.msra.mxu0 0
        %4104 = vmatprep.subr.bf16.mxu0 0
        %4105 = vmatpush1.bf16.msra.mxu0 0
        %4106 = vmatprep.subr.bf16.mxu0 0
        %4107 = vmatpush1.bf16.msra.mxu0 0
        %4108 = vmatprep.subr.bf16.mxu0 0
        %4109 = vmatpush1.bf16.msra.mxu0 0
        %4110 = vmatprep.subr.bf16.mxu0 0
        %4111 = vmatpush1.bf16.msra.mxu0 0
        %4112 = vmatprep.subr.bf16.mxu0 0
        %4113 = vmatpush1.bf16.msra.mxu0 0
        %4114 = vmatprep.subr.bf16.mxu0 0
        %4115 = vmatpush1.bf16.msra.mxu0 0
        %4116 = vmatprep.subr.bf16.mxu0 0
        %4117 = vmatpush1.bf16.msra.mxu0 0
        %4118 = vmatprep.subr.bf16.mxu0 0
        %4119 = vmatpush1.bf16.msra.mxu0 0
        %4120 = vmatprep.subr.bf16.mxu0 0
        %4121 = vmatpush1.bf16.msra.mxu0 0
        %4122 = vmatprep.subr.bf16.mxu0 0
        %4123 = vmatpush1.bf16.msra.mxu0 0
        %4124 = vmatprep.subr.bf16.mxu0 0
        %4125 = vmatpush1.bf16.msra.mxu0 0
        %4126 = vmatprep.mubr.bf16.mxu0 0
        %4127 = vmatmul.mubr.bf16.gmra.mrb[0].mxu0 %v3723
        %v4128 = vpop.f32.mrb[0].mxu0
        %v4129 = vadd.f32 0.0, %v4128
        %v4130 = vpop.f32.mrb[0].mxu0
        %v4131 = vpop.f32.mrb[0].mxu0
        %v4132 = vadd.f32 0.0, %v4131
        %v4133 = vpop.f32.mrb[0].mxu0
        %4134 = vdwg.mxu0
        %v4135 = vadd.f32 %v4084, %v4129
        %v4136 = vadd.f32 %v4085, %v4132
        %4137 = vmatprep.subr.bf16.mxu0 0
        %4138 = vmatpush1.bf16.msra.mxu0 %v4092
        %4139 = vmatprep.subr.bf16.mxu0 0
        %4140 = vmatpush1.bf16.msra.mxu0 0
        %4141 = vmatprep.subr.bf16.mxu0 0
        %4142 = vmatpush1.bf16.msra.mxu0 0
        %4143 = vmatprep.subr.bf16.mxu0 0
        %4144 = vmatpush1.bf16.msra.mxu0 0
        %4145 = vmatprep.subr.bf16.mxu0 0
        %4146 = vmatpush1.bf16.msra.mxu0 0
        %4147 = vmatprep.subr.bf16.mxu0 0
        %4148 = vmatpush1.bf16.msra.mxu0 0
        %4149 = vmatprep.subr.bf16.mxu0 0
        %4150 = vmatpush1.bf16.msra.mxu0 0
        %4151 = vmatprep.subr.bf16.mxu0 0
        %4152 = vmatpush1.bf16.msra.mxu0 0
        %4153 = vmatprep.subr.bf16.mxu0 0
        %4154 = vmatpush1.bf16.msra.mxu0 0
        %4155 = vmatprep.subr.bf16.mxu0 0
        %4156 = vmatpush1.bf16.msra.mxu0 0
        %4157 = vmatprep.subr.bf16.mxu0 0
        %4158 = vmatpush1.bf16.msra.mxu0 0
        %4159 = vmatprep.subr.bf16.mxu0 0
        %4160 = vmatpush1.bf16.msra.mxu0 0
        %4161 = vmatprep.subr.bf16.mxu0 0
        %4162 = vmatpush1.bf16.msra.mxu0 0
        %4163 = vmatprep.subr.bf16.mxu0 0
        %4164 = vmatpush1.bf16.msra.mxu0 0
        %4165 = vmatprep.subr.bf16.mxu0 0
        %4166 = vmatpush1.bf16.msra.mxu0 0
        %4167 = vmatprep.subr.bf16.mxu0 0
        %4168 = vmatpush1.bf16.msra.mxu0 0
        %4169 = vmatprep.mubr.bf16.mxu0 0
        %4170 = vmatmul.mubr.bf16.gmra.mrb[0].mxu0 %v3679
        %v4171 = vpop.f32.mrb[0].mxu0
        %v4172 = vadd.f32 0.0, %v4171
        %v4173 = vpop.f32.mrb[0].mxu0
        %v4174 = vpop.f32.mrb[0].mxu0
        %v4175 = vadd.f32 0.0, %v4174
        %v4176 = vpop.f32.mrb[0].mxu0
        %4177 = vdwg.mxu0
        %v4178 = vadd.f32 %v4135, %v4172
        %v4179 = vadd.f32 %v4136, %v4175
        %4180 = vmatprep.subr.bf16.mxu0 0
        %4181 = vmatpush1.bf16.msra.mxu0 %v4092
        %4182 = vmatprep.subr.bf16.mxu0 0
        %4183 = vmatpush1.bf16.msra.mxu0 0
        %4184 = vmatprep.subr.bf16.mxu0 0
        %4185 = vmatpush1.bf16.msra.mxu0 0
        %4186 = vmatprep.subr.bf16.mxu0 0
        %4187 = vmatpush1.bf16.msra.mxu0 0
        %4188 = vmatprep.subr.bf16.mxu0 0
        %4189 = vmatpush1.bf16.msra.mxu0 0
        %4190 = vmatprep.subr.bf16.mxu0 0
        %4191 = vmatpush1.bf16.msra.mxu0 0
        %4192 = vmatprep.subr.bf16.mxu0 0
        %4193 = vmatpush1.bf16.msra.mxu0 0
        %4194 = vmatprep.subr.bf16.mxu0 0
        %4195 = vmatpush1.bf16.msra.mxu0 0
        %4196 = vmatprep.subr.bf16.mxu0 0
        %4197 = vmatpush1.bf16.msra.mxu0 0
        %4198 = vmatprep.subr.bf16.mxu0 0
        %4199 = vmatpush1.bf16.msra.mxu0 0
        %4200 = vmatprep.subr.bf16.mxu0 0
        %4201 = vmatpush1.bf16.msra.mxu0 0
        %4202 = vmatprep.subr.bf16.mxu0 0
        %4203 = vmatpush1.bf16.msra.mxu0 0
        %4204 = vmatprep.subr.bf16.mxu0 0
        %4205 = vmatpush1.bf16.msra.mxu0 0
        %4206 = vmatprep.subr.bf16.mxu0 0
        %4207 = vmatpush1.bf16.msra.mxu0 0
        %4208 = vmatprep.subr.bf16.mxu0 0
        %4209 = vmatpush1.bf16.msra.mxu0 0
        %4210 = vmatprep.subr.bf16.mxu0 0
        %4211 = vmatpush1.bf16.msra.mxu0 0
        %4212 = vmatprep.mubr.bf16.mxu0 0
        %4213 = vmatmul.mubr.bf16.gmra.mrb[0].mxu0 %v3767
        %v4214 = vpop.f32.mrb[0].mxu0
        %v4215 = vadd.f32 0.0, %v4214
        %v4216 = vpop.f32.mrb[0].mxu0
        %v4217 = vpop.f32.mrb[0].mxu0
        %v4218 = vadd.f32 0.0, %v4217
        %v4219 = vpop.f32.mrb[0].mxu0
        %4220 = vdwg.mxu0
        %v4221 = vadd.f32 %v4178, %v4215
        %v4222 = vadd.f32 %v4179, %v4218
        %s4223 = scalar_lea.vmem %s229, 96 [#allocation6]
        %4224 = vst.msk [vmem:[%s4223] sm:$0xff] %vm803, %v4221
        %4225 = vst.msk [vmem:[%s4223 + $0x8] sm:$0xff] %vm803, %v4222
        %s4226 = scalar_lea.vmem %s206, 112 [#allocation2]
        %v4227 = vld [vmem:[%s4226] sm:$0xff]
        %v4228 = vld [vmem:[%s4226 + $0x8] sm:$0xff]
        %v4229 = vpack.c.bf16 %v4228, %v4227
        %v4230 = vunpack.c.l.bf16 %v4229
        %v4231 = vunpack.c.h.bf16 %v4229
        %v4232 = vsub.f32 %v4227, %v4230
        %v4233 = vsub.f32 %v4228, %v4231
        %v4234 = vpack.c.bf16 %v4233, %v4232
        %v4235 = vunpack.c.l.bf16 %v4234
        %v4236 = vunpack.c.h.bf16 %v4234
        %v4237 = vsub.f32 %v4232, %v4235
        %v4238 = vsub.f32 %v4233, %v4236
        %v4239 = vpack.c.bf16 %v4238, %v4237
        %v4240 = vld [vmem:[#allocation4] sm:$0xf]
        %v4241 = vld [vmem:[#allocation4 + $0x4] sm:$0xf]
        %v4244 = vunpack.c.l.b16 %v4240
        %v4245 = vunpack.c.l.b16 %v4241
        %v4246 = vpack.c.b16 %v4245, %v4244
        %v4249 = vsel %vm254, %v4234, 0
        %4251 = vmatprep.subr.bf16.mxu0 0
        %4252 = vmatpush1.bf16.msra.mxu0 %v4246
        %4253 = vmatprep.subr.bf16.mxu0 0
        %4254 = vmatpush1.bf16.msra.mxu0 0
        %4255 = vmatprep.subr.bf16.mxu0 0
        %4256 = vmatpush1.bf16.msra.mxu0 0
        %4257 = vmatprep.subr.bf16.mxu0 0
        %4258 = vmatpush1.bf16.msra.mxu0 0
        %4259 = vmatprep.subr.bf16.mxu0 0
        %4260 = vmatpush1.bf16.msra.mxu0 0
        %4261 = vmatprep.subr.bf16.mxu0 0
        %4262 = vmatpush1.bf16.msra.mxu0 0
        %4263 = vmatprep.subr.bf16.mxu0 0
        %4264 = vmatpush1.bf16.msra.mxu0 0
        %4265 = vmatprep.subr.bf16.mxu0 0
        %4266 = vmatpush1.bf16.msra.mxu0 0
        %4267 = vmatprep.subr.bf16.mxu0 0
        %4268 = vmatpush1.bf16.msra.mxu0 0
        %4269 = vmatprep.subr.bf16.mxu0 0
        %4270 = vmatpush1.bf16.msra.mxu0 0
        %4271 = vmatprep.subr.bf16.mxu0 0
        %4272 = vmatpush1.bf16.msra.mxu0 0
        %4273 = vmatprep.subr.bf16.mxu0 0
        %4274 = vmatpush1.bf16.msra.mxu0 0
        %4275 = vmatprep.subr.bf16.mxu0 0
        %4276 = vmatpush1.bf16.msra.mxu0 0
        %4277 = vmatprep.subr.bf16.mxu0 0
        %4278 = vmatpush1.bf16.msra.mxu0 0
        %4279 = vmatprep.subr.bf16.mxu0 0
        %4280 = vmatpush1.bf16.msra.mxu0 0
        %4281 = vmatprep.subr.bf16.mxu0 0
        %4282 = vmatpush1.bf16.msra.mxu0 0
        %4283 = vmatprep.mubr.bf16.mxu0 0
        %4284 = vmatmul.mubr.bf16.gmra.mrb[0].mxu0 %v4249
        %v4285 = vpop.f32.mrb[0].mxu0
        %v4286 = vadd.f32 0.0, %v4285
        %v4287 = vpop.f32.mrb[0].mxu0
        %v4288 = vpop.f32.mrb[0].mxu0
        %v4289 = vadd.f32 0.0, %v4288
        %v4290 = vpop.f32.mrb[0].mxu0
        %4291 = vdwg.mxu0
        %v4293 = vsel %vm254, %v4229, 0
        %4295 = vmatprep.subr.bf16.mxu0 0
        %4296 = vmatpush1.bf16.msra.mxu0 %v4246
        %4297 = vmatprep.subr.bf16.mxu0 0
        %4298 = vmatpush1.bf16.msra.mxu0 0
        %4299 = vmatprep.subr.bf16.mxu0 0
        %4300 = vmatpush1.bf16.msra.mxu0 0
        %4301 = vmatprep.subr.bf16.mxu0 0
        %4302 = vmatpush1.bf16.msra.mxu0 0
        %4303 = vmatprep.subr.bf16.mxu0 0
        %4304 = vmatpush1.bf16.msra.mxu0 0
        %4305 = vmatprep.subr.bf16.mxu0 0
        %4306 = vmatpush1.bf16.msra.mxu0 0
        %4307 = vmatprep.subr.bf16.mxu0 0
        %4308 = vmatpush1.bf16.msra.mxu0 0
        %4309 = vmatprep.subr.bf16.mxu0 0
        %4310 = vmatpush1.bf16.msra.mxu0 0
        %4311 = vmatprep.subr.bf16.mxu0 0
        %4312 = vmatpush1.bf16.msra.mxu0 0
        %4313 = vmatprep.subr.bf16.mxu0 0
        %4314 = vmatpush1.bf16.msra.mxu0 0
        %4315 = vmatprep.subr.bf16.mxu0 0
        %4316 = vmatpush1.bf16.msra.mxu0 0
        %4317 = vmatprep.subr.bf16.mxu0 0
        %4318 = vmatpush1.bf16.msra.mxu0 0
        %4319 = vmatprep.subr.bf16.mxu0 0
        %4320 = vmatpush1.bf16.msra.mxu0 0
        %4321 = vmatprep.subr.bf16.mxu0 0
        %4322 = vmatpush1.bf16.msra.mxu0 0
        %4323 = vmatprep.subr.bf16.mxu0 0
        %4324 = vmatpush1.bf16.msra.mxu0 0
        %4325 = vmatprep.subr.bf16.mxu0 0
        %4326 = vmatpush1.bf16.msra.mxu0 0
        %4327 = vmatprep.mubr.bf16.mxu0 0
        %4328 = vmatmul.mubr.bf16.gmra.mrb[0].mxu0 %v4293
        %v4329 = vpop.f32.mrb[0].mxu0
        %v4330 = vadd.f32 %v4286, %v4329
        %v4331 = vpop.f32.mrb[0].mxu0
        %v4332 = vpop.f32.mrb[0].mxu0
        %v4333 = vadd.f32 %v4289, %v4332
        %v4334 = vpop.f32.mrb[0].mxu0
        %4335 = vdwg.mxu0
        %v4337 = vsel %vm254, %v4239, 0
        %4339 = vmatprep.subr.bf16.mxu0 0
        %4340 = vmatpush1.bf16.msra.mxu0 %v4246
        %4341 = vmatprep.subr.bf16.mxu0 0
        %4342 = vmatpush1.bf16.msra.mxu0 0
        %4343 = vmatprep.subr.bf16.mxu0 0
        %4344 = vmatpush1.bf16.msra.mxu0 0
        %4345 = vmatprep.subr.bf16.mxu0 0
        %4346 = vmatpush1.bf16.msra.mxu0 0
        %4347 = vmatprep.subr.bf16.mxu0 0
        %4348 = vmatpush1.bf16.msra.mxu0 0
        %4349 = vmatprep.subr.bf16.mxu0 0
        %4350 = vmatpush1.bf16.msra.mxu0 0
        %4351 = vmatprep.subr.bf16.mxu0 0
        %4352 = vmatpush1.bf16.msra.mxu0 0
        %4353 = vmatprep.subr.bf16.mxu0 0
        %4354 = vmatpush1.bf16.msra.mxu0 0
        %4355 = vmatprep.subr.bf16.mxu0 0
        %4356 = vmatpush1.bf16.msra.mxu0 0
        %4357 = vmatprep.subr.bf16.mxu0 0
        %4358 = vmatpush1.bf16.msra.mxu0 0
        %4359 = vmatprep.subr.bf16.mxu0 0
        %4360 = vmatpush1.bf16.msra.mxu0 0
        %4361 = vmatprep.subr.bf16.mxu0 0
        %4362 = vmatpush1.bf16.msra.mxu0 0
        %4363 = vmatprep.subr.bf16.mxu0 0
        %4364 = vmatpush1.bf16.msra.mxu0 0
        %4365 = vmatprep.subr.bf16.mxu0 0
        %4366 = vmatpush1.bf16.msra.mxu0 0
        %4367 = vmatprep.subr.bf16.mxu0 0
        %4368 = vmatpush1.bf16.msra.mxu0 0
        %4369 = vmatprep.subr.bf16.mxu0 0
        %4370 = vmatpush1.bf16.msra.mxu0 0
        %4371 = vmatprep.mubr.bf16.mxu0 0
        %4372 = vmatmul.mubr.bf16.gmra.mrb[0].mxu0 %v4337
        %v4373 = vpop.f32.mrb[0].mxu0
        %v4374 = vadd.f32 0.0, %v4373
        %v4375 = vpop.f32.mrb[0].mxu0
        %v4376 = vpop.f32.mrb[0].mxu0
        %v4377 = vadd.f32 0.0, %v4376
        %v4378 = vpop.f32.mrb[0].mxu0
        %4379 = vdwg.mxu0
        %v4380 = vadd.f32 %v4330, %v4374
        %v4381 = vadd.f32 %v4333, %v4377
        %v4382 = vld [vmem:[%s389] sm:$0xf]
        %v4383 = vld [vmem:[%s389 + $0x4] sm:$0xf]
        %v4386 = vunpack.c.l.b16 %v4382
        %v4387 = vunpack.c.l.b16 %v4383
        %v4388 = vpack.c.b16 %v4387, %v4386
        %4390 = vmatprep.subr.bf16.mxu0 0
        %4391 = vmatpush1.bf16.msra.mxu0 %v4388
        %4392 = vmatprep.subr.bf16.mxu0 0
        %4393 = vmatpush1.bf16.msra.mxu0 0
        %4394 = vmatprep.subr.bf16.mxu0 0
        %4395 = vmatpush1.bf16.msra.mxu0 0
        %4396 = vmatprep.subr.bf16.mxu0 0
        %4397 = vmatpush1.bf16.msra.mxu0 0
        %4398 = vmatprep.subr.bf16.mxu0 0
        %4399 = vmatpush1.bf16.msra.mxu0 0
        %4400 = vmatprep.subr.bf16.mxu0 0
        %4401 = vmatpush1.bf16.msra.mxu0 0
        %4402 = vmatprep.subr.bf16.mxu0 0
        %4403 = vmatpush1.bf16.msra.mxu0 0
        %4404 = vmatprep.subr.bf16.mxu0 0
        %4405 = vmatpush1.bf16.msra.mxu0 0
        %4406 = vmatprep.subr.bf16.mxu0 0
        %4407 = vmatpush1.bf16.msra.mxu0 0
        %4408 = vmatprep.subr.bf16.mxu0 0
        %4409 = vmatpush1.bf16.msra.mxu0 0
        %4410 = vmatprep.subr.bf16.mxu0 0
        %4411 = vmatpush1.bf16.msra.mxu0 0
        %4412 = vmatprep.subr.bf16.mxu0 0
        %4413 = vmatpush1.bf16.msra.mxu0 0
        %4414 = vmatprep.subr.bf16.mxu0 0
        %4415 = vmatpush1.bf16.msra.mxu0 0
        %4416 = vmatprep.subr.bf16.mxu0 0
        %4417 = vmatpush1.bf16.msra.mxu0 0
        %4418 = vmatprep.subr.bf16.mxu0 0
        %4419 = vmatpush1.bf16.msra.mxu0 0
        %4420 = vmatprep.subr.bf16.mxu0 0
        %4421 = vmatpush1.bf16.msra.mxu0 0
        %4422 = vmatprep.mubr.bf16.mxu0 0
        %4423 = vmatmul.mubr.bf16.gmra.mrb[0].mxu0 %v4293
        %v4424 = vpop.f32.mrb[0].mxu0
        %v4425 = vadd.f32 0.0, %v4424
        %v4426 = vpop.f32.mrb[0].mxu0
        %v4427 = vpop.f32.mrb[0].mxu0
        %v4428 = vadd.f32 0.0, %v4427
        %v4429 = vpop.f32.mrb[0].mxu0
        %4430 = vdwg.mxu0
        %v4431 = vadd.f32 %v4380, %v4425
        %v4432 = vadd.f32 %v4381, %v4428
        %4433 = vmatprep.subr.bf16.mxu0 0
        %4434 = vmatpush1.bf16.msra.mxu0 %v4388
        %4435 = vmatprep.subr.bf16.mxu0 0
        %4436 = vmatpush1.bf16.msra.mxu0 0
        %4437 = vmatprep.subr.bf16.mxu0 0
        %4438 = vmatpush1.bf16.msra.mxu0 0
        %4439 = vmatprep.subr.bf16.mxu0 0
        %4440 = vmatpush1.bf16.msra.mxu0 0
        %4441 = vmatprep.subr.bf16.mxu0 0
        %4442 = vmatpush1.bf16.msra.mxu0 0
        %4443 = vmatprep.subr.bf16.mxu0 0
        %4444 = vmatpush1.bf16.msra.mxu0 0
        %4445 = vmatprep.subr.bf16.mxu0 0
        %4446 = vmatpush1.bf16.msra.mxu0 0
        %4447 = vmatprep.subr.bf16.mxu0 0
        %4448 = vmatpush1.bf16.msra.mxu0 0
        %4449 = vmatprep.subr.bf16.mxu0 0
        %4450 = vmatpush1.bf16.msra.mxu0 0
        %4451 = vmatprep.subr.bf16.mxu0 0
        %4452 = vmatpush1.bf16.msra.mxu0 0
        %4453 = vmatprep.subr.bf16.mxu0 0
        %4454 = vmatpush1.bf16.msra.mxu0 0
        %4455 = vmatprep.subr.bf16.mxu0 0
        %4456 = vmatpush1.bf16.msra.mxu0 0
        %4457 = vmatprep.subr.bf16.mxu0 0
        %4458 = vmatpush1.bf16.msra.mxu0 0
        %4459 = vmatprep.subr.bf16.mxu0 0
        %4460 = vmatpush1.bf16.msra.mxu0 0
        %4461 = vmatprep.subr.bf16.mxu0 0
        %4462 = vmatpush1.bf16.msra.mxu0 0
        %4463 = vmatprep.subr.bf16.mxu0 0
        %4464 = vmatpush1.bf16.msra.mxu0 0
        %4465 = vmatprep.mubr.bf16.mxu0 0
        %4466 = vmatmul.mubr.bf16.gmra.mrb[0].mxu0 %v4249
        %v4467 = vpop.f32.mrb[0].mxu0
        %v4468 = vadd.f32 0.0, %v4467
        %v4469 = vpop.f32.mrb[0].mxu0
        %v4470 = vpop.f32.mrb[0].mxu0
        %v4471 = vadd.f32 0.0, %v4470
        %v4472 = vpop.f32.mrb[0].mxu0
        %4473 = vdwg.mxu0
        %v4474 = vadd.f32 %v4431, %v4468
        %v4475 = vadd.f32 %v4432, %v4471
        %4476 = vmatprep.subr.bf16.mxu0 0
        %4477 = vmatpush1.bf16.msra.mxu0 %v4388
        %4478 = vmatprep.subr.bf16.mxu0 0
        %4479 = vmatpush1.bf16.msra.mxu0 0
        %4480 = vmatprep.subr.bf16.mxu0 0
        %4481 = vmatpush1.bf16.msra.mxu0 0
        %4482 = vmatprep.subr.bf16.mxu0 0
        %4483 = vmatpush1.bf16.msra.mxu0 0
        %4484 = vmatprep.subr.bf16.mxu0 0
        %4485 = vmatpush1.bf16.msra.mxu0 0
        %4486 = vmatprep.subr.bf16.mxu0 0
        %4487 = vmatpush1.bf16.msra.mxu0 0
        %4488 = vmatprep.subr.bf16.mxu0 0
        %4489 = vmatpush1.bf16.msra.mxu0 0
        %4490 = vmatprep.subr.bf16.mxu0 0
        %4491 = vmatpush1.bf16.msra.mxu0 0
        %4492 = vmatprep.subr.bf16.mxu0 0
        %4493 = vmatpush1.bf16.msra.mxu0 0
        %4494 = vmatprep.subr.bf16.mxu0 0
        %4495 = vmatpush1.bf16.msra.mxu0 0
        %4496 = vmatprep.subr.bf16.mxu0 0
        %4497 = vmatpush1.bf16.msra.mxu0 0
        %4498 = vmatprep.subr.bf16.mxu0 0
        %4499 = vmatpush1.bf16.msra.mxu0 0
        %4500 = vmatprep.subr.bf16.mxu0 0
        %4501 = vmatpush1.bf16.msra.mxu0 0
        %4502 = vmatprep.subr.bf16.mxu0 0
        %4503 = vmatpush1.bf16.msra.mxu0 0
        %4504 = vmatprep.subr.bf16.mxu0 0
        %4505 = vmatpush1.bf16.msra.mxu0 0
        %4506 = vmatprep.subr.bf16.mxu0 0
        %4507 = vmatpush1.bf16.msra.mxu0 0
        %4508 = vmatprep.mubr.bf16.mxu0 0
        %4509 = vmatmul.mubr.bf16.gmra.mrb[0].mxu0 %v4337
        %v4510 = vpop.f32.mrb[0].mxu0
        %v4511 = vadd.f32 0.0, %v4510
        %v4512 = vpop.f32.mrb[0].mxu0
        %v4513 = vpop.f32.mrb[0].mxu0
        %v4514 = vadd.f32 0.0, %v4513
        %v4515 = vpop.f32.mrb[0].mxu0
        %4516 = vdwg.mxu0
        %v4517 = vadd.f32 %v4474, %v4511
        %v4518 = vadd.f32 %v4475, %v4514
        %v4519 = vld [vmem:[%s527] sm:$0xf]
        %v4520 = vld [vmem:[%s527 + $0x4] sm:$0xf]
        %v4523 = vunpack.c.l.b16 %v4519
        %v4524 = vunpack.c.l.b16 %v4520
        %v4525 = vpack.c.b16 %v4524, %v4523
        %4527 = vmatprep.subr.bf16.mxu0 0
        %4528 = vmatpush1.bf16.msra.mxu0 %v4525
        %4529 = vmatprep.subr.bf16.mxu0 0
        %4530 = vmatpush1.bf16.msra.mxu0 0
        %4531 = vmatprep.subr.bf16.mxu0 0
        %4532 = vmatpush1.bf16.msra.mxu0 0
        %4533 = vmatprep.subr.bf16.mxu0 0
        %4534 = vmatpush1.bf16.msra.mxu0 0
        %4535 = vmatprep.subr.bf16.mxu0 0
        %4536 = vmatpush1.bf16.msra.mxu0 0
        %4537 = vmatprep.subr.bf16.mxu0 0
        %4538 = vmatpush1.bf16.msra.mxu0 0
        %4539 = vmatprep.subr.bf16.mxu0 0
        %4540 = vmatpush1.bf16.msra.mxu0 0
        %4541 = vmatprep.subr.bf16.mxu0 0
        %4542 = vmatpush1.bf16.msra.mxu0 0
        %4543 = vmatprep.subr.bf16.mxu0 0
        %4544 = vmatpush1.bf16.msra.mxu0 0
        %4545 = vmatprep.subr.bf16.mxu0 0
        %4546 = vmatpush1.bf16.msra.mxu0 0
        %4547 = vmatprep.subr.bf16.mxu0 0
        %4548 = vmatpush1.bf16.msra.mxu0 0
        %4549 = vmatprep.subr.bf16.mxu0 0
        %4550 = vmatpush1.bf16.msra.mxu0 0
        %4551 = vmatprep.subr.bf16.mxu0 0
        %4552 = vmatpush1.bf16.msra.mxu0 0
        %4553 = vmatprep.subr.bf16.mxu0 0
        %4554 = vmatpush1.bf16.msra.mxu0 0
        %4555 = vmatprep.subr.bf16.mxu0 0
        %4556 = vmatpush1.bf16.msra.mxu0 0
        %4557 = vmatprep.subr.bf16.mxu0 0
        %4558 = vmatpush1.bf16.msra.mxu0 0
        %4559 = vmatprep.mubr.bf16.mxu0 0
        %4560 = vmatmul.mubr.bf16.gmra.mrb[0].mxu0 %v4293
        %v4561 = vpop.f32.mrb[0].mxu0
        %v4562 = vadd.f32 0.0, %v4561
        %v4563 = vpop.f32.mrb[0].mxu0
        %v4564 = vpop.f32.mrb[0].mxu0
        %v4565 = vadd.f32 0.0, %v4564
        %v4566 = vpop.f32.mrb[0].mxu0
        %4567 = vdwg.mxu0
        %v4568 = vadd.f32 %v4517, %v4562
        %v4569 = vadd.f32 %v4518, %v4565
        %4570 = vmatprep.subr.bf16.mxu0 0
        %4571 = vmatpush1.bf16.msra.mxu0 %v4525
        %4572 = vmatprep.subr.bf16.mxu0 0
        %4573 = vmatpush1.bf16.msra.mxu0 0
        %4574 = vmatprep.subr.bf16.mxu0 0
        %4575 = vmatpush1.bf16.msra.mxu0 0
        %4576 = vmatprep.subr.bf16.mxu0 0
        %4577 = vmatpush1.bf16.msra.mxu0 0
        %4578 = vmatprep.subr.bf16.mxu0 0
        %4579 = vmatpush1.bf16.msra.mxu0 0
        %4580 = vmatprep.subr.bf16.mxu0 0
        %4581 = vmatpush1.bf16.msra.mxu0 0
        %4582 = vmatprep.subr.bf16.mxu0 0
        %4583 = vmatpush1.bf16.msra.mxu0 0
        %4584 = vmatprep.subr.bf16.mxu0 0
        %4585 = vmatpush1.bf16.msra.mxu0 0
        %4586 = vmatprep.subr.bf16.mxu0 0
        %4587 = vmatpush1.bf16.msra.mxu0 0
        %4588 = vmatprep.subr.bf16.mxu0 0
        %4589 = vmatpush1.bf16.msra.mxu0 0
        %4590 = vmatprep.subr.bf16.mxu0 0
        %4591 = vmatpush1.bf16.msra.mxu0 0
        %4592 = vmatprep.subr.bf16.mxu0 0
        %4593 = vmatpush1.bf16.msra.mxu0 0
        %4594 = vmatprep.subr.bf16.mxu0 0
        %4595 = vmatpush1.bf16.msra.mxu0 0
        %4596 = vmatprep.subr.bf16.mxu0 0
        %4597 = vmatpush1.bf16.msra.mxu0 0
        %4598 = vmatprep.subr.bf16.mxu0 0
        %4599 = vmatpush1.bf16.msra.mxu0 0
        %4600 = vmatprep.subr.bf16.mxu0 0
        %4601 = vmatpush1.bf16.msra.mxu0 0
        %4602 = vmatprep.mubr.bf16.mxu0 0
        %4603 = vmatmul.mubr.bf16.gmra.mrb[0].mxu0 %v4249
        %v4604 = vpop.f32.mrb[0].mxu0
        %v4605 = vadd.f32 0.0, %v4604
        %v4606 = vpop.f32.mrb[0].mxu0
        %v4607 = vpop.f32.mrb[0].mxu0
        %v4608 = vadd.f32 0.0, %v4607
        %v4609 = vpop.f32.mrb[0].mxu0
        %4610 = vdwg.mxu0
        %v4611 = vadd.f32 %v4568, %v4605
        %v4612 = vadd.f32 %v4569, %v4608
        %4613 = vmatprep.subr.bf16.mxu0 0
        %4614 = vmatpush1.bf16.msra.mxu0 %v4525
        %4615 = vmatprep.subr.bf16.mxu0 0
        %4616 = vmatpush1.bf16.msra.mxu0 0
        %4617 = vmatprep.subr.bf16.mxu0 0
        %4618 = vmatpush1.bf16.msra.mxu0 0
        %4619 = vmatprep.subr.bf16.mxu0 0
        %4620 = vmatpush1.bf16.msra.mxu0 0
        %4621 = vmatprep.subr.bf16.mxu0 0
        %4622 = vmatpush1.bf16.msra.mxu0 0
        %4623 = vmatprep.subr.bf16.mxu0 0
        %4624 = vmatpush1.bf16.msra.mxu0 0
        %4625 = vmatprep.subr.bf16.mxu0 0
        %4626 = vmatpush1.bf16.msra.mxu0 0
        %4627 = vmatprep.subr.bf16.mxu0 0
        %4628 = vmatpush1.bf16.msra.mxu0 0
        %4629 = vmatprep.subr.bf16.mxu0 0
        %4630 = vmatpush1.bf16.msra.mxu0 0
        %4631 = vmatprep.subr.bf16.mxu0 0
        %4632 = vmatpush1.bf16.msra.mxu0 0
        %4633 = vmatprep.subr.bf16.mxu0 0
        %4634 = vmatpush1.bf16.msra.mxu0 0
        %4635 = vmatprep.subr.bf16.mxu0 0
        %4636 = vmatpush1.bf16.msra.mxu0 0
        %4637 = vmatprep.subr.bf16.mxu0 0
        %4638 = vmatpush1.bf16.msra.mxu0 0
        %4639 = vmatprep.subr.bf16.mxu0 0
        %4640 = vmatpush1.bf16.msra.mxu0 0
        %4641 = vmatprep.subr.bf16.mxu0 0
        %4642 = vmatpush1.bf16.msra.mxu0 0
        %4643 = vmatprep.subr.bf16.mxu0 0
        %4644 = vmatpush1.bf16.msra.mxu0 0
        %4645 = vmatprep.mubr.bf16.mxu0 0
        %4646 = vmatmul.mubr.bf16.gmra.mrb[0].mxu0 %v4337
        %v4647 = vpop.f32.mrb[0].mxu0
        %v4648 = vadd.f32 0.0, %v4647
        %v4649 = vpop.f32.mrb[0].mxu0
        %v4650 = vpop.f32.mrb[0].mxu0
        %v4651 = vadd.f32 0.0, %v4650
        %v4652 = vpop.f32.mrb[0].mxu0
        %4653 = vdwg.mxu0
        %v4654 = vadd.f32 %v4611, %v4648
        %v4655 = vadd.f32 %v4612, %v4651
        %v4656 = vld [vmem:[%s665] sm:$0xf]
        %v4657 = vld [vmem:[%s665 + $0x4] sm:$0xf]
        %v4660 = vunpack.c.l.b16 %v4656
        %v4661 = vunpack.c.l.b16 %v4657
        %v4662 = vpack.c.b16 %v4661, %v4660
        %4664 = vmatprep.subr.bf16.mxu0 0
        %4665 = vmatpush1.bf16.msra.mxu0 %v4662
        %4666 = vmatprep.subr.bf16.mxu0 0
        %4667 = vmatpush1.bf16.msra.mxu0 0
        %4668 = vmatprep.subr.bf16.mxu0 0
        %4669 = vmatpush1.bf16.msra.mxu0 0
        %4670 = vmatprep.subr.bf16.mxu0 0
        %4671 = vmatpush1.bf16.msra.mxu0 0
        %4672 = vmatprep.subr.bf16.mxu0 0
        %4673 = vmatpush1.bf16.msra.mxu0 0
        %4674 = vmatprep.subr.bf16.mxu0 0
        %4675 = vmatpush1.bf16.msra.mxu0 0
        %4676 = vmatprep.subr.bf16.mxu0 0
        %4677 = vmatpush1.bf16.msra.mxu0 0
        %4678 = vmatprep.subr.bf16.mxu0 0
        %4679 = vmatpush1.bf16.msra.mxu0 0
        %4680 = vmatprep.subr.bf16.mxu0 0
        %4681 = vmatpush1.bf16.msra.mxu0 0
        %4682 = vmatprep.subr.bf16.mxu0 0
        %4683 = vmatpush1.bf16.msra.mxu0 0
        %4684 = vmatprep.subr.bf16.mxu0 0
        %4685 = vmatpush1.bf16.msra.mxu0 0
        %4686 = vmatprep.subr.bf16.mxu0 0
        %4687 = vmatpush1.bf16.msra.mxu0 0
        %4688 = vmatprep.subr.bf16.mxu0 0
        %4689 = vmatpush1.bf16.msra.mxu0 0
        %4690 = vmatprep.subr.bf16.mxu0 0
        %4691 = vmatpush1.bf16.msra.mxu0 0
        %4692 = vmatprep.subr.bf16.mxu0 0
        %4693 = vmatpush1.bf16.msra.mxu0 0
        %4694 = vmatprep.subr.bf16.mxu0 0
        %4695 = vmatpush1.bf16.msra.mxu0 0
        %4696 = vmatprep.mubr.bf16.mxu0 0
        %4697 = vmatmul.mubr.bf16.gmra.mrb[0].mxu0 %v4293
        %v4698 = vpop.f32.mrb[0].mxu0
        %v4699 = vadd.f32 0.0, %v4698
        %v4700 = vpop.f32.mrb[0].mxu0
        %v4701 = vpop.f32.mrb[0].mxu0
        %v4702 = vadd.f32 0.0, %v4701
        %v4703 = vpop.f32.mrb[0].mxu0
        %4704 = vdwg.mxu0
        %v4705 = vadd.f32 %v4654, %v4699
        %v4706 = vadd.f32 %v4655, %v4702
        %4707 = vmatprep.subr.bf16.mxu0 0
        %4708 = vmatpush1.bf16.msra.mxu0 %v4662
        %4709 = vmatprep.subr.bf16.mxu0 0
        %4710 = vmatpush1.bf16.msra.mxu0 0
        %4711 = vmatprep.subr.bf16.mxu0 0
        %4712 = vmatpush1.bf16.msra.mxu0 0
        %4713 = vmatprep.subr.bf16.mxu0 0
        %4714 = vmatpush1.bf16.msra.mxu0 0
        %4715 = vmatprep.subr.bf16.mxu0 0
        %4716 = vmatpush1.bf16.msra.mxu0 0
        %4717 = vmatprep.subr.bf16.mxu0 0
        %4718 = vmatpush1.bf16.msra.mxu0 0
        %4719 = vmatprep.subr.bf16.mxu0 0
        %4720 = vmatpush1.bf16.msra.mxu0 0
        %4721 = vmatprep.subr.bf16.mxu0 0
        %4722 = vmatpush1.bf16.msra.mxu0 0
        %4723 = vmatprep.subr.bf16.mxu0 0
        %4724 = vmatpush1.bf16.msra.mxu0 0
        %4725 = vmatprep.subr.bf16.mxu0 0
        %4726 = vmatpush1.bf16.msra.mxu0 0
        %4727 = vmatprep.subr.bf16.mxu0 0
        %4728 = vmatpush1.bf16.msra.mxu0 0
        %4729 = vmatprep.subr.bf16.mxu0 0
        %4730 = vmatpush1.bf16.msra.mxu0 0
        %4731 = vmatprep.subr.bf16.mxu0 0
        %4732 = vmatpush1.bf16.msra.mxu0 0
        %4733 = vmatprep.subr.bf16.mxu0 0
        %4734 = vmatpush1.bf16.msra.mxu0 0
        %4735 = vmatprep.subr.bf16.mxu0 0
        %4736 = vmatpush1.bf16.msra.mxu0 0
        %4737 = vmatprep.subr.bf16.mxu0 0
        %4738 = vmatpush1.bf16.msra.mxu0 0
        %4739 = vmatprep.mubr.bf16.mxu0 0
        %4740 = vmatmul.mubr.bf16.gmra.mrb[0].mxu0 %v4249
        %v4741 = vpop.f32.mrb[0].mxu0
        %v4742 = vadd.f32 0.0, %v4741
        %v4743 = vpop.f32.mrb[0].mxu0
        %v4744 = vpop.f32.mrb[0].mxu0
        %v4745 = vadd.f32 0.0, %v4744
        %v4746 = vpop.f32.mrb[0].mxu0
        %4747 = vdwg.mxu0
        %v4748 = vadd.f32 %v4705, %v4742
        %v4749 = vadd.f32 %v4706, %v4745
        %4750 = vmatprep.subr.bf16.mxu0 0
        %4751 = vmatpush1.bf16.msra.mxu0 %v4662
        %4752 = vmatprep.subr.bf16.mxu0 0
        %4753 = vmatpush1.bf16.msra.mxu0 0
        %4754 = vmatprep.subr.bf16.mxu0 0
        %4755 = vmatpush1.bf16.msra.mxu0 0
        %4756 = vmatprep.subr.bf16.mxu0 0
        %4757 = vmatpush1.bf16.msra.mxu0 0
        %4758 = vmatprep.subr.bf16.mxu0 0
        %4759 = vmatpush1.bf16.msra.mxu0 0
        %4760 = vmatprep.subr.bf16.mxu0 0
        %4761 = vmatpush1.bf16.msra.mxu0 0
        %4762 = vmatprep.subr.bf16.mxu0 0
        %4763 = vmatpush1.bf16.msra.mxu0 0
        %4764 = vmatprep.subr.bf16.mxu0 0
        %4765 = vmatpush1.bf16.msra.mxu0 0
        %4766 = vmatprep.subr.bf16.mxu0 0
        %4767 = vmatpush1.bf16.msra.mxu0 0
        %4768 = vmatprep.subr.bf16.mxu0 0
        %4769 = vmatpush1.bf16.msra.mxu0 0
        %4770 = vmatprep.subr.bf16.mxu0 0
        %4771 = vmatpush1.bf16.msra.mxu0 0
        %4772 = vmatprep.subr.bf16.mxu0 0
        %4773 = vmatpush1.bf16.msra.mxu0 0
        %4774 = vmatprep.subr.bf16.mxu0 0
        %4775 = vmatpush1.bf16.msra.mxu0 0
        %4776 = vmatprep.subr.bf16.mxu0 0
        %4777 = vmatpush1.bf16.msra.mxu0 0
        %4778 = vmatprep.subr.bf16.mxu0 0
        %4779 = vmatpush1.bf16.msra.mxu0 0
        %4780 = vmatprep.subr.bf16.mxu0 0
        %4781 = vmatpush1.bf16.msra.mxu0 0
        %4782 = vmatprep.mubr.bf16.mxu0 0
        %4783 = vmatmul.mubr.bf16.gmra.mrb[0].mxu0 %v4337
        %v4784 = vpop.f32.mrb[0].mxu0
        %v4785 = vadd.f32 0.0, %v4784
        %v4786 = vpop.f32.mrb[0].mxu0
        %v4787 = vpop.f32.mrb[0].mxu0
        %v4788 = vadd.f32 0.0, %v4787
        %v4789 = vpop.f32.mrb[0].mxu0
        %4790 = vdwg.mxu0
        %v4791 = vadd.f32 %v4748, %v4785
        %v4792 = vadd.f32 %v4749, %v4788
        %s4793 = scalar_lea.vmem %s229, 112 [#allocation6]
        %4794 = vst.msk [vmem:[%s4793] sm:$0xff] %vm803, %v4791
        %4795 = vst.msk [vmem:[%s4793 + $0x8] sm:$0xff] %vm803, %v4792
        %s4796 = sand.u32 %s99, 1
        %s4797 = sand.u32 %s99, 1
        %s4798 = smul.addr %s4797, 128
        %s4799 = scalar_lea.vmem [#allocation6], %s4798
        // Predicated region
        $region37: #{dup_up_3d.1} parent=27 // pred_check
          %p4800 = pneg %p109
        $region38: #{dup_up_3d.1} parent=27 // pred_check_branch
          %4802 = sbr.rel (%p4800) target = $region40
        $region39: #{dup_up_3d.1} parent=27 // pred_region
          %s4803 = smul.u32 4, %s24
          %s4804 = smul.addr %s23, 4
          %s4805 = smul.addr %s4803, 16
          %s4806 = sadd.s32 %s4804, %s4805
          %s4807 = smul.addr %s22, 64
          %s4808 = sadd.s32 %s4806, %s4807
          %s4809 = smul.addr %s4808, 8
          %s4810 = scalar_lea.vmem %s2, %s4809
          // Predicated region
          $region41: #{dup_up_3d.1} parent=39 // pred_check
            _
          $region42: #{dup_up_3d.1} parent=39 // pred_check_branch
            %4812 = sbr.rel (0) target = $region44
          $region43: #{dup_up_3d.1} parent=39 // pred_region
            // Predicated region
            $region45: #{dup_up_3d.1} parent=43 // pred_check
              _
            $region46: #{dup_up_3d.1} parent=43 // pred_check_branch
              %4814 = sbr.rel (0) target = $region48
            $region47: #{dup_up_3d.1} parent=43 // pred_region
              // Predicated region
              $region60: #{dup_up_3d.1} parent=47 // pred_check
                _
              $region61: #{dup_up_3d.1} parent=47 // pred_check_branch
                %4859 = sbr.rel (0) target = $region63
              $region62: #{dup_up_3d.1} parent=47 // pred_region
                loop: start=0, step=1, limit=1
                $region64: #{dup_up_3d.1} parent=62 // loop_pre_header
                  _
                $region65: #{dup_up_3d.1} parent=62 // loop_header
                  %s4861 = sphi 0, %s4865
                  %p4862 = scmp.ge.s32.totalorder %s4861, 1
                  %s4866 = sphi %s4799, %s4799
                  %s4867 = sphi %s4810, %s4810
                $region66: #{dup_up_3d.1} parent=62 // loop_header_branch
                  %4864 = sbr.rel (%p4862) target = $region70
                $region67: #{dup_up_3d.1} parent=62 // loop_body
                  %v4868 = vld [vmem:[%s4866] sm:$0xff]
                  %4869 = vst [vmem:[%s4867] sm:$0xff] %v4868
                  %v4870 = vld [vmem:[%s4866 + $0x8] sm:$0xff]
                  %4871 = vst [vmem:[%s4867 + $0x8] sm:$0xff] %v4870
                  %v4872 = vld [vmem:[%s4866 + $0x10] sm:$0xff]
                  %4873 = vst [vmem:[%s4867 + $0x10] sm:$0xff] %v4872
                  %v4874 = vld [vmem:[%s4866 + $0x18] sm:$0xff]
                  %4875 = vst [vmem:[%s4867 + $0x18] sm:$0xff] %v4874
                  %v4876 = vld [vmem:[%s4866 + $0x20] sm:$0xff]
                  %4877 = vst [vmem:[%s4867 + $0x80] sm:$0xff] %v4876
                  %v4878 = vld [vmem:[%s4866 + $0x28] sm:$0xff]
                  %4879 = vst [vmem:[%s4867 + $0x88] sm:$0xff] %v4878
                  %v4880 = vld [vmem:[%s4866 + $0x30] sm:$0xff]
                  %4881 = vst [vmem:[%s4867 + $0x90] sm:$0xff] %v4880
                  %v4882 = vld [vmem:[%s4866 + $0x38] sm:$0xff]
                  %4883 = vst [vmem:[%s4867 + $0x98] sm:$0xff] %v4882
                  %v4884 = vld [vmem:[%s4866 + $0x40] sm:$0xff]
                  %4885 = vst [vmem:[%s4867 + $0x100] sm:$0xff] %v4884
                  %v4886 = vld [vmem:[%s4866 + $0x48] sm:$0xff]
                  %4887 = vst [vmem:[%s4867 + $0x108] sm:$0xff] %v4886
                  %v4888 = vld [vmem:[%s4866 + $0x50] sm:$0xff]
                  %4889 = vst [vmem:[%s4867 + $0x110] sm:$0xff] %v4888
                  %v4890 = vld [vmem:[%s4866 + $0x58] sm:$0xff]
                  %4891 = vst [vmem:[%s4867 + $0x118] sm:$0xff] %v4890
                  %v4892 = vld [vmem:[%s4866 + $0x60] sm:$0xff]
                  %4893 = vst [vmem:[%s4867 + $0x180] sm:$0xff] %v4892
                  %v4894 = vld [vmem:[%s4866 + $0x68] sm:$0xff]
                  %4895 = vst [vmem:[%s4867 + $0x188] sm:$0xff] %v4894
                  %v4896 = vld [vmem:[%s4866 + $0x70] sm:$0xff]
                  %4897 = vst [vmem:[%s4867 + $0x190] sm:$0xff] %v4896
                  %v4898 = vld [vmem:[%s4866 + $0x78] sm:$0xff]
                  %4899 = vst [vmem:[%s4867 + $0x198] sm:$0xff] %v4898
                $region68: #{dup_up_3d.1} parent=62 // loop_footer
                  %s4865 = sadd.s32 1, %s4861
                $region69: #{dup_up_3d.1} parent=62 // loop_footer_branch
                  %4860 = sbr.rel target = $region65
                $region70: #{dup_up_3d.1} parent=62 // loop_exit
                  _
              $region63: #{dup_up_3d.1} parent=47 // pred_fallthru
                _
              // Predicated region
              $region71: #{dup_up_3d.1} parent=47 // pred_check
                _
              $region72: #{dup_up_3d.1} parent=47 // pred_check_branch
                %4901 = sbr.rel target = $region74
              $region73: #{dup_up_3d.1} parent=47 // pred_region
                _
              $region74: #{dup_up_3d.1} parent=47 // pred_fallthru
                _
            $region48: #{dup_up_3d.1} parent=43 // pred_fallthru
              _
            // Predicated region
            $region49: #{dup_up_3d.1} parent=43 // pred_check
              _
            $region50: #{dup_up_3d.1} parent=43 // pred_check_branch
              %4816 = sbr.rel target = $region52
            $region51: #{dup_up_3d.1} parent=43 // pred_region
              loop: start=0, step=1, limit=1
              $region53: #{dup_up_3d.1} parent=51 // loop_pre_header
                _
              $region54: #{dup_up_3d.1} parent=51 // loop_header
                %s4819 = sphi 0, %s4823
                %p4820 = scmp.ge.s32.totalorder %s4819, 1
                %s4824 = sphi %s4799, %s4799
                %s4825 = sphi %s4810, %s4810
              $region55: #{dup_up_3d.1} parent=51 // loop_header_branch
                %4822 = sbr.rel (%p4820) target = $region59
              $region56: #{dup_up_3d.1} parent=51 // loop_body
                %v4826 = vld [vmem:[%s4824] sm:$0xff]
                %4827 = vst [vmem:[%s4825] sm:$0xff] %v4826
                %v4828 = vld [vmem:[%s4824 + $0x8] sm:$0xff]
                %4829 = vst [vmem:[%s4825 + $0x8] sm:$0xff] %v4828
                %v4830 = vld [vmem:[%s4824 + $0x10] sm:$0xff]
                %4831 = vst [vmem:[%s4825 + $0x10] sm:$0xff] %v4830
                %v4832 = vld [vmem:[%s4824 + $0x18] sm:$0xff]
                %4833 = vst [vmem:[%s4825 + $0x18] sm:$0xff] %v4832
                %v4834 = vld [vmem:[%s4824 + $0x20] sm:$0xff]
                %4835 = vst [vmem:[%s4825 + $0x80] sm:$0xff] %v4834
                %v4836 = vld [vmem:[%s4824 + $0x28] sm:$0xff]
                %4837 = vst [vmem:[%s4825 + $0x88] sm:$0xff] %v4836
                %v4838 = vld [vmem:[%s4824 + $0x30] sm:$0xff]
                %4839 = vst [vmem:[%s4825 + $0x90] sm:$0xff] %v4838
                %v4840 = vld [vmem:[%s4824 + $0x38] sm:$0xff]
                %4841 = vst [vmem:[%s4825 + $0x98] sm:$0xff] %v4840
                %v4842 = vld [vmem:[%s4824 + $0x40] sm:$0xff]
                %4843 = vst [vmem:[%s4825 + $0x100] sm:$0xff] %v4842
                %v4844 = vld [vmem:[%s4824 + $0x48] sm:$0xff]
                %4845 = vst [vmem:[%s4825 + $0x108] sm:$0xff] %v4844
                %v4846 = vld [vmem:[%s4824 + $0x50] sm:$0xff]
                %4847 = vst [vmem:[%s4825 + $0x110] sm:$0xff] %v4846
                %v4848 = vld [vmem:[%s4824 + $0x58] sm:$0xff]
                %4849 = vst [vmem:[%s4825 + $0x118] sm:$0xff] %v4848
                %v4850 = vld [vmem:[%s4824 + $0x60] sm:$0xff]
                %4851 = vst [vmem:[%s4825 + $0x180] sm:$0xff] %v4850
                %v4852 = vld [vmem:[%s4824 + $0x68] sm:$0xff]
                %4853 = vst [vmem:[%s4825 + $0x188] sm:$0xff] %v4852
                %v4854 = vld [vmem:[%s4824 + $0x70] sm:$0xff]
                %4855 = vst [vmem:[%s4825 + $0x190] sm:$0xff] %v4854
                %v4856 = vld [vmem:[%s4824 + $0x78] sm:$0xff]
                %4857 = vst [vmem:[%s4825 + $0x198] sm:$0xff] %v4856
              $region57: #{dup_up_3d.1} parent=51 // loop_footer
                %s4823 = sadd.s32 1, %s4819
              $region58: #{dup_up_3d.1} parent=51 // loop_footer_branch
                %4818 = sbr.rel target = $region54
              $region59: #{dup_up_3d.1} parent=51 // loop_exit
                _
            $region52: #{dup_up_3d.1} parent=43 // pred_fallthru
              _
          $region44: #{dup_up_3d.1} parent=39 // pred_fallthru
            _
          %4902 = vnop
        $region40: #{dup_up_3d.1} parent=27 // pred_fallthru
          _
      $region28: #{dup_up_3d.1} parent=5 // pred_fallthru
        _
      %p4903 = scmp.le.s32.totalorder 2, %s12
      // Predicated region
      $region75: #{dup_up_3d.1} parent=5 // pred_check
        %p4904 = pneg %p4903
      $region76: #{dup_up_3d.1} parent=5 // pred_check_branch
        %4906 = sbr.rel (%p4904) target = $region78
      $region77: #{dup_up_3d.1} parent=5 // pred_region
        %s4907 = ssub.s32 %s12, 2
        // Predicated region
        $region79: #{dup_up_3d.1} parent=77 // pred_check
          %p4908 = pneg %p115
        $region80: #{dup_up_3d.1} parent=77 // pred_check_branch
          %4910 = sbr.rel (%p4908) target = $region82
        $region81: #{dup_up_3d.1} parent=77 // pred_region
          %s4911 = sand.u32 %s100, 1
          %s4912 = sand.u32 %s100, 1
          %s4913 = smul.addr %s4912, 128
          %s4914 = scalar_lea.vmem [#allocation6], %s4913
        $region82: #{dup_up_3d.1} parent=77 // pred_fallthru
          _
      $region78: #{dup_up_3d.1} parent=5 // pred_fallthru
        _
    $region6: #{dup_up_3d.1} parent=1 // loop_footer
      %s16 = sadd.s32 1, %s12
    $region7: #{dup_up_3d.1} parent=1 // loop_footer_branch
      %11 = sbr.rel target = $region3
    $region8: #{dup_up_3d.1} parent=1 // loop_exit
      _
    %4915 = vsyncpa [#allocation3], 1
    %s4916 = scalar_lea.sflag [#allocation3], 1
    %4917 = vsyncpa %s4916, 1
    %4918 = vsyncpa [#allocation5], 1

</llo_original>
